<compile_context>
chip_gen: v5e
topology: v5e:2x2
jax: 0.10.0
libtpu: 0.0.40
codegen_flags: <defaults>
</compile_context>

<pallas_src>
import functools

import jax
import jax.numpy as jnp
from jax.experimental import pallas as pl
from jax.experimental.pallas import tpu as pltpu


def _basic_block_kernel(x_ref, w1_ref, s1_ref, b1_ref, w2_ref, s2_ref, b2_ref,
                        o_ref, a1_ref, *, true_h, true_w):
    # x_ref  : (1, Hp+4, WX, CP) zero-padded bf16 input, one batch element
    # w1_ref : (3, 3, CP, CP)    conv1 weights (dy, dx, cin, cout), bf16
    # s1_ref, b1_ref : (1, CP)   folded BN1 scale / bias, f32
    # w2_ref : (3, 3, CP, CP)    conv2 weights, bf16
    # s2_ref, b2_ref : (1, CP)   folded BN2 scale / bias, f32
    # o_ref  : (1, TH, WO, CP)   f32 output row tile
    # a1_ref : (TH+2, WA, CP)    bf16 scratch for the masked conv1 activation
    TH, WO, CP = o_ref.shape[1], o_ref.shape[2], o_ref.shape[3]
    R1, WA = a1_ref.shape[0], a1_ref.shape[1]      # R1 = TH + 2

    t = pl.program_id(1)
    row0 = pl.multiple_of(t * TH, TH)

    # ---- conv1: 9 accumulating K=CP matmuls; shifted windows read from the ref ----
    def x_patch(dy, dx):
        p = x_ref[0, pl.ds(row0 + dy, R1), pl.ds(dx, WA), :]
        return p.reshape(R1 * WA, CP)              # WA % 8 == 0 -> layout-free

    acc1 = jnp.dot(x_patch(0, 0), w1_ref[0, 0],
                   preferred_element_type=jnp.float32)
    for dy in range(3):
        for dx in range(3):
            if dy == 0 and dx == 0:
                continue
            acc1 = acc1 + jnp.dot(x_patch(dy, dx), w1_ref[dy, dx],
                                  preferred_element_type=jnp.float32)

    # ---- bn1 (folded) + relu ----
    a1 = jnp.maximum(acc1 * s1_ref[...] + b1_ref[...], 0.0).reshape(R1, WA, CP)

    # ---- zero out-of-image positions (this is also conv2's zero padding) ----
    # Rank-2 information: (R1,1,1) row mask x (1,WA,1) column mask, broadcast over CP.
    r_idx = jax.lax.broadcasted_iota(jnp.int32, (R1, 1, 1), 0) + (row0 - 1)
    c_idx = jax.lax.broadcasted_iota(jnp.int32, (1, WA, 1), 1)
    valid = (r_idx >= 0) & (r_idx < true_h) & (c_idx >= 1) & (c_idx <= true_w)
    a1_ref[...] = jnp.where(valid, a1, 0.0).astype(a1_ref.dtype)

    # ---- conv2: same structure, patches sliced from the masked scratch ----
    def a_patch(dy, dx):
        p = a1_ref[pl.ds(dy, TH), pl.ds(dx, WO), :]
        return p.reshape(TH * WO, CP)              # WO % 8 == 0 -> layout-free

    acc2 = jnp.dot(a_patch(0, 0), w2_ref[0, 0],
                   preferred_element_type=jnp.float32)
    for dy in range(3):
        for dx in range(3):
            if dy == 0 and dx == 0:
                continue
            acc2 = acc2 + jnp.dot(a_patch(dy, dx), w2_ref[dy, dx],
                                  preferred_element_type=jnp.float32)

    out = acc2 * s2_ref[...] + b2_ref[...]

    # ---- identity residual (f32 add) + relu; output stays f32 ----
    res = x_ref[0, pl.ds(row0 + 2, TH), pl.ds(2, WO), :].astype(jnp.float32)
    out = jnp.maximum(out + res.reshape(TH * WO, CP), 0.0)
    o_ref[0] = out.reshape(TH, WO, CP).astype(o_ref.dtype)


def basic_block_pallas(x_nchw, w1, gamma1, beta1, mean1, var1,
                       w2, gamma2, beta2, mean2, var2, eps=1e-5):
    """x_nchw: (B, C, H, W); w1: (P, C, 3, 3); w2: (P, P, 3, 3). Returns NCHW f32."""
    B, C, H, W = x_nchw.shape
    P = w1.shape[0]
    assert C == P, "identity residual requires inplanes == planes (no downsample)"

    CP = ((P + 127) // 128) * 128                  # lane-dense channel padding

    TH = 8                                         # output row tile
    Hp = ((H + TH - 1) // TH) * TH                 # padded height (no TH=H fallback)
    WO = ((W + 7) // 8) * 8                        # output compute width
    WA = ((WO + 2 + 7) // 8) * 8                   # a1 scratch width (incl. 1-col halo)
    WX = ((WA + 2 + 7) // 8) * 8                   # padded input width (incl. 2-col halo)
    T = Hp // TH

    # Fold eval-mode BN into per-channel scale/bias (f32).
    s1 = gamma1 / jnp.sqrt(var1 + eps)
    b1 = beta1 - mean1 * s1
    s2 = gamma2 / jnp.sqrt(var2 + eps)
    b2 = beta2 - mean2 * s2

    # NCHW -> NHWC, zero-pad rows (2 top, Hp+2-H bottom), cols (2 left, to WX),
    # channels to CP; bf16 for the MXU.
    x_nhwc = jnp.transpose(x_nchw, (0, 2, 3, 1))
    x_p = jnp.pad(x_nhwc, ((0, 0), (2, Hp + 2 - H), (2, WX - 2 - W), (0, CP - C)))
    x_p = x_p.astype(jnp.bfloat16)                 # (B, Hp+4, WX, CP)

    # Conv weights (Cout, Cin, 3, 3) -> (dy, dx, cin, cout), channel-padded bf16.
    def pack_w(w, cin):
        wt = jnp.transpose(w, (2, 3, 1, 0))        # (dy, dx, cin, cout)
        wt = jnp.pad(wt, ((0, 0), (0, 0), (0, CP - cin), (0, CP - P)))
        return wt.astype(jnp.bfloat16)             # (3, 3, CP, CP)

    w1_p, w2_p = pack_w(w1, C), pack_w(w2, P)

    def pack_vec(v):
        return jnp.pad(v.astype(jnp.float32), (0, CP - P)).reshape(1, CP)

    s1_p, b1_p = pack_vec(s1), pack_vec(b1)
    s2_p, b2_p = pack_vec(s2), pack_vec(b2)

    kernel = functools.partial(_basic_block_kernel, true_h=H, true_w=W)

    out = pl.pallas_call(
        kernel,
        out_shape=jax.ShapeDtypeStruct((B, Hp, WO, CP), jnp.float32),
        grid_spec=pltpu.PrefetchScalarGridSpec(
            num_scalar_prefetch=0,
            grid=(B, T),
            in_specs=[
                pl.BlockSpec((1, Hp + 4, WX, CP), lambda b, t: (b, 0, 0, 0)),
                pl.BlockSpec((3, 3, CP, CP), lambda b, t: (0, 0, 0, 0)),
                pl.BlockSpec((1, CP), lambda b, t: (0, 0)),
                pl.BlockSpec((1, CP), lambda b, t: (0, 0)),
                pl.BlockSpec((3, 3, CP, CP), lambda b, t: (0, 0, 0, 0)),
                pl.BlockSpec((1, CP), lambda b, t: (0, 0)),
                pl.BlockSpec((1, CP), lambda b, t: (0, 0)),
            ],
            out_specs=pl.BlockSpec((1, TH, WO, CP), lambda b, t: (b, t, 0, 0)),
            scratch_shapes=[pltpu.VMEM((TH + 2, WA, CP), jnp.bfloat16)],
        ),
        compiler_params=pltpu.CompilerParams(
            dimension_semantics=("parallel", "parallel"),
            vmem_limit_bytes=48 * 1024 * 1024),    # safe on v7x (64 MiB phys), roomy on v5e/v6e
    )(x_p, w1_p, s1_p, b1_p, w2_p, s2_p, b2_p)

    # Drop spatial/channel padding, back to NCHW f32.  (If downstream can consume
    # padded NHWC, skip this extra HBM pass entirely.)
    out = out[:, :H, :W, :P]
    return jnp.transpose(out, (0, 3, 1, 2))


def _reference(x, w1, g1, be1, m1, v1, w2, g2, be2, m2, v2, eps=1e-5):
    """Pure-JAX NCHW reference mirroring the PyTorch forward (eval-mode BN)."""
    def conv(x, w):
        return jax.lax.conv_general_dilated(
            x, w, window_strides=(1, 1), padding=((1, 1), (1, 1)),
            dimension_numbers=("NCHW", "OIHW", "NCHW"))

    def bn(x, g, b, m, v):
        g, b, m, v = (a.reshape(1, -1, 1, 1) for a in (g, b, m, v))
        return (x - m) / jnp.sqrt(v + eps) * g + b

    out = jax.nn.relu(bn(conv(x, w1), g1, be1, m1, v1))
    out = bn(conv(out, w2), g2, be2, m2, v2)
    return jax.nn.relu(out + x)


if __name__ == "__main__":
    # Small shapes: batch=2, inplanes=planes=4, spatial=16x16.
    B, C, H, W = 2, 4, 16, 16
    P = C

    key = jax.random.PRNGKey(0)
    k = iter(jax.random.split(key, 8))
    x = jax.random.normal(next(k), (B, C, H, W), jnp.float32)
    w1 = jax.random.normal(next(k), (P, C, 3, 3), jnp.float32) * 0.2
    w2 = jax.random.normal(next(k), (P, P, 3, 3), jnp.float32) * 0.2
    # Deterministic BN parameters (eval-mode running stats).
    gamma1 = 1.0 + 0.1 * jax.random.normal(next(k), (P,), jnp.float32)
    beta1 = 0.1 * jax.random.normal(next(k), (P,), jnp.float32)
    mean1 = 0.05 * jax.random.normal(next(k), (P,), jnp.float32)
    var1 = jnp.abs(1.0 + 0.1 * jax.random.normal(next(k), (P,), jnp.float32))
    gamma2 = jnp.ones((P,), jnp.float32)
    beta2 = jnp.zeros((P,), jnp.float32)
    mean2 = jnp.zeros((P,), jnp.float32)
    var2 = jnp.ones((P,), jnp.float32)

    out = basic_block_pallas(x, w1, gamma1, beta1, mean1, var1,
                             w2, gamma2, beta2, mean2, var2)
    out = jax.block_until_ready(out)

    ref = _reference(x, w1, gamma1, beta1, mean1, var1,
                     w2, gamma2, beta2, mean2, var2)
    assert out.shape == (B, C, H, W)
    # bf16 matmul operands vs f32 reference -> loosened tolerance.
    err = jnp.max(jnp.abs(out - ref))
    assert jnp.allclose(out, ref, rtol=5e-2, atol=5e-2), \
        f"mismatch vs reference (max |err|={err})"

    print("KERNEL_OK")
</pallas_src>

<mosaic_0001>
module attributes {stable_mosaic.version = 11 : i64} {
  func.func @_basic_block_kernel(%arg0: i32, %arg1: i32, %arg2: memref<1x20x32x128xbf16, #tpu.memory_space<vmem>>, %arg3: memref<3x3x128x128xbf16, #tpu.memory_space<vmem>>, %arg4: memref<1x128xf32, #tpu.memory_space<vmem>>, %arg5: memref<1x128xf32, #tpu.memory_space<vmem>>, %arg6: memref<3x3x128x128xbf16, #tpu.memory_space<vmem>>, %arg7: memref<1x128xf32, #tpu.memory_space<vmem>>, %arg8: memref<1x128xf32, #tpu.memory_space<vmem>>, %arg9: memref<1x8x16x128xf32, #tpu.memory_space<vmem>>, %arg10: memref<10x24x128xbf16, #tpu.memory_space<vmem>>) attributes {dimension_semantics = [#tpu.dimension_semantics<parallel>, #tpu.dimension_semantics<parallel>], iteration_bounds = array<i64: 2, 2>, scalar_prefetch = 0 : i64, scratch_operands = 1 : i64, tpu.core_type = #tpu.core_type<tc>, window_params = [{transform_indices = @transform_0, window_bounds = array<i64: 1, 20, 32, 128>}, {pipeline_mode = #tpu.pipeline_mode<synchronous>, transform_indices = @transform_1, window_bounds = array<i64: 3, 3, 128, 128>}, {pipeline_mode = #tpu.pipeline_mode<synchronous>, transform_indices = @transform_2, window_bounds = array<i64: 1, 128>}, {pipeline_mode = #tpu.pipeline_mode<synchronous>, transform_indices = @transform_3, window_bounds = array<i64: 1, 128>}, {pipeline_mode = #tpu.pipeline_mode<synchronous>, transform_indices = @transform_4, window_bounds = array<i64: 3, 3, 128, 128>}, {pipeline_mode = #tpu.pipeline_mode<synchronous>, transform_indices = @transform_5, window_bounds = array<i64: 1, 128>}, {pipeline_mode = #tpu.pipeline_mode<synchronous>, transform_indices = @transform_6, window_bounds = array<i64: 1, 128>}, {transform_indices = @transform_7, window_bounds = array<i64: 1, 8, 16, 128>}]} {
    %c8_i32 = arith.constant 8 : i32
    %0 = arith.muli %arg1, %c8_i32 : i32
    %1 = tpu.assume_multiple %0, 8 : i32
    %c0_i32 = arith.constant 0 : i32
    %2 = arith.addi %1, %c0_i32 : i32
    %c0 = arith.constant 0 : index
    %3 = arith.index_cast %2 : i32 to index
    %c0_0 = arith.constant 0 : index
    %c0_1 = arith.constant 0 : index
    %4 = vector.load %arg2[%c0, %3, %c0_0, %c0_1] : memref<1x20x32x128xbf16, #tpu.memory_space<vmem>>, vector<1x10x24x128xbf16>
    %5 = vector.shape_cast %4 : vector<1x10x24x128xbf16> to vector<10x24x128xbf16>
    %6 = vector.shape_cast %5 : vector<10x24x128xbf16> to vector<240x128xbf16>
    %c0_2 = arith.constant 0 : index
    %c0_3 = arith.constant 0 : index
    %c0_4 = arith.constant 0 : index
    %c0_5 = arith.constant 0 : index
    %7 = vector.load %arg3[%c0_2, %c0_3, %c0_4, %c0_5] : memref<3x3x128x128xbf16, #tpu.memory_space<vmem>>, vector<1x1x128x128xbf16>
    %8 = vector.shape_cast %7 : vector<1x1x128x128xbf16> to vector<128x128xbf16>
    %cst = arith.constant dense<0.000000e+00> : vector<240x128xf32>
    %9 = tpu.matmul %6, %8, %cst {dimension_numbers = #tpu.dot_dimension_numbers<[1], [0], [0], [1], [0, 0, 1, 1], [], []>} : vector<240x128xbf16>, vector<128x128xbf16>, vector<240x128xf32> -> vector<240x128xf32>
    %c0_i32_6 = arith.constant 0 : i32
    %10 = arith.addi %1, %c0_i32_6 : i32
    %c0_7 = arith.constant 0 : index
    %11 = arith.index_cast %10 : i32 to index
    %c1 = arith.constant 1 : index
    %c0_8 = arith.constant 0 : index
    %12 = vector.load %arg2[%c0_7, %11, %c1, %c0_8] : memref<1x20x32x128xbf16, #tpu.memory_space<vmem>>, vector<1x10x24x128xbf16>
    %13 = vector.shape_cast %12 : vector<1x10x24x128xbf16> to vector<10x24x128xbf16>
    %14 = vector.shape_cast %13 : vector<10x24x128xbf16> to vector<240x128xbf16>
    %c0_9 = arith.constant 0 : index
    %c1_10 = arith.constant 1 : index
    %c0_11 = arith.constant 0 : index
    %c0_12 = arith.constant 0 : index
    %15 = vector.load %arg3[%c0_9, %c1_10, %c0_11, %c0_12] : memref<3x3x128x128xbf16, #tpu.memory_space<vmem>>, vector<1x1x128x128xbf16>
    %16 = vector.shape_cast %15 : vector<1x1x128x128xbf16> to vector<128x128xbf16>
    %cst_13 = arith.constant dense<0.000000e+00> : vector<240x128xf32>
    %17 = tpu.matmul %14, %16, %cst_13 {dimension_numbers = #tpu.dot_dimension_numbers<[1], [0], [0], [1], [0, 0, 1, 1], [], []>} : vector<240x128xbf16>, vector<128x128xbf16>, vector<240x128xf32> -> vector<240x128xf32>
    %18 = arith.addf %9, %17 : vector<240x128xf32>
    %c0_i32_14 = arith.constant 0 : i32
    %19 = arith.addi %1, %c0_i32_14 : i32
    %c0_15 = arith.constant 0 : index
    %20 = arith.index_cast %19 : i32 to index
    %c2 = arith.constant 2 : index
    %c0_16 = arith.constant 0 : index
    %21 = vector.load %arg2[%c0_15, %20, %c2, %c0_16] : memref<1x20x32x128xbf16, #tpu.memory_space<vmem>>, vector<1x10x24x128xbf16>
    %22 = vector.shape_cast %21 : vector<1x10x24x128xbf16> to vector<10x24x128xbf16>
    %23 = vector.shape_cast %22 : vector<10x24x128xbf16> to vector<240x128xbf16>
    %c0_17 = arith.constant 0 : index
    %c2_18 = arith.constant 2 : index
    %c0_19 = arith.constant 0 : index
    %c0_20 = arith.constant 0 : index
    %24 = vector.load %arg3[%c0_17, %c2_18, %c0_19, %c0_20] : memref<3x3x128x128xbf16, #tpu.memory_space<vmem>>, vector<1x1x128x128xbf16>
    %25 = vector.shape_cast %24 : vector<1x1x128x128xbf16> to vector<128x128xbf16>
    %cst_21 = arith.constant dense<0.000000e+00> : vector<240x128xf32>
    %26 = tpu.matmul %23, %25, %cst_21 {dimension_numbers = #tpu.dot_dimension_numbers<[1], [0], [0], [1], [0, 0, 1, 1], [], []>} : vector<240x128xbf16>, vector<128x128xbf16>, vector<240x128xf32> -> vector<240x128xf32>
    %27 = arith.addf %18, %26 : vector<240x128xf32>
    %c1_i32 = arith.constant 1 : i32
    %28 = arith.addi %1, %c1_i32 : i32
    %c0_22 = arith.constant 0 : index
    %29 = arith.index_cast %28 : i32 to index
    %c0_23 = arith.constant 0 : index
    %c0_24 = arith.constant 0 : index
    %30 = vector.load %arg2[%c0_22, %29, %c0_23, %c0_24] : memref<1x20x32x128xbf16, #tpu.memory_space<vmem>>, vector<1x10x24x128xbf16>
    %31 = vector.shape_cast %30 : vector<1x10x24x128xbf16> to vector<10x24x128xbf16>
    %32 = vector.shape_cast %31 : vector<10x24x128xbf16> to vector<240x128xbf16>
    %c1_25 = arith.constant 1 : index
    %c0_26 = arith.constant 0 : index
    %c0_27 = arith.constant 0 : index
    %c0_28 = arith.constant 0 : index
    %33 = vector.load %arg3[%c1_25, %c0_26, %c0_27, %c0_28] : memref<3x3x128x128xbf16, #tpu.memory_space<vmem>>, vector<1x1x128x128xbf16>
    %34 = vector.shape_cast %33 : vector<1x1x128x128xbf16> to vector<128x128xbf16>
    %cst_29 = arith.constant dense<0.000000e+00> : vector<240x128xf32>
    %35 = tpu.matmul %32, %34, %cst_29 {dimension_numbers = #tpu.dot_dimension_numbers<[1], [0], [0], [1], [0, 0, 1, 1], [], []>} : vector<240x128xbf16>, vector<128x128xbf16>, vector<240x128xf32> -> vector<240x128xf32>
    %36 = arith.addf %27, %35 : vector<240x128xf32>
    %c1_i32_30 = arith.constant 1 : i32
    %37 = arith.addi %1, %c1_i32_30 : i32
    %c0_31 = arith.constant 0 : index
    %38 = arith.index_cast %37 : i32 to index
    %c1_32 = arith.constant 1 : index
    %c0_33 = arith.constant 0 : index
    %39 = vector.load %arg2[%c0_31, %38, %c1_32, %c0_33] : memref<1x20x32x128xbf16, #tpu.memory_space<vmem>>, vector<1x10x24x128xbf16>
    %40 = vector.shape_cast %39 : vector<1x10x24x128xbf16> to vector<10x24x128xbf16>
    %41 = vector.shape_cast %40 : vector<10x24x128xbf16> to vector<240x128xbf16>
    %c1_34 = arith.constant 1 : index
    %c1_35 = arith.constant 1 : index
    %c0_36 = arith.constant 0 : index
    %c0_37 = arith.constant 0 : index
    %42 = vector.load %arg3[%c1_34, %c1_35, %c0_36, %c0_37] : memref<3x3x128x128xbf16, #tpu.memory_space<vmem>>, vector<1x1x128x128xbf16>
    %43 = vector.shape_cast %42 : vector<1x1x128x128xbf16> to vector<128x128xbf16>
    %cst_38 = arith.constant dense<0.000000e+00> : vector<240x128xf32>
    %44 = tpu.matmul %41, %43, %cst_38 {dimension_numbers = #tpu.dot_dimension_numbers<[1], [0], [0], [1], [0, 0, 1, 1], [], []>} : vector<240x128xbf16>, vector<128x128xbf16>, vector<240x128xf32> -> vector<240x128xf32>
    %45 = arith.addf %36, %44 : vector<240x128xf32>
    %c1_i32_39 = arith.constant 1 : i32
    %46 = arith.addi %1, %c1_i32_39 : i32
    %c0_40 = arith.constant 0 : index
    %47 = arith.index_cast %46 : i32 to index
    %c2_41 = arith.constant 2 : index
    %c0_42 = arith.constant 0 : index
    %48 = vector.load %arg2[%c0_40, %47, %c2_41, %c0_42] : memref<1x20x32x128xbf16, #tpu.memory_space<vmem>>, vector<1x10x24x128xbf16>
    %49 = vector.shape_cast %48 : vector<1x10x24x128xbf16> to vector<10x24x128xbf16>
    %50 = vector.shape_cast %49 : vector<10x24x128xbf16> to vector<240x128xbf16>
    %c1_43 = arith.constant 1 : index
    %c2_44 = arith.constant 2 : index
    %c0_45 = arith.constant 0 : index
    %c0_46 = arith.constant 0 : index
    %51 = vector.load %arg3[%c1_43, %c2_44, %c0_45, %c0_46] : memref<3x3x128x128xbf16, #tpu.memory_space<vmem>>, vector<1x1x128x128xbf16>
    %52 = vector.shape_cast %51 : vector<1x1x128x128xbf16> to vector<128x128xbf16>
    %cst_47 = arith.constant dense<0.000000e+00> : vector<240x128xf32>
    %53 = tpu.matmul %50, %52, %cst_47 {dimension_numbers = #tpu.dot_dimension_numbers<[1], [0], [0], [1], [0, 0, 1, 1], [], []>} : vector<240x128xbf16>, vector<128x128xbf16>, vector<240x128xf32> -> vector<240x128xf32>
    %54 = arith.addf %45, %53 : vector<240x128xf32>
    %c2_i32 = arith.constant 2 : i32
    %55 = arith.addi %1, %c2_i32 : i32
    %c0_48 = arith.constant 0 : index
    %56 = arith.index_cast %55 : i32 to index
    %c0_49 = arith.constant 0 : index
    %c0_50 = arith.constant 0 : index
    %57 = vector.load %arg2[%c0_48, %56, %c0_49, %c0_50] : memref<1x20x32x128xbf16, #tpu.memory_space<vmem>>, vector<1x10x24x128xbf16>
    %58 = vector.shape_cast %57 : vector<1x10x24x128xbf16> to vector<10x24x128xbf16>
    %59 = vector.shape_cast %58 : vector<10x24x128xbf16> to vector<240x128xbf16>
    %c2_51 = arith.constant 2 : index
    %c0_52 = arith.constant 0 : index
    %c0_53 = arith.constant 0 : index
    %c0_54 = arith.constant 0 : index
    %60 = vector.load %arg3[%c2_51, %c0_52, %c0_53, %c0_54] : memref<3x3x128x128xbf16, #tpu.memory_space<vmem>>, vector<1x1x128x128xbf16>
    %61 = vector.shape_cast %60 : vector<1x1x128x128xbf16> to vector<128x128xbf16>
    %cst_55 = arith.constant dense<0.000000e+00> : vector<240x128xf32>
    %62 = tpu.matmul %59, %61, %cst_55 {dimension_numbers = #tpu.dot_dimension_numbers<[1], [0], [0], [1], [0, 0, 1, 1], [], []>} : vector<240x128xbf16>, vector<128x128xbf16>, vector<240x128xf32> -> vector<240x128xf32>
    %63 = arith.addf %54, %62 : vector<240x128xf32>
    %c2_i32_56 = arith.constant 2 : i32
    %64 = arith.addi %1, %c2_i32_56 : i32
    %c0_57 = arith.constant 0 : index
    %65 = arith.index_cast %64 : i32 to index
    %c1_58 = arith.constant 1 : index
    %c0_59 = arith.constant 0 : index
    %66 = vector.load %arg2[%c0_57, %65, %c1_58, %c0_59] : memref<1x20x32x128xbf16, #tpu.memory_space<vmem>>, vector<1x10x24x128xbf16>
    %67 = vector.shape_cast %66 : vector<1x10x24x128xbf16> to vector<10x24x128xbf16>
    %68 = vector.shape_cast %67 : vector<10x24x128xbf16> to vector<240x128xbf16>
    %c2_60 = arith.constant 2 : index
    %c1_61 = arith.constant 1 : index
    %c0_62 = arith.constant 0 : index
    %c0_63 = arith.constant 0 : index
    %69 = vector.load %arg3[%c2_60, %c1_61, %c0_62, %c0_63] : memref<3x3x128x128xbf16, #tpu.memory_space<vmem>>, vector<1x1x128x128xbf16>
    %70 = vector.shape_cast %69 : vector<1x1x128x128xbf16> to vector<128x128xbf16>
    %cst_64 = arith.constant dense<0.000000e+00> : vector<240x128xf32>
    %71 = tpu.matmul %68, %70, %cst_64 {dimension_numbers = #tpu.dot_dimension_numbers<[1], [0], [0], [1], [0, 0, 1, 1], [], []>} : vector<240x128xbf16>, vector<128x128xbf16>, vector<240x128xf32> -> vector<240x128xf32>
    %72 = arith.addf %63, %71 : vector<240x128xf32>
    %c2_i32_65 = arith.constant 2 : i32
    %73 = arith.addi %1, %c2_i32_65 : i32
    %c0_66 = arith.constant 0 : index
    %74 = arith.index_cast %73 : i32 to index
    %c2_67 = arith.constant 2 : index
    %c0_68 = arith.constant 0 : index
    %75 = vector.load %arg2[%c0_66, %74, %c2_67, %c0_68] : memref<1x20x32x128xbf16, #tpu.memory_space<vmem>>, vector<1x10x24x128xbf16>
    %76 = vector.shape_cast %75 : vector<1x10x24x128xbf16> to vector<10x24x128xbf16>
    %77 = vector.shape_cast %76 : vector<10x24x128xbf16> to vector<240x128xbf16>
    %c2_69 = arith.constant 2 : index
    %c2_70 = arith.constant 2 : index
    %c0_71 = arith.constant 0 : index
    %c0_72 = arith.constant 0 : index
    %78 = vector.load %arg3[%c2_69, %c2_70, %c0_71, %c0_72] : memref<3x3x128x128xbf16, #tpu.memory_space<vmem>>, vector<1x1x128x128xbf16>
    %79 = vector.shape_cast %78 : vector<1x1x128x128xbf16> to vector<128x128xbf16>
    %cst_73 = arith.constant dense<0.000000e+00> : vector<240x128xf32>
    %80 = tpu.matmul %77, %79, %cst_73 {dimension_numbers = #tpu.dot_dimension_numbers<[1], [0], [0], [1], [0, 0, 1, 1], [], []>} : vector<240x128xbf16>, vector<128x128xbf16>, vector<240x128xf32> -> vector<240x128xf32>
    %81 = arith.addf %72, %80 : vector<240x128xf32>
    %c0_74 = arith.constant 0 : index
    %c0_75 = arith.constant 0 : index
    %82 = vector.load %arg4[%c0_74, %c0_75] : memref<1x128xf32, #tpu.memory_space<vmem>>, vector<1x128xf32>
    %83 = vector.broadcast %82 : vector<1x128xf32> to vector<240x128xf32>
    %84 = arith.mulf %81, %83 : vector<240x128xf32>
    %c0_76 = arith.constant 0 : index
    %c0_77 = arith.constant 0 : index
    %85 = vector.load %arg5[%c0_76, %c0_77] : memref<1x128xf32, #tpu.memory_space<vmem>>, vector<1x128xf32>
    %86 = vector.broadcast %85 : vector<1x128xf32> to vector<240x128xf32>
    %87 = arith.addf %84, %86 : vector<240x128xf32>
    %cst_78 = arith.constant 0.000000e+00 : f32
    %88 = vector.broadcast %cst_78 : f32 to vector<240x128xf32>
    %89 = arith.maximumf %87, %88 : vector<240x128xf32>
    %90 = vector.shape_cast %89 : vector<240x128xf32> to vector<10x24x128xf32>
    %91 = tpu.iota {dimensions = array<i32: 0>} : vector<10x1x1xi32>
    %c1_i32_79 = arith.constant 1 : i32
    %92 = arith.subi %1, %c1_i32_79 : i32
    %93 = vector.broadcast %92 : i32 to vector<10x1x1xi32>
    %94 = arith.addi %91, %93 : vector<10x1x1xi32>
    %95 = tpu.iota {dimensions = array<i32: 1>} : vector<1x24x1xi32>
    %c0_i32_80 = arith.constant 0 : i32
    %96 = vector.broadcast %c0_i32_80 : i32 to vector<10x1x1xi32>
    %97 = arith.cmpi sge, %94, %96 : vector<10x1x1xi32>
    %c16_i32 = arith.constant 16 : i32
    %98 = vector.broadcast %c16_i32 : i32 to vector<10x1x1xi32>
    %99 = arith.cmpi slt, %94, %98 : vector<10x1x1xi32>
    %100 = arith.andi %97, %99 : vector<10x1x1xi1>
    %c1_i32_81 = arith.constant 1 : i32
    %101 = vector.broadcast %c1_i32_81 : i32 to vector<1x24x1xi32>
    %102 = arith.cmpi sge, %95, %101 : vector<1x24x1xi32>
    %103 = vector.broadcast %100 : vector<10x1x1xi1> to vector<10x24x1xi1>
    %104 = vector.broadcast %102 : vector<1x24x1xi1> to vector<10x24x1xi1>
    %105 = arith.andi %103, %104 : vector<10x24x1xi1>
    %c16_i32_82 = arith.constant 16 : i32
    %106 = vector.broadcast %c16_i32_82 : i32 to vector<1x24x1xi32>
    %107 = arith.cmpi sle, %95, %106 : vector<1x24x1xi32>
    %108 = vector.broadcast %107 : vector<1x24x1xi1> to vector<10x24x1xi1>
    %109 = arith.andi %105, %108 : vector<10x24x1xi1>
    %cst_83 = arith.constant 0.000000e+00 : f32
    %110 = vector.shape_cast %109 : vector<10x24x1xi1> to vector<10x24x1xi1>
    %111 = vector.broadcast %110 : vector<10x24x1xi1> to vector<10x24x128xi1>
    %112 = vector.broadcast %cst_83 : f32 to vector<10x24x128xf32>
    %113 = arith.select %111, %90, %112 : vector<10x24x128xi1>, vector<10x24x128xf32>
    %114 = arith.truncf %113 : vector<10x24x128xf32> to vector<10x24x128xbf16>
    %c0_84 = arith.constant 0 : index
    %c0_85 = arith.constant 0 : index
    %c0_86 = arith.constant 0 : index
    %115 = vector.load %arg10[%c0_84, %c0_85, %c0_86] : memref<10x24x128xbf16, #tpu.memory_space<vmem>>, vector<10x24x128xbf16>
    tpu.vector_store %arg10[%c0_84, %c0_85, %c0_86], %114 {strides = array<i32>} : memref<10x24x128xbf16, #tpu.memory_space<vmem>>, vector<10x24x128xbf16>,
    %c0_87 = arith.constant 0 : index
    %c0_88 = arith.constant 0 : index
    %c0_89 = arith.constant 0 : index
    %116 = vector.load %arg10[%c0_87, %c0_88, %c0_89] : memref<10x24x128xbf16, #tpu.memory_space<vmem>>, vector<8x16x128xbf16>
    %117 = vector.shape_cast %116 : vector<8x16x128xbf16> to vector<128x128xbf16>
    %c0_90 = arith.constant 0 : index
    %c0_91 = arith.constant 0 : index
    %c0_92 = arith.constant 0 : index
    %c0_93 = arith.constant 0 : index
    %118 = vector.load %arg6[%c0_90, %c0_91, %c0_92, %c0_93] : memref<3x3x128x128xbf16, #tpu.memory_space<vmem>>, vector<1x1x128x128xbf16>
    %119 = vector.shape_cast %118 : vector<1x1x128x128xbf16> to vector<128x128xbf16>
    %cst_94 = arith.constant dense<0.000000e+00> : vector<128x128xf32>
    %120 = tpu.matmul %117, %119, %cst_94 {dimension_numbers = #tpu.dot_dimension_numbers<[1], [0], [0], [1], [0, 0, 1, 1], [], []>} : vector<128x128xbf16>, vector<128x128xbf16>, vector<128x128xf32> -> vector<128x128xf32>
    %c0_95 = arith.constant 0 : index
    %c1_96 = arith.constant 1 : index
    %c0_97 = arith.constant 0 : index
    %121 = vector.load %arg10[%c0_95, %c1_96, %c0_97] : memref<10x24x128xbf16, #tpu.memory_space<vmem>>, vector<8x16x128xbf16>
    %122 = vector.shape_cast %121 : vector<8x16x128xbf16> to vector<128x128xbf16>
    %c0_98 = arith.constant 0 : index
    %c1_99 = arith.constant 1 : index
    %c0_100 = arith.constant 0 : index
    %c0_101 = arith.constant 0 : index
    %123 = vector.load %arg6[%c0_98, %c1_99, %c0_100, %c0_101] : memref<3x3x128x128xbf16, #tpu.memory_space<vmem>>, vector<1x1x128x128xbf16>
    %124 = vector.shape_cast %123 : vector<1x1x128x128xbf16> to vector<128x128xbf16>
    %cst_102 = arith.constant dense<0.000000e+00> : vector<128x128xf32>
    %125 = tpu.matmul %122, %124, %cst_102 {dimension_numbers = #tpu.dot_dimension_numbers<[1], [0], [0], [1], [0, 0, 1, 1], [], []>} : vector<128x128xbf16>, vector<128x128xbf16>, vector<128x128xf32> -> vector<128x128xf32>
    %126 = arith.addf %120, %125 : vector<128x128xf32>
    %c0_103 = arith.constant 0 : index
    %c2_104 = arith.constant 2 : index
    %c0_105 = arith.constant 0 : index
    %127 = vector.load %arg10[%c0_103, %c2_104, %c0_105] : memref<10x24x128xbf16, #tpu.memory_space<vmem>>, vector<8x16x128xbf16>
    %128 = vector.shape_cast %127 : vector<8x16x128xbf16> to vector<128x128xbf16>
    %c0_106 = arith.constant 0 : index
    %c2_107 = arith.constant 2 : index
    %c0_108 = arith.constant 0 : index
    %c0_109 = arith.constant 0 : index
    %129 = vector.load %arg6[%c0_106, %c2_107, %c0_108, %c0_109] : memref<3x3x128x128xbf16, #tpu.memory_space<vmem>>, vector<1x1x128x128xbf16>
    %130 = vector.shape_cast %129 : vector<1x1x128x128xbf16> to vector<128x128xbf16>
    %cst_110 = arith.constant dense<0.000000e+00> : vector<128x128xf32>
    %131 = tpu.matmul %128, %130, %cst_110 {dimension_numbers = #tpu.dot_dimension_numbers<[1], [0], [0], [1], [0, 0, 1, 1], [], []>} : vector<128x128xbf16>, vector<128x128xbf16>, vector<128x128xf32> -> vector<128x128xf32>
    %132 = arith.addf %126, %131 : vector<128x128xf32>
    %c1_111 = arith.constant 1 : index
    %c0_112 = arith.constant 0 : index
    %c0_113 = arith.constant 0 : index
    %133 = vector.load %arg10[%c1_111, %c0_112, %c0_113] : memref<10x24x128xbf16, #tpu.memory_space<vmem>>, vector<8x16x128xbf16>
    %134 = vector.shape_cast %133 : vector<8x16x128xbf16> to vector<128x128xbf16>
    %c1_114 = arith.constant 1 : index
    %c0_115 = arith.constant 0 : index
    %c0_116 = arith.constant 0 : index
    %c0_117 = arith.constant 0 : index
    %135 = vector.load %arg6[%c1_114, %c0_115, %c0_116, %c0_117] : memref<3x3x128x128xbf16, #tpu.memory_space<vmem>>, vector<1x1x128x128xbf16>
    %136 = vector.shape_cast %135 : vector<1x1x128x128xbf16> to vector<128x128xbf16>
    %cst_118 = arith.constant dense<0.000000e+00> : vector<128x128xf32>
    %137 = tpu.matmul %134, %136, %cst_118 {dimension_numbers = #tpu.dot_dimension_numbers<[1], [0], [0], [1], [0, 0, 1, 1], [], []>} : vector<128x128xbf16>, vector<128x128xbf16>, vector<128x128xf32> -> vector<128x128xf32>
    %138 = arith.addf %132, %137 : vector<128x128xf32>
    %c1_119 = arith.constant 1 : index
    %c1_120 = arith.constant 1 : index
    %c0_121 = arith.constant 0 : index
    %139 = vector.load %arg10[%c1_119, %c1_120, %c0_121] : memref<10x24x128xbf16, #tpu.memory_space<vmem>>, vector<8x16x128xbf16>
    %140 = vector.shape_cast %139 : vector<8x16x128xbf16> to vector<128x128xbf16>
    %c1_122 = arith.constant 1 : index
    %c1_123 = arith.constant 1 : index
    %c0_124 = arith.constant 0 : index
    %c0_125 = arith.constant 0 : index
    %141 = vector.load %arg6[%c1_122, %c1_123, %c0_124, %c0_125] : memref<3x3x128x128xbf16, #tpu.memory_space<vmem>>, vector<1x1x128x128xbf16>
    %142 = vector.shape_cast %141 : vector<1x1x128x128xbf16> to vector<128x128xbf16>
    %cst_126 = arith.constant dense<0.000000e+00> : vector<128x128xf32>
    %143 = tpu.matmul %140, %142, %cst_126 {dimension_numbers = #tpu.dot_dimension_numbers<[1], [0], [0], [1], [0, 0, 1, 1], [], []>} : vector<128x128xbf16>, vector<128x128xbf16>, vector<128x128xf32> -> vector<128x128xf32>
    %144 = arith.addf %138, %143 : vector<128x128xf32>
    %c1_127 = arith.constant 1 : index
    %c2_128 = arith.constant 2 : index
    %c0_129 = arith.constant 0 : index
    %145 = vector.load %arg10[%c1_127, %c2_128, %c0_129] : memref<10x24x128xbf16, #tpu.memory_space<vmem>>, vector<8x16x128xbf16>
    %146 = vector.shape_cast %145 : vector<8x16x128xbf16> to vector<128x128xbf16>
    %c1_130 = arith.constant 1 : index
    %c2_131 = arith.constant 2 : index
    %c0_132 = arith.constant 0 : index
    %c0_133 = arith.constant 0 : index
    %147 = vector.load %arg6[%c1_130, %c2_131, %c0_132, %c0_133] : memref<3x3x128x128xbf16, #tpu.memory_space<vmem>>, vector<1x1x128x128xbf16>
    %148 = vector.shape_cast %147 : vector<1x1x128x128xbf16> to vector<128x128xbf16>
    %cst_134 = arith.constant dense<0.000000e+00> : vector<128x128xf32>
    %149 = tpu.matmul %146, %148, %cst_134 {dimension_numbers = #tpu.dot_dimension_numbers<[1], [0], [0], [1], [0, 0, 1, 1], [], []>} : vector<128x128xbf16>, vector<128x128xbf16>, vector<128x128xf32> -> vector<128x128xf32>
    %150 = arith.addf %144, %149 : vector<128x128xf32>
    %c2_135 = arith.constant 2 : index
    %c0_136 = arith.constant 0 : index
    %c0_137 = arith.constant 0 : index
    %151 = vector.load %arg10[%c2_135, %c0_136, %c0_137] : memref<10x24x128xbf16, #tpu.memory_space<vmem>>, vector<8x16x128xbf16>
    %152 = vector.shape_cast %151 : vector<8x16x128xbf16> to vector<128x128xbf16>
    %c2_138 = arith.constant 2 : index
    %c0_139 = arith.constant 0 : index
    %c0_140 = arith.constant 0 : index
    %c0_141 = arith.constant 0 : index
    %153 = vector.load %arg6[%c2_138, %c0_139, %c0_140, %c0_141] : memref<3x3x128x128xbf16, #tpu.memory_space<vmem>>, vector<1x1x128x128xbf16>
    %154 = vector.shape_cast %153 : vector<1x1x128x128xbf16> to vector<128x128xbf16>
    %cst_142 = arith.constant dense<0.000000e+00> : vector<128x128xf32>
    %155 = tpu.matmul %152, %154, %cst_142 {dimension_numbers = #tpu.dot_dimension_numbers<[1], [0], [0], [1], [0, 0, 1, 1], [], []>} : vector<128x128xbf16>, vector<128x128xbf16>, vector<128x128xf32> -> vector<128x128xf32>
    %156 = arith.addf %150, %155 : vector<128x128xf32>
    %c2_143 = arith.constant 2 : index
    %c1_144 = arith.constant 1 : index
    %c0_145 = arith.constant 0 : index
    %157 = vector.load %arg10[%c2_143, %c1_144, %c0_145] : memref<10x24x128xbf16, #tpu.memory_space<vmem>>, vector<8x16x128xbf16>
    %158 = vector.shape_cast %157 : vector<8x16x128xbf16> to vector<128x128xbf16>
    %c2_146 = arith.constant 2 : index
    %c1_147 = arith.constant 1 : index
    %c0_148 = arith.constant 0 : index
    %c0_149 = arith.constant 0 : index
    %159 = vector.load %arg6[%c2_146, %c1_147, %c0_148, %c0_149] : memref<3x3x128x128xbf16, #tpu.memory_space<vmem>>, vector<1x1x128x128xbf16>
    %160 = vector.shape_cast %159 : vector<1x1x128x128xbf16> to vector<128x128xbf16>
    %cst_150 = arith.constant dense<0.000000e+00> : vector<128x128xf32>
    %161 = tpu.matmul %158, %160, %cst_150 {dimension_numbers = #tpu.dot_dimension_numbers<[1], [0], [0], [1], [0, 0, 1, 1], [], []>} : vector<128x128xbf16>, vector<128x128xbf16>, vector<128x128xf32> -> vector<128x128xf32>
    %162 = arith.addf %156, %161 : vector<128x128xf32>
    %c2_151 = arith.constant 2 : index
    %c2_152 = arith.constant 2 : index
    %c0_153 = arith.constant 0 : index
    %163 = vector.load %arg10[%c2_151, %c2_152, %c0_153] : memref<10x24x128xbf16, #tpu.memory_space<vmem>>, vector<8x16x128xbf16>
    %164 = vector.shape_cast %163 : vector<8x16x128xbf16> to vector<128x128xbf16>
    %c2_154 = arith.constant 2 : index
    %c2_155 = arith.constant 2 : index
    %c0_156 = arith.constant 0 : index
    %c0_157 = arith.constant 0 : index
    %165 = vector.load %arg6[%c2_154, %c2_155, %c0_156, %c0_157] : memref<3x3x128x128xbf16, #tpu.memory_space<vmem>>, vector<1x1x128x128xbf16>
    %166 = vector.shape_cast %165 : vector<1x1x128x128xbf16> to vector<128x128xbf16>
    %cst_158 = arith.constant dense<0.000000e+00> : vector<128x128xf32>
    %167 = tpu.matmul %164, %166, %cst_158 {dimension_numbers = #tpu.dot_dimension_numbers<[1], [0], [0], [1], [0, 0, 1, 1], [], []>} : vector<128x128xbf16>, vector<128x128xbf16>, vector<128x128xf32> -> vector<128x128xf32>
    %168 = arith.addf %162, %167 : vector<128x128xf32>
    %c0_159 = arith.constant 0 : index
    %c0_160 = arith.constant 0 : index
    %169 = vector.load %arg7[%c0_159, %c0_160] : memref<1x128xf32, #tpu.memory_space<vmem>>, vector<1x128xf32>
    %170 = vector.broadcast %169 : vector<1x128xf32> to vector<128x128xf32>
    %171 = arith.mulf %168, %170 : vector<128x128xf32>
    %c0_161 = arith.constant 0 : index
    %c0_162 = arith.constant 0 : index
    %172 = vector.load %arg8[%c0_161, %c0_162] : memref<1x128xf32, #tpu.memory_space<vmem>>, vector<1x128xf32>
    %173 = vector.broadcast %172 : vector<1x128xf32> to vector<128x128xf32>
    %174 = arith.addf %171, %173 : vector<128x128xf32>
    %c2_i32_163 = arith.constant 2 : i32
    %175 = arith.addi %1, %c2_i32_163 : i32
    %c0_164 = arith.constant 0 : index
    %176 = arith.index_cast %175 : i32 to index
    %c2_165 = arith.constant 2 : index
    %c0_166 = arith.constant 0 : index
    %177 = vector.load %arg2[%c0_164, %176, %c2_165, %c0_166] : memref<1x20x32x128xbf16, #tpu.memory_space<vmem>>, vector<1x8x16x128xbf16>
    %178 = vector.shape_cast %177 : vector<1x8x16x128xbf16> to vector<8x16x128xbf16>
    %179 = arith.extf %178 : vector<8x16x128xbf16> to vector<8x16x128xf32>
    %180 = vector.shape_cast %179 : vector<8x16x128xf32> to vector<128x128xf32>
    %181 = arith.addf %174, %180 : vector<128x128xf32>
    %cst_167 = arith.constant 0.000000e+00 : f32
    %182 = vector.broadcast %cst_167 : f32 to vector<128x128xf32>
    %183 = arith.maximumf %181, %182 : vector<128x128xf32>
    %184 = vector.shape_cast %183 : vector<128x128xf32> to vector<8x16x128xf32>
    %c0_168 = arith.constant 0 : index
    %c0_169 = arith.constant 0 : index
    %c0_170 = arith.constant 0 : index
    %c0_171 = arith.constant 0 : index
    %185 = vector.load %arg9[%c0_168, %c0_169, %c0_170, %c0_171] : memref<1x8x16x128xf32, #tpu.memory_space<vmem>>, vector<1x8x16x128xf32>
    %186 = vector.shape_cast %185 : vector<1x8x16x128xf32> to vector<8x16x128xf32>
    %187 = vector.shape_cast %184 : vector<8x16x128xf32> to vector<1x8x16x128xf32>
    tpu.vector_store %arg9[%c0_168, %c0_169, %c0_170, %c0_171], %187 {strides = array<i32>} : memref<1x8x16x128xf32, #tpu.memory_space<vmem>>, vector<1x8x16x128xf32>,
    return
  }
  func.func @transform_0(%arg0: i32, %arg1: i32) -> (i32, i32, i32, i32) {
    %c0_i32 = arith.constant 0 : i32
    %c0_i32_0 = arith.constant 0 : i32
    %c0_i32_1 = arith.constant 0 : i32
    %c0_i32_2 = arith.constant 0 : i32
    return %arg0, %c0_i32, %c0_i32_0, %c0_i32_1 : i32, i32, i32, i32
  }
  func.func @transform_1(%arg0: i32, %arg1: i32) -> (i32, i32, i32, i32) {
    %c0_i32 = arith.constant 0 : i32
    %c0_i32_0 = arith.constant 0 : i32
    %c0_i32_1 = arith.constant 0 : i32
    %c0_i32_2 = arith.constant 0 : i32
    %c0_i32_3 = arith.constant 0 : i32
    return %c0_i32, %c0_i32_0, %c0_i32_1, %c0_i32_2 : i32, i32, i32, i32
  }
  func.func @transform_2(%arg0: i32, %arg1: i32) -> (i32, i32) {
    %c0_i32 = arith.constant 0 : i32
    %c0_i32_0 = arith.constant 0 : i32
    %c0_i32_1 = arith.constant 0 : i32
    return %c0_i32, %c0_i32_0 : i32, i32
  }
  func.func @transform_3(%arg0: i32, %arg1: i32) -> (i32, i32) {
    %c0_i32 = arith.constant 0 : i32
    %c0_i32_0 = arith.constant 0 : i32
    %c0_i32_1 = arith.constant 0 : i32
    return %c0_i32, %c0_i32_0 : i32, i32
  }
  func.func @transform_4(%arg0: i32, %arg1: i32) -> (i32, i32, i32, i32) {
    %c0_i32 = arith.constant 0 : i32
    %c0_i32_0 = arith.constant 0 : i32
    %c0_i32_1 = arith.constant 0 : i32
    %c0_i32_2 = arith.constant 0 : i32
    %c0_i32_3 = arith.constant 0 : i32
    return %c0_i32, %c0_i32_0, %c0_i32_1, %c0_i32_2 : i32, i32, i32, i32
  }
  func.func @transform_5(%arg0: i32, %arg1: i32) -> (i32, i32) {
    %c0_i32 = arith.constant 0 : i32
    %c0_i32_0 = arith.constant 0 : i32
    %c0_i32_1 = arith.constant 0 : i32
    return %c0_i32, %c0_i32_0 : i32, i32
  }
  func.func @transform_6(%arg0: i32, %arg1: i32) -> (i32, i32) {
    %c0_i32 = arith.constant 0 : i32
    %c0_i32_0 = arith.constant 0 : i32
    %c0_i32_1 = arith.constant 0 : i32
    return %c0_i32, %c0_i32_0 : i32, i32
  }
  func.func @transform_7(%arg0: i32, %arg1: i32) -> (i32, i32, i32, i32) {
    %c0_i32 = arith.constant 0 : i32
    %c0_i32_0 = arith.constant 0 : i32
    %c0_i32_1 = arith.constant 0 : i32
    return %arg0, %arg1, %c0_i32, %c0_i32_0 : i32, i32, i32, i32
  }
}

</mosaic_0001>

<llo_original>
// kernel: tpu_custom_call.1
$region0: #{tpu_custom_call.1}
  #allocation0 [shape = 'u32[]', space=smem, size = 0x4, offset = 0x4, fixed_abs, tag = 'smem constant byte address 0x4 - core index']
  #allocation1 [shape = 'u32[72,128]{1,0:T(1,128)}', space=vmem, size = 0x9000, scoped, tag = 'internal scratch']
  #allocation2 [shape = 'bf16[10,24,128]{2,1,0:T(8,128)(2,1)}', space=vmem, size = 0xf000, scoped, tag = 'scratch operand']
  %s0 = inlined_call_operand.hbm [shape: bf16[2,20,32,128], index: 0, kind: input, shape index: {}]
  %s1 = inlined_call_operand.hbm [shape: bf16[3,3,128,128], index: 1, kind: input, shape index: {}]
  %s2 = inlined_call_operand.vmem [shape: f32[1,128], index: 2, kind: input, shape index: {}]
  %s3 = inlined_call_operand.vmem [shape: f32[1,128], index: 3, kind: input, shape index: {}]
  %s4 = inlined_call_operand.hbm [shape: bf16[3,3,128,128], index: 4, kind: input, shape index: {}]
  %s5 = inlined_call_operand.vmem [shape: f32[1,128], index: 5, kind: input, shape index: {}]
  %s6 = inlined_call_operand.vmem [shape: f32[1,128], index: 6, kind: input, shape index: {}]
  %s7 = inlined_call_operand.hbm [shape: f32[2,16,16,128], index: 7, kind: output, shape index: {}]
  %s8 = sld [smem:[#allocation0]]
  $region73: #{tpu_custom_call.1} parent=0
    _
  %s10 = ssub.s32 1, %s8
  %s11 = scalar_select 0, %s10, %s8
  $region1: #{tpu_custom_call.1} parent=0
    #allocation3 [shape = 'u8[327680]{0}', space=vmem, size = 0x50000, scoped, tag = 'input window, operand 0']
    #allocation4 [shape = 's32[2]{0}', space=sflag, size = 0x8, scoped, tag = 'scoped memory for tpu_custom_call.1']
    #allocation5 [shape = 's32[2]{0}', space=sflag, size = 0x8, scoped, tag = 'scoped memory for tpu_custom_call.1']
    #allocation6 [shape = 'u8[294912]{0}', space=vmem, size = 0x48000, scoped, tag = 'input window, operand 1, single buffered']
    #allocation7 [shape = 's32[1]{0}', space=sflag, size = 0x4, scoped, tag = 'scoped memory for tpu_custom_call.1']
    #allocation8 [shape = 'u8[294912]{0}', space=vmem, size = 0x48000, scoped, tag = 'input window, operand 4, single buffered']
    #allocation9 [shape = 'u8[131072]{0}', space=vmem, size = 0x20000, scoped, tag = 'output window, operand 0']
    %12 = vsyncpa [#allocation4], 0
    %s13 = scalar_lea.sflag [#allocation4], 1
    %14 = vsyncpa %s13, 0
    %15 = vsyncpa [#allocation7], 0
    %16 = vsyncpa [#allocation5], 0
    %s17 = scalar_lea.sflag [#allocation5], 1
    %18 = vsyncpa %s17, 0
    loop: start=0, step=1, limit=6
    $region2: #{tpu_custom_call.1} parent=1 // loop_pre_header
      _
    $region3: #{tpu_custom_call.1} parent=1 // loop_header
      %s20 = sphi 0, %s24
      %p21 = scmp.ge.s32.totalorder %s20, 6
      %s27 = sphi 0, %s39
      %s28 = sphi 0, %s35
      %s29 = sphi 0, %s27
      %s30 = sphi 0, %s28
      %s31 = sphi 0, %s29
      %s32 = sphi 0, %s30
      %s42 = sphi 0, %s44
      %s45 = sphi 0, %s42
      %s46 = sphi 0, %s45
      %s62 = sphi 0, %s46
      %s66 = sphi 0, %s66
      %s68 = sphi 0, %s66
      %s69 = sphi 0, %s68
      %s83 = sphi 0, %s69
      %s87 = sphi 0, %s87
      %s89 = sphi 0, %s87
      %s90 = sphi 0, %s89
      %s104 = sphi 0, %s90
      %s108 = sphi 0, %s108
      %s110 = sphi 0, %s108
      %s111 = sphi 0, %s110
      %s125 = sphi 0, %s111
      %s129 = sphi 0, %s129
      %s131 = sphi 0, %s129
      %s132 = sphi 0, %s131
      %s146 = sphi 0, %s132
      %s150 = sphi 0, %s150
      %s152 = sphi 0, %s150
      %s153 = sphi 0, %s152
      %s167 = sphi 0, %s153
      %s171 = sphi 0, %s171
      %s173 = sphi 0, %s171
      %s174 = sphi 0, %s173
      %s188 = sphi 0, %s174
      %s196 = sphi 0, %s198
      %s199 = sphi 0, %s196
      %s200 = sphi 0, %s199
      %s216 = sphi 0, %s200
    $region4: #{tpu_custom_call.1} parent=1 // loop_header_branch
      %23 = sbr.rel (%p21) target = $region8
    $region5: #{tpu_custom_call.1} parent=1 // loop_body
      %s25 = ssub.s32 %s20, 1
      %s26 = ssub.s32 %s20, 2
      %s33 = sadd.s32 1, %s28
      %p34 = scmp.ge.s32.totalorder %s33, 2
      %s35 = scalar_select %p34, 0, %s33
      %s36 = sadd.s32 1, %s27
      %s37 = scalar_select %p34, %s36, %s27
      %p38 = scmp.ge.s32.totalorder %s37, 2
      %s39 = scalar_select %p38, 0, %s37
      %s40 = ssub.s32 %s27, %s39
      %p41 = scmp.eq.s32.totalorder %s40, 0
      %s43 = sadd.s32 %s42, 1
      %s44 = scalar_select %p41, %s42, %s43
      %p47 = pneg %p41
      %p48 = scmp.eq.s32.totalorder %s20, 3
      %p49 = por %p47, %p48
      %p50 = scmp.ne.s32.totalorder %s42, %s45
      %p51 = scmp.eq.s32.totalorder %s20, 0
      %p52 = por %p50, %p51
      %p53 = scmp.ne.s32.totalorder %s42, %s45
      %p54 = scmp.eq.s32.totalorder %s25, 3
      %p55 = por %p53, %p54
      %p56 = scmp.ne.s32.totalorder %s45, %s46
      %p57 = scmp.eq.s32.totalorder %s25, 0
      %p58 = por %p56, %p57
      %p59 = scmp.ne.s32.totalorder %s45, %s46
      %p60 = scmp.eq.s32.totalorder %s26, 3
      %p61 = por %p59, %p60
      %p63 = scmp.ne.s32.totalorder %s46, %s62
      %p64 = scmp.eq.s32.totalorder %s26, 0
      %p65 = por %p63, %p64
      %s67 = sadd.s32 %s66, 1
      %p70 = scmp.eq.s32.totalorder %s20, 3
      %p71 = scmp.ne.s32.totalorder %s66, %s68
      %p72 = scmp.eq.s32.totalorder %s20, 0
      %p73 = por %p71, %p72
      %p74 = scmp.ne.s32.totalorder %s66, %s68
      %p75 = scmp.eq.s32.totalorder %s25, 3
      %p76 = por %p74, %p75
      %p77 = scmp.ne.s32.totalorder %s68, %s69
      %p78 = scmp.eq.s32.totalorder %s25, 0
      %p79 = por %p77, %p78
      %p80 = scmp.ne.s32.totalorder %s68, %s69
      %p81 = scmp.eq.s32.totalorder %s26, 3
      %p82 = por %p80, %p81
      %p84 = scmp.ne.s32.totalorder %s69, %s83
      %p85 = scmp.eq.s32.totalorder %s26, 0
      %p86 = por %p84, %p85
      %s88 = sadd.s32 %s87, 1
      %p91 = scmp.eq.s32.totalorder %s20, 3
      %p92 = scmp.ne.s32.totalorder %s87, %s89
      %p93 = scmp.eq.s32.totalorder %s20, 0
      %p94 = por %p92, %p93
      %p95 = scmp.ne.s32.totalorder %s87, %s89
      %p96 = scmp.eq.s32.totalorder %s25, 3
      %p97 = por %p95, %p96
      %p98 = scmp.ne.s32.totalorder %s89, %s90
      %p99 = scmp.eq.s32.totalorder %s25, 0
      %p100 = por %p98, %p99
      %p101 = scmp.ne.s32.totalorder %s89, %s90
      %p102 = scmp.eq.s32.totalorder %s26, 3
      %p103 = por %p101, %p102
      %p105 = scmp.ne.s32.totalorder %s90, %s104
      %p106 = scmp.eq.s32.totalorder %s26, 0
      %p107 = por %p105, %p106
      %s109 = sadd.s32 %s108, 1
      %p112 = scmp.eq.s32.totalorder %s20, 3
      %p113 = scmp.ne.s32.totalorder %s108, %s110
      %p114 = scmp.eq.s32.totalorder %s20, 0
      %p115 = por %p113, %p114
      %p116 = scmp.ne.s32.totalorder %s108, %s110
      %p117 = scmp.eq.s32.totalorder %s25, 3
      %p118 = por %p116, %p117
      %p119 = scmp.ne.s32.totalorder %s110, %s111
      %p120 = scmp.eq.s32.totalorder %s25, 0
      %p121 = por %p119, %p120
      %p122 = scmp.ne.s32.totalorder %s110, %s111
      %p123 = scmp.eq.s32.totalorder %s26, 3
      %p124 = por %p122, %p123
      %p126 = scmp.ne.s32.totalorder %s111, %s125
      %p127 = scmp.eq.s32.totalorder %s26, 0
      %p128 = por %p126, %p127
      %s130 = sadd.s32 %s129, 1
      %p133 = scmp.eq.s32.totalorder %s20, 3
      %p134 = scmp.ne.s32.totalorder %s129, %s131
      %p135 = scmp.eq.s32.totalorder %s20, 0
      %p136 = por %p134, %p135
      %p137 = scmp.ne.s32.totalorder %s129, %s131
      %p138 = scmp.eq.s32.totalorder %s25, 3
      %p139 = por %p137, %p138
      %p140 = scmp.ne.s32.totalorder %s131, %s132
      %p141 = scmp.eq.s32.totalorder %s25, 0
      %p142 = por %p140, %p141
      %p143 = scmp.ne.s32.totalorder %s131, %s132
      %p144 = scmp.eq.s32.totalorder %s26, 3
      %p145 = por %p143, %p144
      %p147 = scmp.ne.s32.totalorder %s132, %s146
      %p148 = scmp.eq.s32.totalorder %s26, 0
      %p149 = por %p147, %p148
      %s151 = sadd.s32 %s150, 1
      %p154 = scmp.eq.s32.totalorder %s20, 3
      %p155 = scmp.ne.s32.totalorder %s150, %s152
      %p156 = scmp.eq.s32.totalorder %s20, 0
      %p157 = por %p155, %p156
      %p158 = scmp.ne.s32.totalorder %s150, %s152
      %p159 = scmp.eq.s32.totalorder %s25, 3
      %p160 = por %p158, %p159
      %p161 = scmp.ne.s32.totalorder %s152, %s153
      %p162 = scmp.eq.s32.totalorder %s25, 0
      %p163 = por %p161, %p162
      %p164 = scmp.ne.s32.totalorder %s152, %s153
      %p165 = scmp.eq.s32.totalorder %s26, 3
      %p166 = por %p164, %p165
      %p168 = scmp.ne.s32.totalorder %s153, %s167
      %p169 = scmp.eq.s32.totalorder %s26, 0
      %p170 = por %p168, %p169
      %s172 = sadd.s32 %s171, 1
      %p175 = scmp.eq.s32.totalorder %s20, 3
      %p176 = scmp.ne.s32.totalorder %s171, %s173
      %p177 = scmp.eq.s32.totalorder %s20, 0
      %p178 = por %p176, %p177
      %p179 = scmp.ne.s32.totalorder %s171, %s173
      %p180 = scmp.eq.s32.totalorder %s25, 3
      %p181 = por %p179, %p180
      %p182 = scmp.ne.s32.totalorder %s173, %s174
      %p183 = scmp.eq.s32.totalorder %s25, 0
      %p184 = por %p182, %p183
      %p185 = scmp.ne.s32.totalorder %s173, %s174
      %p186 = scmp.eq.s32.totalorder %s26, 3
      %p187 = por %p185, %p186
      %p189 = scmp.ne.s32.totalorder %s174, %s188
      %p190 = scmp.eq.s32.totalorder %s26, 0
      %p191 = por %p189, %p190
      %s192 = ssub.s32 %s27, %s39
      %s193 = ssub.s32 %s28, %s35
      %s194 = sor.u32 %s192, %s193
      %p195 = scmp.eq.s32.totalorder %s194, 0
      %s197 = sadd.s32 %s196, 1
      %s198 = scalar_select %p195, %s196, %s197
      %p201 = pneg %p195
      %p202 = scmp.eq.s32.totalorder %s20, 3
      %p203 = por %p201, %p202
      %p204 = scmp.ne.s32.totalorder %s196, %s199
      %p205 = scmp.eq.s32.totalorder %s20, 0
      %p206 = por %p204, %p205
      %p207 = scmp.ne.s32.totalorder %s196, %s199
      %p208 = scmp.eq.s32.totalorder %s25, 3
      %p209 = por %p207, %p208
      %p210 = scmp.ne.s32.totalorder %s199, %s200
      %p211 = scmp.eq.s32.totalorder %s25, 0
      %p212 = por %p210, %p211
      %p213 = scmp.ne.s32.totalorder %s199, %s200
      %p214 = scmp.eq.s32.totalorder %s26, 3
      %p215 = por %p213, %p214
      %p217 = scmp.ne.s32.totalorder %s200, %s216
      %p218 = scmp.eq.s32.totalorder %s26, 0
      %p219 = por %p217, %p218
      %p220 = scmp.le.s32.totalorder 1, %s20
      %p221 = scmp.lt.s32.totalorder %s20, 5
      %p222 = pnand %p220, %p221
      %p223 = pneg %p222
      // Predicated region
      $region9: #{tpu_custom_call.1} parent=5 // pred_check
        _
      $region10: #{tpu_custom_call.1} parent=5 // pred_check_branch
        %225 = sbr.rel (%p222) target = $region12
      $region11: #{tpu_custom_call.1} parent=5 // pred_region
        %s226 = ssub.s32 %s20, 1
        // Predicated region
        $region13: #{tpu_custom_call.1} parent=11 // pred_check
          %p227 = pneg %p79
        $region14: #{tpu_custom_call.1} parent=11 // pred_check_branch
          %229 = sbr.rel (%p227) target = $region16
        $region15: #{tpu_custom_call.1} parent=11 // pred_region
          %231 = vsyncadd [#allocation7], 0
          %s232 = sshll.u32 %s1, 4
          %s233 = int_to_ptr.hbm [resolvable:$true] %s232
          %s234 = sshll.u32 [#allocation6], 4
          %s235 = int_to_ptr.vmem [resolvable:$true] %s234
          %240 = dma.hbm_to_vmem [thread:$0]  %s233, 9216, %s235, [#allocation7], 64, 64, 4
        $region16: #{tpu_custom_call.1} parent=11 // pred_fallthru
          _
        // Predicated region
        $region17: #{tpu_custom_call.1} parent=11 // pred_check
          %p241 = pneg %p100
        $region18: #{tpu_custom_call.1} parent=11 // pred_check_branch
          %243 = sbr.rel (%p241) target = $region20
        $region19: #{tpu_custom_call.1} parent=11 // pred_region
          _
        $region20: #{tpu_custom_call.1} parent=11 // pred_fallthru
          _
        // Predicated region
        $region21: #{tpu_custom_call.1} parent=11 // pred_check
          %p244 = pneg %p121
        $region22: #{tpu_custom_call.1} parent=11 // pred_check_branch
          %246 = sbr.rel (%p244) target = $region24
        $region23: #{tpu_custom_call.1} parent=11 // pred_region
          _
        $region24: #{tpu_custom_call.1} parent=11 // pred_fallthru
          _
        // Predicated region
        $region25: #{tpu_custom_call.1} parent=11 // pred_check
          %p247 = pneg %p142
        $region26: #{tpu_custom_call.1} parent=11 // pred_check_branch
          %249 = sbr.rel (%p247) target = $region28
        $region27: #{tpu_custom_call.1} parent=11 // pred_region
          %251 = vsyncadd [#allocation7], 0
          %s252 = sshll.u32 %s4, 4
          %s253 = int_to_ptr.hbm [resolvable:$true] %s252
          %s254 = sshll.u32 [#allocation8], 4
          %s255 = int_to_ptr.vmem [resolvable:$true] %s254
          %260 = dma.hbm_to_vmem [thread:$0]  %s253, 9216, %s255, [#allocation7], 64, 64, 4
        $region28: #{tpu_custom_call.1} parent=11 // pred_fallthru
          _
        // Predicated region
        $region29: #{tpu_custom_call.1} parent=11 // pred_check
          %p261 = pneg %p163
        $region30: #{tpu_custom_call.1} parent=11 // pred_check_branch
          %263 = sbr.rel (%p261) target = $region32
        $region31: #{tpu_custom_call.1} parent=11 // pred_region
          _
        $region32: #{tpu_custom_call.1} parent=11 // pred_fallthru
          _
        // Predicated region
        $region33: #{tpu_custom_call.1} parent=11 // pred_check
          %p264 = pneg %p184
        $region34: #{tpu_custom_call.1} parent=11 // pred_check_branch
          %266 = sbr.rel (%p264) target = $region36
        $region35: #{tpu_custom_call.1} parent=11 // pred_region
          _
        $region36: #{tpu_custom_call.1} parent=11 // pred_fallthru
          _
      $region12: #{tpu_custom_call.1} parent=5 // pred_fallthru
        _
      %p267 = scmp.lt.s32.totalorder %s20, 4
      // Predicated region
      $region37: #{tpu_custom_call.1} parent=5 // pred_check
        %p268 = pneg %p267
      $region38: #{tpu_custom_call.1} parent=5 // pred_check_branch
        %270 = sbr.rel (%p268) target = $region40
      $region39: #{tpu_custom_call.1} parent=5 // pred_region
        // Predicated region
        $region41: #{tpu_custom_call.1} parent=39 // pred_check
          %p271 = pneg %p52
        $region42: #{tpu_custom_call.1} parent=39 // pred_check_branch
          %273 = sbr.rel (%p271) target = $region44
        $region43: #{tpu_custom_call.1} parent=39 // pred_region
          %s274 = sand.u32 %s42, 1
          %s275 = scalar_lea.sflag [#allocation4], %s274
          %s276 = sand.u32 %s42, 1
          %s277 = smul.addr %s276, 320
          %s278 = scalar_lea.vmem [#allocation3], %s277
          %280 = vsyncadd %s275, 0
          %s281 = smul.addr %s27, 80
          %s282 = smul.addr %s281, 4
          %s283 = scalar_lea.hbm %s0, %s282
          %s284 = sshll.u32 %s283, 4
          %s285 = int_to_ptr.hbm [resolvable:$true] %s284
          %s286 = sshll.u32 %s278, 4
          %s287 = int_to_ptr.vmem [resolvable:$true] %s286
          %292 = dma.hbm_to_vmem [thread:$0]  %s285, 5120, %s287, %s275, 64, 64, 4
        $region44: #{tpu_custom_call.1} parent=39 // pred_fallthru
          _
      $region40: #{tpu_custom_call.1} parent=5 // pred_fallthru
        _
      %p293 = scmp.le.s32.totalorder 1, %s20
      %p294 = scmp.lt.s32.totalorder %s20, 5
      %p295 = pnand %p293, %p294
      %p296 = pneg %p295
      // Predicated region
      $region45: #{tpu_custom_call.1} parent=5 // pred_check
        _
      $region46: #{tpu_custom_call.1} parent=5 // pred_check_branch
        %298 = sbr.rel (%p295) target = $region48
      $region47: #{tpu_custom_call.1} parent=5 // pred_region
        %s299 = ssub.s32 %s20, 1
        %s300 = sand.u32 %s45, 1
        %s301 = scalar_lea.sflag [#allocation4], %s300
        %s302 = sand.u32 %s45, 1
        %s303 = smul.addr %s302, 320
        %s304 = scalar_lea.vmem [#allocation3], %s303
        // Predicated region
        $region49: #{tpu_custom_call.1} parent=47 // pred_check
          %p305 = pneg %p58
        $region50: #{tpu_custom_call.1} parent=47 // pred_check_branch
          %307 = sbr.rel (%p305) target = $region52
        $region51: #{tpu_custom_call.1} parent=47 // pred_region
          %309 = dma.done %s301, 5120
        $region52: #{tpu_custom_call.1} parent=47 // pred_fallthru
          _
        // Predicated region
        $region53: #{tpu_custom_call.1} parent=47 // pred_check
          %p310 = pneg %p79
        $region54: #{tpu_custom_call.1} parent=47 // pred_check_branch
          %312 = sbr.rel (%p310) target = $region56
        $region55: #{tpu_custom_call.1} parent=47 // pred_region
          %314 = dma.done [#allocation7], 9216
        $region56: #{tpu_custom_call.1} parent=47 // pred_fallthru
          _
        // Predicated region
        $region57: #{tpu_custom_call.1} parent=47 // pred_check
          %p315 = pneg %p142
        $region58: #{tpu_custom_call.1} parent=47 // pred_check_branch
          %317 = sbr.rel (%p315) target = $region60
        $region59: #{tpu_custom_call.1} parent=47 // pred_region
          %319 = dma.done [#allocation7], 9216
        $region60: #{tpu_custom_call.1} parent=47 // pred_fallthru
          _
        %s320 = sand.u32 %s45, 1
        %s321 = scalar_lea.sflag [#allocation4], %s320
        %s322 = sand.u32 %s45, 1
        %s323 = smul.addr %s322, 320
        %s324 = scalar_lea.vmem [#allocation3], %s323
        %p325 = pneg %p58
        %p326 = pneg %p55
        %p327 = pneg %p79
        %p328 = pneg %p76
        %p329 = pneg %p100
        %p330 = pneg %p97
        %p331 = pneg %p121
        %p332 = pneg %p118
        %p333 = pneg %p142
        %p334 = pneg %p139
        %p335 = pneg %p163
        %p336 = pneg %p160
        %p337 = pneg %p184
        %p338 = pneg %p181
        %p339 = pneg %p212
        %p340 = pneg %p209
        %s341 = sand.u32 %s199, 1
        %s342 = scalar_lea.sflag [#allocation5], %s341
        %s343 = sand.u32 %s199, 1
        %s344 = smul.addr %s343, 128
        %s345 = scalar_lea.vmem [#allocation9], %s344
        %s346 = smul.u32 8, %s30
        %s347 = smul.u32 %s30, 8
        %s348 = smul.u32 %s347, 4
        %s349 = smul.addr %s348, 4
        %s350 = scalar_lea.vmem %s304, %s349 [#allocation3]
        %v351 = vld [vmem:[%s350] sm:$0xf]
        %v352 = vld [vmem:[%s350 + $0x4] sm:$0xf]
        %v353 = vld [vmem:[%s350 + $0x8] sm:$0xf]
        %v354 = vld [vmem:[%s350 + $0x10] sm:$0xf]
        %v355 = vld [vmem:[%s350 + $0x14] sm:$0xf]
        %v356 = vld [vmem:[%s350 + $0x18] sm:$0xf]
        %v357 = vld [vmem:[%s350 + $0x20] sm:$0xf]
        %v358 = vld [vmem:[%s350 + $0x24] sm:$0xf]
        %v359 = vld [vmem:[%s350 + $0x28] sm:$0xf]
        %v360 = vld [vmem:[%s350 + $0x30] sm:$0xf]
        %v361 = vld [vmem:[%s350 + $0x34] sm:$0xf]
        %v362 = vld [vmem:[%s350 + $0x38] sm:$0xf]
        %v363 = vld [vmem:[%s350 + $0x40] sm:$0xf]
        %v364 = vld [vmem:[%s350 + $0x44] sm:$0xf]
        %v365 = vld [vmem:[%s350 + $0x48] sm:$0xf]
        %v366 = vld [vmem:[%s350 + $0x50] sm:$0xf]
        %v367 = vld [vmem:[%s350 + $0x54] sm:$0xf]
        %v368 = vld [vmem:[%s350 + $0x58] sm:$0xf]
        %v369 = vld [vmem:[%s350 + $0x60] sm:$0xf]
        %v370 = vld [vmem:[%s350 + $0x64] sm:$0xf]
        %v371 = vld [vmem:[%s350 + $0x68] sm:$0xf]
        %v372 = vld [vmem:[%s350 + $0x70] sm:$0xf]
        %v373 = vld [vmem:[%s350 + $0x74] sm:$0xf]
        %v374 = vld [vmem:[%s350 + $0x78] sm:$0xf]
        %v375 = vld [vmem:[%s350 + $0x80] sm:$0xf]
        %v376 = vld [vmem:[%s350 + $0x84] sm:$0xf]
        %v377 = vld [vmem:[%s350 + $0x88] sm:$0xf]
        %v378 = vld [vmem:[%s350 + $0x90] sm:$0xf]
        %v379 = vld [vmem:[%s350 + $0x94] sm:$0xf]
        %v380 = vld [vmem:[%s350 + $0x98] sm:$0xf]
        %v381 = vld [vmem:[#allocation6] sm:$0xf]
        %v382 = vld [vmem:[#allocation6 + $0x4] sm:$0xf]
        %v383 = vld [vmem:[#allocation6 + $0x8] sm:$0xf]
        %v384 = vld [vmem:[#allocation6 + $0xc] sm:$0xf]
        %v385 = vld [vmem:[#allocation6 + $0x10] sm:$0xf]
        %v386 = vld [vmem:[#allocation6 + $0x14] sm:$0xf]
        %v387 = vld [vmem:[#allocation6 + $0x18] sm:$0xf]
        %v388 = vld [vmem:[#allocation6 + $0x1c] sm:$0xf]
        %v389 = vld [vmem:[#allocation6 + $0x20] sm:$0xf]
        %v390 = vld [vmem:[#allocation6 + $0x24] sm:$0xf]
        %v391 = vld [vmem:[#allocation6 + $0x28] sm:$0xf]
        %v392 = vld [vmem:[#allocation6 + $0x2c] sm:$0xf]
        %v393 = vld [vmem:[#allocation6 + $0x30] sm:$0xf]
        %v394 = vld [vmem:[#allocation6 + $0x34] sm:$0xf]
        %v395 = vld [vmem:[#allocation6 + $0x38] sm:$0xf]
        %v396 = vld [vmem:[#allocation6 + $0x3c] sm:$0xf]
        %v397 = vld [vmem:[%s350 + $0xc] sm:$0x1]
        %v398 = vld [vmem:[%s350 + $0x1c] sm:$0x1]
        %v399 = vld [vmem:[%s350 + $0x2c] sm:$0x1]
        %v400 = vld [vmem:[%s350 + $0x3c] sm:$0x1]
        %v401 = vld [vmem:[%s350 + $0x4c] sm:$0x1]
        %v402 = vld [vmem:[%s350 + $0x5c] sm:$0x1]
        %v403 = vld [vmem:[%s350 + $0x6c] sm:$0x1]
        %v404 = vld [vmem:[%s350 + $0x7c] sm:$0x1]
        %v405 = vld [vmem:[%s350 + $0x8c] sm:$0x1]
        %v406 = vld [vmem:[%s350 + $0x9c] sm:$0x1]
        %vm407 = vsmask.f32 3328
        %vm408 = vsmask.f32 7440
        %vm409 = vmor %vm407, %vm408
        %v411 = vshrl.u32 %v351, 16
        %v413 = vrot.slane %v411, 4
        %v414 = vshll.u32 %v351, 16
        %v416 = vrot.slane %v414, 5
        %v417 = vor.u32 %v413, %v416
        %v418 = vrot.slane %v417, 4
        %v420 = vshll.u32 %v352, 16
        %v422 = vrot.slane %v420, 5
        %v423 = vsel %vm409, %v418, %v422
        %v424 = vshrl.u32 %v352, 16
        %v426 = vrot.slane %v424, 4
        %v427 = vor.u32 %v426, %v422
        %v428 = vrot.slane %v427, 4
        %v430 = vshll.u32 %v353, 16
        %v432 = vrot.slane %v430, 5
        %v433 = vsel %vm409, %v428, %v432
        %v434 = vshrl.u32 %v353, 16
        %v436 = vrot.slane %v434, 4
        %v437 = vor.u32 %v436, %v432
        %v438 = vrot.slane %v437, 4
        %v440 = vshll.u32 %v397, 16
        %v442 = vrot.slane %v440, 5
        %v443 = vsel %vm409, %v438, %v442
        %v445 = vshrl.u32 %v354, 16
        %v447 = vrot.slane %v445, 4
        %v448 = vshll.u32 %v354, 16
        %v450 = vrot.slane %v448, 5
        %v451 = vor.u32 %v447, %v450
        %v452 = vrot.slane %v451, 4
        %v454 = vshll.u32 %v355, 16
        %v456 = vrot.slane %v454, 5
        %v457 = vsel %vm409, %v452, %v456
        %v458 = vshrl.u32 %v355, 16
        %v460 = vrot.slane %v458, 4
        %v461 = vor.u32 %v460, %v456
        %v462 = vrot.slane %v461, 4
        %v464 = vshll.u32 %v356, 16
        %v466 = vrot.slane %v464, 5
        %v467 = vsel %vm409, %v462, %v466
        %v468 = vshrl.u32 %v356, 16
        %v470 = vrot.slane %v468, 4
        %v471 = vor.u32 %v470, %v466
        %v472 = vrot.slane %v471, 4
        %v474 = vshll.u32 %v398, 16
        %v476 = vrot.slane %v474, 5
        %v477 = vsel %vm409, %v472, %v476
        %v479 = vshrl.u32 %v357, 16
        %v481 = vrot.slane %v479, 4
        %v482 = vshll.u32 %v357, 16
        %v484 = vrot.slane %v482, 5
        %v485 = vor.u32 %v481, %v484
        %v486 = vrot.slane %v485, 4
        %v488 = vshll.u32 %v358, 16
        %v490 = vrot.slane %v488, 5
        %v491 = vsel %vm409, %v486, %v490
        %v492 = vshrl.u32 %v358, 16
        %v494 = vrot.slane %v492, 4
        %v495 = vor.u32 %v494, %v490
        %v496 = vrot.slane %v495, 4
        %v498 = vshll.u32 %v359, 16
        %v500 = vrot.slane %v498, 5
        %v501 = vsel %vm409, %v496, %v500
        %v502 = vshrl.u32 %v359, 16
        %v504 = vrot.slane %v502, 4
        %v505 = vor.u32 %v504, %v500
        %v506 = vrot.slane %v505, 4
        %v508 = vshll.u32 %v399, 16
        %v510 = vrot.slane %v508, 5
        %v511 = vsel %vm409, %v506, %v510
        %v513 = vshrl.u32 %v360, 16
        %v515 = vrot.slane %v513, 4
        %v516 = vshll.u32 %v360, 16
        %v518 = vrot.slane %v516, 5
        %v519 = vor.u32 %v515, %v518
        %v520 = vrot.slane %v519, 4
        %v522 = vshll.u32 %v361, 16
        %v524 = vrot.slane %v522, 5
        %v525 = vsel %vm409, %v520, %v524
        %v526 = vshrl.u32 %v361, 16
        %v528 = vrot.slane %v526, 4
        %v529 = vor.u32 %v528, %v524
        %v530 = vrot.slane %v529, 4
        %v532 = vshll.u32 %v362, 16
        %v534 = vrot.slane %v532, 5
        %v535 = vsel %vm409, %v530, %v534
        %v536 = vshrl.u32 %v362, 16
        %v538 = vrot.slane %v536, 4
        %v539 = vor.u32 %v538, %v534
        %v540 = vrot.slane %v539, 4
        %v542 = vshll.u32 %v400, 16
        %v544 = vrot.slane %v542, 5
        %v545 = vsel %vm409, %v540, %v544
        %v547 = vshrl.u32 %v363, 16
        %v549 = vrot.slane %v547, 4
        %v550 = vshll.u32 %v363, 16
        %v552 = vrot.slane %v550, 5
        %v553 = vor.u32 %v549, %v552
        %v554 = vrot.slane %v553, 4
        %v556 = vshll.u32 %v364, 16
        %v558 = vrot.slane %v556, 5
        %v559 = vsel %vm409, %v554, %v558
        %v560 = vshrl.u32 %v364, 16
        %v562 = vrot.slane %v560, 4
        %v563 = vor.u32 %v562, %v558
        %v564 = vrot.slane %v563, 4
        %v566 = vshll.u32 %v365, 16
        %v568 = vrot.slane %v566, 5
        %v569 = vsel %vm409, %v564, %v568
        %v570 = vshrl.u32 %v365, 16
        %v572 = vrot.slane %v570, 4
        %v573 = vor.u32 %v572, %v568
        %v574 = vrot.slane %v573, 4
        %v576 = vshll.u32 %v401, 16
        %v578 = vrot.slane %v576, 5
        %v579 = vsel %vm409, %v574, %v578
        %v581 = vshrl.u32 %v366, 16
        %v583 = vrot.slane %v581, 4
        %v584 = vshll.u32 %v366, 16
        %v586 = vrot.slane %v584, 5
        %v587 = vor.u32 %v583, %v586
        %v588 = vrot.slane %v587, 4
        %v590 = vshll.u32 %v367, 16
        %v592 = vrot.slane %v590, 5
        %v593 = vsel %vm409, %v588, %v592
        %v594 = vshrl.u32 %v367, 16
        %v596 = vrot.slane %v594, 4
        %v597 = vor.u32 %v596, %v592
        %v598 = vrot.slane %v597, 4
        %v600 = vshll.u32 %v368, 16
        %v602 = vrot.slane %v600, 5
        %v603 = vsel %vm409, %v598, %v602
        %v604 = vshrl.u32 %v368, 16
        %v606 = vrot.slane %v604, 4
        %v607 = vor.u32 %v606, %v602
        %v608 = vrot.slane %v607, 4
        %v610 = vshll.u32 %v402, 16
        %v612 = vrot.slane %v610, 5
        %v613 = vsel %vm409, %v608, %v612
        %v615 = vshrl.u32 %v369, 16
        %v617 = vrot.slane %v615, 4
        %v618 = vshll.u32 %v369, 16
        %v620 = vrot.slane %v618, 5
        %v621 = vor.u32 %v617, %v620
        %v622 = vrot.slane %v621, 4
        %v624 = vshll.u32 %v370, 16
        %v626 = vrot.slane %v624, 5
        %v627 = vsel %vm409, %v622, %v626
        %v628 = vshrl.u32 %v370, 16
        %v630 = vrot.slane %v628, 4
        %v631 = vor.u32 %v630, %v626
        %v632 = vrot.slane %v631, 4
        %v634 = vshll.u32 %v371, 16
        %v636 = vrot.slane %v634, 5
        %v637 = vsel %vm409, %v632, %v636
        %v638 = vshrl.u32 %v371, 16
        %v640 = vrot.slane %v638, 4
        %v641 = vor.u32 %v640, %v636
        %v642 = vrot.slane %v641, 4
        %v644 = vshll.u32 %v403, 16
        %v646 = vrot.slane %v644, 5
        %v647 = vsel %vm409, %v642, %v646
        %v649 = vshrl.u32 %v372, 16
        %v651 = vrot.slane %v649, 4
        %v652 = vshll.u32 %v372, 16
        %v654 = vrot.slane %v652, 5
        %v655 = vor.u32 %v651, %v654
        %v656 = vrot.slane %v655, 4
        %v658 = vshll.u32 %v373, 16
        %v660 = vrot.slane %v658, 5
        %v661 = vsel %vm409, %v656, %v660
        %v662 = vshrl.u32 %v373, 16
        %v664 = vrot.slane %v662, 4
        %v665 = vor.u32 %v664, %v660
        %v666 = vrot.slane %v665, 4
        %v668 = vshll.u32 %v374, 16
        %v670 = vrot.slane %v668, 5
        %v671 = vsel %vm409, %v666, %v670
        %v672 = vshrl.u32 %v374, 16
        %v674 = vrot.slane %v672, 4
        %v675 = vor.u32 %v674, %v670
        %v676 = vrot.slane %v675, 4
        %v678 = vshll.u32 %v404, 16
        %v680 = vrot.slane %v678, 5
        %v681 = vsel %vm409, %v676, %v680
        %v683 = vshrl.u32 %v375, 16
        %v685 = vrot.slane %v683, 4
        %v686 = vshll.u32 %v375, 16
        %v688 = vrot.slane %v686, 5
        %v689 = vor.u32 %v685, %v688
        %v690 = vrot.slane %v689, 4
        %v692 = vshll.u32 %v376, 16
        %v694 = vrot.slane %v692, 5
        %v695 = vsel %vm409, %v690, %v694
        %v696 = vshrl.u32 %v376, 16
        %v698 = vrot.slane %v696, 4
        %v699 = vor.u32 %v698, %v694
        %v700 = vrot.slane %v699, 4
        %v702 = vshll.u32 %v377, 16
        %v704 = vrot.slane %v702, 5
        %v705 = vsel %vm409, %v700, %v704
        %v706 = vshrl.u32 %v377, 16
        %v708 = vrot.slane %v706, 4
        %v709 = vor.u32 %v708, %v704
        %v710 = vrot.slane %v709, 4
        %v712 = vshll.u32 %v405, 16
        %v714 = vrot.slane %v712, 5
        %v715 = vsel %vm409, %v710, %v714
        %v717 = vshrl.u32 %v378, 16
        %v719 = vrot.slane %v717, 4
        %v720 = vshll.u32 %v378, 16
        %v722 = vrot.slane %v720, 5
        %v723 = vor.u32 %v719, %v722
        %v724 = vrot.slane %v723, 4
        %v726 = vshll.u32 %v379, 16
        %v728 = vrot.slane %v726, 5
        %v729 = vsel %vm409, %v724, %v728
        %v730 = vshrl.u32 %v379, 16
        %v732 = vrot.slane %v730, 4
        %v733 = vor.u32 %v732, %v728
        %v734 = vrot.slane %v733, 4
        %v736 = vshll.u32 %v380, 16
        %v738 = vrot.slane %v736, 5
        %v739 = vsel %vm409, %v734, %v738
        %v740 = vshrl.u32 %v380, 16
        %v742 = vrot.slane %v740, 4
        %v743 = vor.u32 %v742, %v738
        %v744 = vrot.slane %v743, 4
        %v746 = vshll.u32 %v406, 16
        %v748 = vrot.slane %v746, 5
        %v749 = vsel %vm409, %v744, %v748
        %s750 = scalar_lea.vmem [#allocation6], 64
        %v751 = vld [vmem:[%s750] sm:$0xf]
        %v752 = vld [vmem:[%s750 + $0x4] sm:$0xf]
        %v753 = vld [vmem:[%s750 + $0x8] sm:$0xf]
        %v754 = vld [vmem:[%s750 + $0xc] sm:$0xf]
        %v755 = vld [vmem:[%s750 + $0x10] sm:$0xf]
        %v756 = vld [vmem:[%s750 + $0x14] sm:$0xf]
        %v757 = vld [vmem:[%s750 + $0x18] sm:$0xf]
        %v758 = vld [vmem:[%s750 + $0x1c] sm:$0xf]
        %v759 = vld [vmem:[%s750 + $0x20] sm:$0xf]
        %v760 = vld [vmem:[%s750 + $0x24] sm:$0xf]
        %v761 = vld [vmem:[%s750 + $0x28] sm:$0xf]
        %v762 = vld [vmem:[%s750 + $0x2c] sm:$0xf]
        %v763 = vld [vmem:[%s750 + $0x30] sm:$0xf]
        %v764 = vld [vmem:[%s750 + $0x34] sm:$0xf]
        %v765 = vld [vmem:[%s750 + $0x38] sm:$0xf]
        %v766 = vld [vmem:[%s750 + $0x3c] sm:$0xf]
        %v767 = vunpack.c.l.b16 %v423
        %v768 = vunpack.c.l.b16 %v433
        %v769 = vunpack.c.l.b16 %v443
        %v770 = vunpack.c.l.b16 %v457
        %v771 = vunpack.c.l.b16 %v467
        %v772 = vunpack.c.l.b16 %v477
        %v773 = vunpack.c.l.b16 %v491
        %v774 = vunpack.c.l.b16 %v501
        %v775 = vunpack.c.l.b16 %v511
        %v776 = vunpack.c.l.b16 %v525
        %v777 = vunpack.c.l.b16 %v535
        %v778 = vunpack.c.l.b16 %v545
        %v779 = vunpack.c.l.b16 %v559
        %v780 = vunpack.c.l.b16 %v569
        %v781 = vunpack.c.l.b16 %v579
        %v782 = vunpack.c.l.b16 %v593
        %v783 = vunpack.c.l.b16 %v603
        %v784 = vunpack.c.l.b16 %v613
        %v785 = vunpack.c.l.b16 %v627
        %v786 = vunpack.c.l.b16 %v637
        %v787 = vunpack.c.l.b16 %v647
        %v788 = vunpack.c.l.b16 %v661
        %v789 = vunpack.c.l.b16 %v671
        %v790 = vunpack.c.l.b16 %v681
        %v791 = vunpack.c.l.b16 %v695
        %v792 = vunpack.c.l.b16 %v705
        %v793 = vunpack.c.l.b16 %v715
        %v794 = vunpack.c.l.b16 %v729
        %v795 = vunpack.c.l.b16 %v739
        %v796 = vunpack.c.l.b16 %v749
        %v797 = vpack.c.b16 %v768, %v767
        %v798 = vpack.c.b16 %v770, %v769
        %v799 = vpack.c.b16 %v772, %v771
        %v800 = vpack.c.b16 %v774, %v773
        %v801 = vpack.c.b16 %v776, %v775
        %v802 = vpack.c.b16 %v778, %v777
        %v803 = vpack.c.b16 %v780, %v779
        %v804 = vpack.c.b16 %v782, %v781
        %v805 = vpack.c.b16 %v784, %v783
        %v806 = vpack.c.b16 %v786, %v785
        %v807 = vpack.c.b16 %v788, %v787
        %v808 = vpack.c.b16 %v790, %v789
        %v809 = vpack.c.b16 %v792, %v791
        %v810 = vpack.c.b16 %v794, %v793
        %v811 = vpack.c.b16 %v796, %v795
        %v843 = vunpack.c.l.b16 %v751
        %v844 = vunpack.c.l.b16 %v752
        %v845 = vunpack.c.l.b16 %v753
        %v846 = vunpack.c.l.b16 %v754
        %v847 = vunpack.c.l.b16 %v755
        %v848 = vunpack.c.l.b16 %v756
        %v849 = vunpack.c.l.b16 %v757
        %v850 = vunpack.c.l.b16 %v758
        %v851 = vunpack.c.l.b16 %v759
        %v852 = vunpack.c.l.b16 %v760
        %v853 = vunpack.c.l.b16 %v761
        %v854 = vunpack.c.l.b16 %v762
        %v855 = vunpack.c.l.b16 %v763
        %v856 = vunpack.c.l.b16 %v764
        %v857 = vunpack.c.l.b16 %v765
        %v858 = vunpack.c.l.b16 %v766
        %v859 = vpack.c.b16 %v844, %v843
        %v860 = vpack.c.b16 %v846, %v845
        %v861 = vpack.c.b16 %v848, %v847
        %v862 = vpack.c.b16 %v850, %v849
        %v863 = vpack.c.b16 %v852, %v851
        %v864 = vpack.c.b16 %v854, %v853
        %v865 = vpack.c.b16 %v856, %v855
        %v866 = vpack.c.b16 %v858, %v857
        %875 = vmatpush.bf16.msra.mxu0 %v866
        %876 = vmatpush.bf16.msra.mxu0 %v865
        %877 = vmatpush.bf16.msra.mxu0 %v864
        %878 = vmatpush.bf16.msra.mxu0 %v863
        %879 = vmatpush.bf16.msra.mxu0 %v862
        %880 = vmatpush.bf16.msra.mxu0 %v861
        %881 = vmatpush.bf16.msra.mxu0 %v860
        %882 = vmatpush.bf16.msra.mxu0 %v859
        %883 = vmatmul.bf16.gmra.mxu0 %v797
        %v884 = vpop.f32.mrf.mxu0
        %v885 = vadd.f32 0.0, %v884
        %v886 = vpop.f32.mrf.mxu0
        %v887 = vadd.f32 0.0, %v886
        %888 = vmatmul.bf16.gmra.mxu0 %v798
        %v889 = vpop.f32.mrf.mxu0
        %v890 = vadd.f32 0.0, %v889
        %v891 = vpop.f32.mrf.mxu0
        %v892 = vadd.f32 0.0, %v891
        %893 = vmatmul.bf16.gmra.mxu0 %v799
        %v894 = vpop.f32.mrf.mxu0
        %v895 = vadd.f32 0.0, %v894
        %v896 = vpop.f32.mrf.mxu0
        %v897 = vadd.f32 0.0, %v896
        %898 = vmatmul.bf16.gmra.mxu0 %v800
        %v899 = vpop.f32.mrf.mxu0
        %v900 = vadd.f32 0.0, %v899
        %v901 = vpop.f32.mrf.mxu0
        %v902 = vadd.f32 0.0, %v901
        %903 = vmatmul.bf16.gmra.mxu0 %v801
        %v904 = vpop.f32.mrf.mxu0
        %v905 = vadd.f32 0.0, %v904
        %v906 = vpop.f32.mrf.mxu0
        %v907 = vadd.f32 0.0, %v906
        %908 = vmatmul.bf16.gmra.mxu0 %v802
        %v909 = vpop.f32.mrf.mxu0
        %v910 = vadd.f32 0.0, %v909
        %v911 = vpop.f32.mrf.mxu0
        %v912 = vadd.f32 0.0, %v911
        %913 = vmatmul.bf16.gmra.mxu0 %v803
        %v914 = vpop.f32.mrf.mxu0
        %v915 = vadd.f32 0.0, %v914
        %v916 = vpop.f32.mrf.mxu0
        %v917 = vadd.f32 0.0, %v916
        %918 = vmatmul.bf16.gmra.mxu0 %v804
        %v919 = vpop.f32.mrf.mxu0
        %v920 = vadd.f32 0.0, %v919
        %v921 = vpop.f32.mrf.mxu0
        %v922 = vadd.f32 0.0, %v921
        %923 = vmatmul.bf16.gmra.mxu0 %v805
        %v924 = vpop.f32.mrf.mxu0
        %v925 = vadd.f32 0.0, %v924
        %v926 = vpop.f32.mrf.mxu0
        %v927 = vadd.f32 0.0, %v926
        %928 = vmatmul.bf16.gmra.mxu0 %v806
        %v929 = vpop.f32.mrf.mxu0
        %v930 = vadd.f32 0.0, %v929
        %v931 = vpop.f32.mrf.mxu0
        %v932 = vadd.f32 0.0, %v931
        %933 = vmatmul.bf16.gmra.mxu0 %v807
        %v934 = vpop.f32.mrf.mxu0
        %v935 = vadd.f32 0.0, %v934
        %v936 = vpop.f32.mrf.mxu0
        %v937 = vadd.f32 0.0, %v936
        %938 = vmatmul.bf16.gmra.mxu0 %v808
        %v939 = vpop.f32.mrf.mxu0
        %v940 = vadd.f32 0.0, %v939
        %v941 = vpop.f32.mrf.mxu0
        %v942 = vadd.f32 0.0, %v941
        %943 = vmatmul.bf16.gmra.mxu0 %v809
        %v944 = vpop.f32.mrf.mxu0
        %v945 = vadd.f32 0.0, %v944
        %v946 = vpop.f32.mrf.mxu0
        %v947 = vadd.f32 0.0, %v946
        %948 = vmatmul.bf16.gmra.mxu0 %v810
        %v949 = vpop.f32.mrf.mxu0
        %v950 = vadd.f32 0.0, %v949
        %v951 = vpop.f32.mrf.mxu0
        %v952 = vadd.f32 0.0, %v951
        %953 = vmatmul.bf16.gmra.mxu0 %v811
        %v954 = vpop.f32.mrf.mxu0
        %v955 = vadd.f32 0.0, %v954
        %v956 = vpop.f32.mrf.mxu0
        %v957 = vadd.f32 0.0, %v956
        %958 = vdwg.mxu0
        %v989 = vunpack.c.l.b16 %v351
        %v990 = vunpack.c.l.b16 %v352
        %v991 = vunpack.c.l.b16 %v353
        %v992 = vunpack.c.l.b16 %v354
        %v993 = vunpack.c.l.b16 %v355
        %v994 = vunpack.c.l.b16 %v356
        %v995 = vunpack.c.l.b16 %v357
        %v996 = vunpack.c.l.b16 %v358
        %v997 = vunpack.c.l.b16 %v359
        %v998 = vunpack.c.l.b16 %v360
        %v999 = vunpack.c.l.b16 %v361
        %v1000 = vunpack.c.l.b16 %v362
        %v1001 = vunpack.c.l.b16 %v363
        %v1002 = vunpack.c.l.b16 %v364
        %v1003 = vunpack.c.l.b16 %v365
        %v1004 = vunpack.c.l.b16 %v366
        %v1005 = vunpack.c.l.b16 %v367
        %v1006 = vunpack.c.l.b16 %v368
        %v1007 = vunpack.c.l.b16 %v369
        %v1008 = vunpack.c.l.b16 %v370
        %v1009 = vunpack.c.l.b16 %v371
        %v1010 = vunpack.c.l.b16 %v372
        %v1011 = vunpack.c.l.b16 %v373
        %v1012 = vunpack.c.l.b16 %v374
        %v1013 = vunpack.c.l.b16 %v375
        %v1014 = vunpack.c.l.b16 %v376
        %v1015 = vunpack.c.l.b16 %v377
        %v1016 = vunpack.c.l.b16 %v378
        %v1017 = vunpack.c.l.b16 %v379
        %v1018 = vunpack.c.l.b16 %v380
        %v1019 = vpack.c.b16 %v990, %v989
        %v1020 = vpack.c.b16 %v992, %v991
        %v1021 = vpack.c.b16 %v994, %v993
        %v1022 = vpack.c.b16 %v996, %v995
        %v1023 = vpack.c.b16 %v998, %v997
        %v1024 = vpack.c.b16 %v1000, %v999
        %v1025 = vpack.c.b16 %v1002, %v1001
        %v1026 = vpack.c.b16 %v1004, %v1003
        %v1027 = vpack.c.b16 %v1006, %v1005
        %v1028 = vpack.c.b16 %v1008, %v1007
        %v1029 = vpack.c.b16 %v1010, %v1009
        %v1030 = vpack.c.b16 %v1012, %v1011
        %v1031 = vpack.c.b16 %v1014, %v1013
        %v1032 = vpack.c.b16 %v1016, %v1015
        %v1033 = vpack.c.b16 %v1018, %v1017
        %v1065 = vunpack.c.l.b16 %v381
        %v1066 = vunpack.c.l.b16 %v382
        %v1067 = vunpack.c.l.b16 %v383
        %v1068 = vunpack.c.l.b16 %v384
        %v1069 = vunpack.c.l.b16 %v385
        %v1070 = vunpack.c.l.b16 %v386
        %v1071 = vunpack.c.l.b16 %v387
        %v1072 = vunpack.c.l.b16 %v388
        %v1073 = vunpack.c.l.b16 %v389
        %v1074 = vunpack.c.l.b16 %v390
        %v1075 = vunpack.c.l.b16 %v391
        %v1076 = vunpack.c.l.b16 %v392
        %v1077 = vunpack.c.l.b16 %v393
        %v1078 = vunpack.c.l.b16 %v394
        %v1079 = vunpack.c.l.b16 %v395
        %v1080 = vunpack.c.l.b16 %v396
        %v1081 = vpack.c.b16 %v1066, %v1065
        %v1082 = vpack.c.b16 %v1068, %v1067
        %v1083 = vpack.c.b16 %v1070, %v1069
        %v1084 = vpack.c.b16 %v1072, %v1071
        %v1085 = vpack.c.b16 %v1074, %v1073
        %v1086 = vpack.c.b16 %v1076, %v1075
        %v1087 = vpack.c.b16 %v1078, %v1077
        %v1088 = vpack.c.b16 %v1080, %v1079
        %1097 = vmatpush.bf16.msra.mxu0 %v1088
        %1098 = vmatpush.bf16.msra.mxu0 %v1087
        %1099 = vmatpush.bf16.msra.mxu0 %v1086
        %1100 = vmatpush.bf16.msra.mxu0 %v1085
        %1101 = vmatpush.bf16.msra.mxu0 %v1084
        %1102 = vmatpush.bf16.msra.mxu0 %v1083
        %1103 = vmatpush.bf16.msra.mxu0 %v1082
        %1104 = vmatpush.bf16.msra.mxu0 %v1081
        %1105 = vmatmul.bf16.gmra.mxu0 %v1019
        %v1106 = vpop.f32.mrf.mxu0
        %v1107 = vadd.f32 %v885, %v1106
        %v1108 = vpop.f32.mrf.mxu0
        %v1109 = vadd.f32 %v887, %v1108
        %1110 = vmatmul.bf16.gmra.mxu0 %v1020
        %v1111 = vpop.f32.mrf.mxu0
        %v1112 = vadd.f32 %v890, %v1111
        %v1113 = vpop.f32.mrf.mxu0
        %v1114 = vadd.f32 %v892, %v1113
        %1115 = vmatmul.bf16.gmra.mxu0 %v1021
        %v1116 = vpop.f32.mrf.mxu0
        %v1117 = vadd.f32 %v895, %v1116
        %v1118 = vpop.f32.mrf.mxu0
        %v1119 = vadd.f32 %v897, %v1118
        %1120 = vmatmul.bf16.gmra.mxu0 %v1022
        %v1121 = vpop.f32.mrf.mxu0
        %v1122 = vadd.f32 %v900, %v1121
        %v1123 = vpop.f32.mrf.mxu0
        %v1124 = vadd.f32 %v902, %v1123
        %1125 = vmatmul.bf16.gmra.mxu0 %v1023
        %v1126 = vpop.f32.mrf.mxu0
        %v1127 = vadd.f32 %v905, %v1126
        %v1128 = vpop.f32.mrf.mxu0
        %v1129 = vadd.f32 %v907, %v1128
        %1130 = vmatmul.bf16.gmra.mxu0 %v1024
        %v1131 = vpop.f32.mrf.mxu0
        %v1132 = vadd.f32 %v910, %v1131
        %v1133 = vpop.f32.mrf.mxu0
        %v1134 = vadd.f32 %v912, %v1133
        %1135 = vmatmul.bf16.gmra.mxu0 %v1025
        %v1136 = vpop.f32.mrf.mxu0
        %v1137 = vadd.f32 %v915, %v1136
        %v1138 = vpop.f32.mrf.mxu0
        %v1139 = vadd.f32 %v917, %v1138
        %1140 = vmatmul.bf16.gmra.mxu0 %v1026
        %v1141 = vpop.f32.mrf.mxu0
        %v1142 = vadd.f32 %v920, %v1141
        %v1143 = vpop.f32.mrf.mxu0
        %v1144 = vadd.f32 %v922, %v1143
        %1145 = vmatmul.bf16.gmra.mxu0 %v1027
        %v1146 = vpop.f32.mrf.mxu0
        %v1147 = vadd.f32 %v925, %v1146
        %v1148 = vpop.f32.mrf.mxu0
        %v1149 = vadd.f32 %v927, %v1148
        %1150 = vmatmul.bf16.gmra.mxu0 %v1028
        %v1151 = vpop.f32.mrf.mxu0
        %v1152 = vadd.f32 %v930, %v1151
        %v1153 = vpop.f32.mrf.mxu0
        %v1154 = vadd.f32 %v932, %v1153
        %1155 = vmatmul.bf16.gmra.mxu0 %v1029
        %v1156 = vpop.f32.mrf.mxu0
        %v1157 = vadd.f32 %v935, %v1156
        %v1158 = vpop.f32.mrf.mxu0
        %v1159 = vadd.f32 %v937, %v1158
        %1160 = vmatmul.bf16.gmra.mxu0 %v1030
        %v1161 = vpop.f32.mrf.mxu0
        %v1162 = vadd.f32 %v940, %v1161
        %v1163 = vpop.f32.mrf.mxu0
        %v1164 = vadd.f32 %v942, %v1163
        %1165 = vmatmul.bf16.gmra.mxu0 %v1031
        %v1166 = vpop.f32.mrf.mxu0
        %v1167 = vadd.f32 %v945, %v1166
        %v1168 = vpop.f32.mrf.mxu0
        %v1169 = vadd.f32 %v947, %v1168
        %1170 = vmatmul.bf16.gmra.mxu0 %v1032
        %v1171 = vpop.f32.mrf.mxu0
        %v1172 = vadd.f32 %v950, %v1171
        %v1173 = vpop.f32.mrf.mxu0
        %v1174 = vadd.f32 %v952, %v1173
        %1175 = vmatmul.bf16.gmra.mxu0 %v1033
        %v1176 = vpop.f32.mrf.mxu0
        %v1177 = vadd.f32 %v955, %v1176
        %v1178 = vpop.f32.mrf.mxu0
        %v1179 = vadd.f32 %v957, %v1178
        %1180 = vdwg.mxu0
        %v1181 = vld [vmem:[%s350] sm:$0xe]
        %v1182 = vld [vmem:[%s350 + $0x10] sm:$0xe]
        %v1183 = vld [vmem:[%s350 + $0x20] sm:$0xe]
        %v1184 = vld [vmem:[%s350 + $0x30] sm:$0xe]
        %v1185 = vld [vmem:[%s350 + $0x40] sm:$0xe]
        %v1186 = vld [vmem:[%s350 + $0x50] sm:$0xe]
        %v1187 = vld [vmem:[%s350 + $0x60] sm:$0xe]
        %v1188 = vld [vmem:[%s350 + $0x70] sm:$0xe]
        %v1189 = vld [vmem:[%s350 + $0x80] sm:$0xe]
        %v1190 = vld [vmem:[%s350 + $0x90] sm:$0xe]
        %vm1211 = vcmask 1042432
        %vm1212 = vcmask 1046532
        %vm1213 = vmor %vm1211, %vm1212
        %v1214 = vrot.slane %v1181, 5
        %v1215 = vrot.slane %v1214, 4
        %v1216 = vrot.slane %v352, 5
        %v1217 = vsel %vm1213, %v1215, %v1216
        %v1218 = vrot.slane %v1216, 4
        %v1219 = vrot.slane %v353, 5
        %v1220 = vsel %vm1213, %v1218, %v1219
        %v1221 = vrot.slane %v1219, 4
        %v1222 = vrot.slane %v397, 5
        %v1223 = vsel %vm1213, %v1221, %v1222
        %v1224 = vrot.slane %v1182, 5
        %v1225 = vrot.slane %v1224, 4
        %v1226 = vrot.slane %v355, 5
        %v1227 = vsel %vm1213, %v1225, %v1226
        %v1228 = vrot.slane %v1226, 4
        %v1229 = vrot.slane %v356, 5
        %v1230 = vsel %vm1213, %v1228, %v1229
        %v1231 = vrot.slane %v1229, 4
        %v1232 = vrot.slane %v398, 5
        %v1233 = vsel %vm1213, %v1231, %v1232
        %v1234 = vrot.slane %v1183, 5
        %v1235 = vrot.slane %v1234, 4
        %v1236 = vrot.slane %v358, 5
        %v1237 = vsel %vm1213, %v1235, %v1236
        %v1238 = vrot.slane %v1236, 4
        %v1239 = vrot.slane %v359, 5
        %v1240 = vsel %vm1213, %v1238, %v1239
        %v1241 = vrot.slane %v1239, 4
        %v1242 = vrot.slane %v399, 5
        %v1243 = vsel %vm1213, %v1241, %v1242
        %v1244 = vrot.slane %v1184, 5
        %v1245 = vrot.slane %v1244, 4
        %v1246 = vrot.slane %v361, 5
        %v1247 = vsel %vm1213, %v1245, %v1246
        %v1248 = vrot.slane %v1246, 4
        %v1249 = vrot.slane %v362, 5
        %v1250 = vsel %vm1213, %v1248, %v1249
        %v1251 = vrot.slane %v1249, 4
        %v1252 = vrot.slane %v400, 5
        %v1253 = vsel %vm1213, %v1251, %v1252
        %v1254 = vrot.slane %v1185, 5
        %v1255 = vrot.slane %v1254, 4
        %v1256 = vrot.slane %v364, 5
        %v1257 = vsel %vm1213, %v1255, %v1256
        %v1258 = vrot.slane %v1256, 4
        %v1259 = vrot.slane %v365, 5
        %v1260 = vsel %vm1213, %v1258, %v1259
        %v1261 = vrot.slane %v1259, 4
        %v1262 = vrot.slane %v401, 5
        %v1263 = vsel %vm1213, %v1261, %v1262
        %v1264 = vrot.slane %v1186, 5
        %v1265 = vrot.slane %v1264, 4
        %v1266 = vrot.slane %v367, 5
        %v1267 = vsel %vm1213, %v1265, %v1266
        %v1268 = vrot.slane %v1266, 4
        %v1269 = vrot.slane %v368, 5
        %v1270 = vsel %vm1213, %v1268, %v1269
        %v1271 = vrot.slane %v1269, 4
        %v1272 = vrot.slane %v402, 5
        %v1273 = vsel %vm1213, %v1271, %v1272
        %v1274 = vrot.slane %v1187, 5
        %v1275 = vrot.slane %v1274, 4
        %v1276 = vrot.slane %v370, 5
        %v1277 = vsel %vm1213, %v1275, %v1276
        %v1278 = vrot.slane %v1276, 4
        %v1279 = vrot.slane %v371, 5
        %v1280 = vsel %vm1213, %v1278, %v1279
        %v1281 = vrot.slane %v1279, 4
        %v1282 = vrot.slane %v403, 5
        %v1283 = vsel %vm1213, %v1281, %v1282
        %v1284 = vrot.slane %v1188, 5
        %v1285 = vrot.slane %v1284, 4
        %v1286 = vrot.slane %v373, 5
        %v1287 = vsel %vm1213, %v1285, %v1286
        %v1288 = vrot.slane %v1286, 4
        %v1289 = vrot.slane %v374, 5
        %v1290 = vsel %vm1213, %v1288, %v1289
        %v1291 = vrot.slane %v1289, 4
        %v1292 = vrot.slane %v404, 5
        %v1293 = vsel %vm1213, %v1291, %v1292
        %v1294 = vrot.slane %v1189, 5
        %v1295 = vrot.slane %v1294, 4
        %v1296 = vrot.slane %v376, 5
        %v1297 = vsel %vm1213, %v1295, %v1296
        %v1298 = vrot.slane %v1296, 4
        %v1299 = vrot.slane %v377, 5
        %v1300 = vsel %vm1213, %v1298, %v1299
        %v1301 = vrot.slane %v1299, 4
        %v1302 = vrot.slane %v405, 5
        %v1303 = vsel %vm1213, %v1301, %v1302
        %v1304 = vrot.slane %v1190, 5
        %v1305 = vrot.slane %v1304, 4
        %v1306 = vrot.slane %v379, 5
        %v1307 = vsel %vm1213, %v1305, %v1306
        %v1308 = vrot.slane %v1306, 4
        %v1309 = vrot.slane %v380, 5
        %v1310 = vsel %vm1213, %v1308, %v1309
        %v1311 = vrot.slane %v1309, 4
        %v1312 = vrot.slane %v406, 5
        %v1313 = vsel %vm1213, %v1311, %v1312
        %s1314 = scalar_lea.vmem [#allocation6], 128
        %v1315 = vld [vmem:[%s1314] sm:$0xf]
        %v1316 = vld [vmem:[%s1314 + $0x4] sm:$0xf]
        %v1317 = vld [vmem:[%s1314 + $0x8] sm:$0xf]
        %v1318 = vld [vmem:[%s1314 + $0xc] sm:$0xf]
        %v1319 = vld [vmem:[%s1314 + $0x10] sm:$0xf]
        %v1320 = vld [vmem:[%s1314 + $0x14] sm:$0xf]
        %v1321 = vld [vmem:[%s1314 + $0x18] sm:$0xf]
        %v1322 = vld [vmem:[%s1314 + $0x1c] sm:$0xf]
        %v1323 = vld [vmem:[%s1314 + $0x20] sm:$0xf]
        %v1324 = vld [vmem:[%s1314 + $0x24] sm:$0xf]
        %v1325 = vld [vmem:[%s1314 + $0x28] sm:$0xf]
        %v1326 = vld [vmem:[%s1314 + $0x2c] sm:$0xf]
        %v1327 = vld [vmem:[%s1314 + $0x30] sm:$0xf]
        %v1328 = vld [vmem:[%s1314 + $0x34] sm:$0xf]
        %v1329 = vld [vmem:[%s1314 + $0x38] sm:$0xf]
        %v1330 = vld [vmem:[%s1314 + $0x3c] sm:$0xf]
        %v1331 = vunpack.c.l.b16 %v1217
        %v1332 = vunpack.c.l.b16 %v1220
        %v1333 = vunpack.c.l.b16 %v1223
        %v1334 = vunpack.c.l.b16 %v1227
        %v1335 = vunpack.c.l.b16 %v1230
        %v1336 = vunpack.c.l.b16 %v1233
        %v1337 = vunpack.c.l.b16 %v1237
        %v1338 = vunpack.c.l.b16 %v1240
        %v1339 = vunpack.c.l.b16 %v1243
        %v1340 = vunpack.c.l.b16 %v1247
        %v1341 = vunpack.c.l.b16 %v1250
        %v1342 = vunpack.c.l.b16 %v1253
        %v1343 = vunpack.c.l.b16 %v1257
        %v1344 = vunpack.c.l.b16 %v1260
        %v1345 = vunpack.c.l.b16 %v1263
        %v1346 = vunpack.c.l.b16 %v1267
        %v1347 = vunpack.c.l.b16 %v1270
        %v1348 = vunpack.c.l.b16 %v1273
        %v1349 = vunpack.c.l.b16 %v1277
        %v1350 = vunpack.c.l.b16 %v1280
        %v1351 = vunpack.c.l.b16 %v1283
        %v1352 = vunpack.c.l.b16 %v1287
        %v1353 = vunpack.c.l.b16 %v1290
        %v1354 = vunpack.c.l.b16 %v1293
        %v1355 = vunpack.c.l.b16 %v1297
        %v1356 = vunpack.c.l.b16 %v1300
        %v1357 = vunpack.c.l.b16 %v1303
        %v1358 = vunpack.c.l.b16 %v1307
        %v1359 = vunpack.c.l.b16 %v1310
        %v1360 = vunpack.c.l.b16 %v1313
        %v1361 = vpack.c.b16 %v1332, %v1331
        %v1362 = vpack.c.b16 %v1334, %v1333
        %v1363 = vpack.c.b16 %v1336, %v1335
        %v1364 = vpack.c.b16 %v1338, %v1337
        %v1365 = vpack.c.b16 %v1340, %v1339
        %v1366 = vpack.c.b16 %v1342, %v1341
        %v1367 = vpack.c.b16 %v1344, %v1343
        %v1368 = vpack.c.b16 %v1346, %v1345
        %v1369 = vpack.c.b16 %v1348, %v1347
        %v1370 = vpack.c.b16 %v1350, %v1349
        %v1371 = vpack.c.b16 %v1352, %v1351
        %v1372 = vpack.c.b16 %v1354, %v1353
        %v1373 = vpack.c.b16 %v1356, %v1355
        %v1374 = vpack.c.b16 %v1358, %v1357
        %v1375 = vpack.c.b16 %v1360, %v1359
        %v1407 = vunpack.c.l.b16 %v1315
        %v1408 = vunpack.c.l.b16 %v1316
        %v1409 = vunpack.c.l.b16 %v1317
        %v1410 = vunpack.c.l.b16 %v1318
        %v1411 = vunpack.c.l.b16 %v1319
        %v1412 = vunpack.c.l.b16 %v1320
        %v1413 = vunpack.c.l.b16 %v1321
        %v1414 = vunpack.c.l.b16 %v1322
        %v1415 = vunpack.c.l.b16 %v1323
        %v1416 = vunpack.c.l.b16 %v1324
        %v1417 = vunpack.c.l.b16 %v1325
        %v1418 = vunpack.c.l.b16 %v1326
        %v1419 = vunpack.c.l.b16 %v1327
        %v1420 = vunpack.c.l.b16 %v1328
        %v1421 = vunpack.c.l.b16 %v1329
        %v1422 = vunpack.c.l.b16 %v1330
        %v1423 = vpack.c.b16 %v1408, %v1407
        %v1424 = vpack.c.b16 %v1410, %v1409
        %v1425 = vpack.c.b16 %v1412, %v1411
        %v1426 = vpack.c.b16 %v1414, %v1413
        %v1427 = vpack.c.b16 %v1416, %v1415
        %v1428 = vpack.c.b16 %v1418, %v1417
        %v1429 = vpack.c.b16 %v1420, %v1419
        %v1430 = vpack.c.b16 %v1422, %v1421
        %1439 = vmatpush.bf16.msra.mxu0 %v1430
        %1440 = vmatpush.bf16.msra.mxu0 %v1429
        %1441 = vmatpush.bf16.msra.mxu0 %v1428
        %1442 = vmatpush.bf16.msra.mxu0 %v1427
        %1443 = vmatpush.bf16.msra.mxu0 %v1426
        %1444 = vmatpush.bf16.msra.mxu0 %v1425
        %1445 = vmatpush.bf16.msra.mxu0 %v1424
        %1446 = vmatpush.bf16.msra.mxu0 %v1423
        %1447 = vmatmul.bf16.gmra.mxu0 %v1361
        %v1448 = vpop.f32.mrf.mxu0
        %v1449 = vadd.f32 0.0, %v1448
        %v1450 = vpop.f32.mrf.mxu0
        %v1451 = vadd.f32 0.0, %v1450
        %1452 = vmatmul.bf16.gmra.mxu0 %v1362
        %v1453 = vpop.f32.mrf.mxu0
        %v1454 = vadd.f32 0.0, %v1453
        %v1455 = vpop.f32.mrf.mxu0
        %v1456 = vadd.f32 0.0, %v1455
        %1457 = vmatmul.bf16.gmra.mxu0 %v1363
        %v1458 = vpop.f32.mrf.mxu0
        %v1459 = vadd.f32 0.0, %v1458
        %v1460 = vpop.f32.mrf.mxu0
        %v1461 = vadd.f32 0.0, %v1460
        %1462 = vmatmul.bf16.gmra.mxu0 %v1364
        %v1463 = vpop.f32.mrf.mxu0
        %v1464 = vadd.f32 0.0, %v1463
        %v1465 = vpop.f32.mrf.mxu0
        %v1466 = vadd.f32 0.0, %v1465
        %1467 = vmatmul.bf16.gmra.mxu0 %v1365
        %v1468 = vpop.f32.mrf.mxu0
        %v1469 = vadd.f32 0.0, %v1468
        %v1470 = vpop.f32.mrf.mxu0
        %v1471 = vadd.f32 0.0, %v1470
        %1472 = vmatmul.bf16.gmra.mxu0 %v1366
        %v1473 = vpop.f32.mrf.mxu0
        %v1474 = vadd.f32 0.0, %v1473
        %v1475 = vpop.f32.mrf.mxu0
        %v1476 = vadd.f32 0.0, %v1475
        %1477 = vmatmul.bf16.gmra.mxu0 %v1367
        %v1478 = vpop.f32.mrf.mxu0
        %v1479 = vadd.f32 0.0, %v1478
        %v1480 = vpop.f32.mrf.mxu0
        %v1481 = vadd.f32 0.0, %v1480
        %1482 = vmatmul.bf16.gmra.mxu0 %v1368
        %v1483 = vpop.f32.mrf.mxu0
        %v1484 = vadd.f32 0.0, %v1483
        %v1485 = vpop.f32.mrf.mxu0
        %v1486 = vadd.f32 0.0, %v1485
        %1487 = vmatmul.bf16.gmra.mxu0 %v1369
        %v1488 = vpop.f32.mrf.mxu0
        %v1489 = vadd.f32 0.0, %v1488
        %v1490 = vpop.f32.mrf.mxu0
        %v1491 = vadd.f32 0.0, %v1490
        %1492 = vmatmul.bf16.gmra.mxu0 %v1370
        %v1493 = vpop.f32.mrf.mxu0
        %v1494 = vadd.f32 0.0, %v1493
        %v1495 = vpop.f32.mrf.mxu0
        %v1496 = vadd.f32 0.0, %v1495
        %1497 = vmatmul.bf16.gmra.mxu0 %v1371
        %v1498 = vpop.f32.mrf.mxu0
        %v1499 = vadd.f32 0.0, %v1498
        %v1500 = vpop.f32.mrf.mxu0
        %v1501 = vadd.f32 0.0, %v1500
        %1502 = vmatmul.bf16.gmra.mxu0 %v1372
        %v1503 = vpop.f32.mrf.mxu0
        %v1504 = vadd.f32 0.0, %v1503
        %v1505 = vpop.f32.mrf.mxu0
        %v1506 = vadd.f32 0.0, %v1505
        %1507 = vmatmul.bf16.gmra.mxu0 %v1373
        %v1508 = vpop.f32.mrf.mxu0
        %v1509 = vadd.f32 0.0, %v1508
        %v1510 = vpop.f32.mrf.mxu0
        %v1511 = vadd.f32 0.0, %v1510
        %1512 = vmatmul.bf16.gmra.mxu0 %v1374
        %v1513 = vpop.f32.mrf.mxu0
        %v1514 = vadd.f32 0.0, %v1513
        %v1515 = vpop.f32.mrf.mxu0
        %v1516 = vadd.f32 0.0, %v1515
        %1517 = vmatmul.bf16.gmra.mxu0 %v1375
        %v1518 = vpop.f32.mrf.mxu0
        %v1519 = vadd.f32 0.0, %v1518
        %v1520 = vpop.f32.mrf.mxu0
        %v1521 = vadd.f32 0.0, %v1520
        %1522 = vdwg.mxu0
        %v1523 = vadd.f32 %v1107, %v1449
        %v1524 = vadd.f32 %v1109, %v1451
        %v1525 = vadd.f32 %v1112, %v1454
        %v1526 = vadd.f32 %v1114, %v1456
        %v1527 = vadd.f32 %v1117, %v1459
        %v1528 = vadd.f32 %v1119, %v1461
        %v1529 = vadd.f32 %v1122, %v1464
        %v1530 = vadd.f32 %v1124, %v1466
        %v1531 = vadd.f32 %v1127, %v1469
        %v1532 = vadd.f32 %v1129, %v1471
        %v1533 = vadd.f32 %v1132, %v1474
        %v1534 = vadd.f32 %v1134, %v1476
        %v1535 = vadd.f32 %v1137, %v1479
        %v1536 = vadd.f32 %v1139, %v1481
        %v1537 = vadd.f32 %v1142, %v1484
        %v1538 = vadd.f32 %v1144, %v1486
        %v1539 = vadd.f32 %v1147, %v1489
        %v1540 = vadd.f32 %v1149, %v1491
        %v1541 = vadd.f32 %v1152, %v1494
        %v1542 = vadd.f32 %v1154, %v1496
        %v1543 = vadd.f32 %v1157, %v1499
        %v1544 = vadd.f32 %v1159, %v1501
        %v1545 = vadd.f32 %v1162, %v1504
        %v1546 = vadd.f32 %v1164, %v1506
        %v1547 = vadd.f32 %v1167, %v1509
        %v1548 = vadd.f32 %v1169, %v1511
        %v1549 = vadd.f32 %v1172, %v1514
        %v1550 = vadd.f32 %v1174, %v1516
        %v1551 = vadd.f32 %v1177, %v1519
        %v1552 = vadd.f32 %v1179, %v1521
        %s1553 = sadd.s32 %s347, 1
        %s1554 = smul.u32 %s1553, 4
        %s1555 = smul.addr %s1554, 4
        %s1556 = scalar_lea.vmem %s304, %s1555 [#allocation3]
        %v1557 = vld [vmem:[%s1556] sm:$0xf]
        %v1558 = vld [vmem:[%s1556 + $0x4] sm:$0xf]
        %v1559 = vld [vmem:[%s1556 + $0x8] sm:$0xf]
        %v1560 = vld [vmem:[%s1556 + $0x10] sm:$0xf]
        %v1561 = vld [vmem:[%s1556 + $0x14] sm:$0xf]
        %v1562 = vld [vmem:[%s1556 + $0x18] sm:$0xf]
        %v1563 = vld [vmem:[%s1556 + $0x20] sm:$0xf]
        %v1564 = vld [vmem:[%s1556 + $0x24] sm:$0xf]
        %v1565 = vld [vmem:[%s1556 + $0x28] sm:$0xf]
        %v1566 = vld [vmem:[%s1556 + $0x30] sm:$0xf]
        %v1567 = vld [vmem:[%s1556 + $0x34] sm:$0xf]
        %v1568 = vld [vmem:[%s1556 + $0x38] sm:$0xf]
        %v1569 = vld [vmem:[%s1556 + $0x40] sm:$0xf]
        %v1570 = vld [vmem:[%s1556 + $0x44] sm:$0xf]
        %v1571 = vld [vmem:[%s1556 + $0x48] sm:$0xf]
        %v1572 = vld [vmem:[%s1556 + $0x50] sm:$0xf]
        %v1573 = vld [vmem:[%s1556 + $0x54] sm:$0xf]
        %v1574 = vld [vmem:[%s1556 + $0x58] sm:$0xf]
        %v1575 = vld [vmem:[%s1556 + $0x60] sm:$0xf]
        %v1576 = vld [vmem:[%s1556 + $0x64] sm:$0xf]
        %v1577 = vld [vmem:[%s1556 + $0x68] sm:$0xf]
        %v1578 = vld [vmem:[%s1556 + $0x70] sm:$0xf]
        %v1579 = vld [vmem:[%s1556 + $0x74] sm:$0xf]
        %v1580 = vld [vmem:[%s1556 + $0x78] sm:$0xf]
        %v1581 = vld [vmem:[%s1556 + $0x80] sm:$0xf]
        %v1582 = vld [vmem:[%s1556 + $0x84] sm:$0xf]
        %v1583 = vld [vmem:[%s1556 + $0x88] sm:$0xf]
        %v1584 = vld [vmem:[%s1556 + $0x90] sm:$0xf]
        %v1585 = vld [vmem:[%s1556 + $0x94] sm:$0xf]
        %v1586 = vld [vmem:[%s1556 + $0x98] sm:$0xf]
        %s1587 = scalar_lea.vmem [#allocation6], 192
        %v1588 = vld [vmem:[%s1587] sm:$0xf]
        %v1589 = vld [vmem:[%s1587 + $0x4] sm:$0xf]
        %v1590 = vld [vmem:[%s1587 + $0x8] sm:$0xf]
        %v1591 = vld [vmem:[%s1587 + $0xc] sm:$0xf]
        %v1592 = vld [vmem:[%s1587 + $0x10] sm:$0xf]
        %v1593 = vld [vmem:[%s1587 + $0x14] sm:$0xf]
        %v1594 = vld [vmem:[%s1587 + $0x18] sm:$0xf]
        %v1595 = vld [vmem:[%s1587 + $0x1c] sm:$0xf]
        %v1596 = vld [vmem:[%s1587 + $0x20] sm:$0xf]
        %v1597 = vld [vmem:[%s1587 + $0x24] sm:$0xf]
        %v1598 = vld [vmem:[%s1587 + $0x28] sm:$0xf]
        %v1599 = vld [vmem:[%s1587 + $0x2c] sm:$0xf]
        %v1600 = vld [vmem:[%s1587 + $0x30] sm:$0xf]
        %v1601 = vld [vmem:[%s1587 + $0x34] sm:$0xf]
        %v1602 = vld [vmem:[%s1587 + $0x38] sm:$0xf]
        %v1603 = vld [vmem:[%s1587 + $0x3c] sm:$0xf]
        %v1634 = vunpack.c.l.b16 %v1557
        %v1635 = vunpack.c.l.b16 %v1558
        %v1636 = vunpack.c.l.b16 %v1559
        %v1637 = vunpack.c.l.b16 %v1560
        %v1638 = vunpack.c.l.b16 %v1561
        %v1639 = vunpack.c.l.b16 %v1562
        %v1640 = vunpack.c.l.b16 %v1563
        %v1641 = vunpack.c.l.b16 %v1564
        %v1642 = vunpack.c.l.b16 %v1565
        %v1643 = vunpack.c.l.b16 %v1566
        %v1644 = vunpack.c.l.b16 %v1567
        %v1645 = vunpack.c.l.b16 %v1568
        %v1646 = vunpack.c.l.b16 %v1569
        %v1647 = vunpack.c.l.b16 %v1570
        %v1648 = vunpack.c.l.b16 %v1571
        %v1649 = vunpack.c.l.b16 %v1572
        %v1650 = vunpack.c.l.b16 %v1573
        %v1651 = vunpack.c.l.b16 %v1574
        %v1652 = vunpack.c.l.b16 %v1575
        %v1653 = vunpack.c.l.b16 %v1576
        %v1654 = vunpack.c.l.b16 %v1577
        %v1655 = vunpack.c.l.b16 %v1578
        %v1656 = vunpack.c.l.b16 %v1579
        %v1657 = vunpack.c.l.b16 %v1580
        %v1658 = vunpack.c.l.b16 %v1581
        %v1659 = vunpack.c.l.b16 %v1582
        %v1660 = vunpack.c.l.b16 %v1583
        %v1661 = vunpack.c.l.b16 %v1584
        %v1662 = vunpack.c.l.b16 %v1585
        %v1663 = vunpack.c.l.b16 %v1586
        %v1664 = vpack.c.b16 %v1635, %v1634
        %v1665 = vpack.c.b16 %v1637, %v1636
        %v1666 = vpack.c.b16 %v1639, %v1638
        %v1667 = vpack.c.b16 %v1641, %v1640
        %v1668 = vpack.c.b16 %v1643, %v1642
        %v1669 = vpack.c.b16 %v1645, %v1644
        %v1670 = vpack.c.b16 %v1647, %v1646
        %v1671 = vpack.c.b16 %v1649, %v1648
        %v1672 = vpack.c.b16 %v1651, %v1650
        %v1673 = vpack.c.b16 %v1653, %v1652
        %v1674 = vpack.c.b16 %v1655, %v1654
        %v1675 = vpack.c.b16 %v1657, %v1656
        %v1676 = vpack.c.b16 %v1659, %v1658
        %v1677 = vpack.c.b16 %v1661, %v1660
        %v1678 = vpack.c.b16 %v1663, %v1662
        %v1710 = vunpack.c.l.b16 %v1588
        %v1711 = vunpack.c.l.b16 %v1589
        %v1712 = vunpack.c.l.b16 %v1590
        %v1713 = vunpack.c.l.b16 %v1591
        %v1714 = vunpack.c.l.b16 %v1592
        %v1715 = vunpack.c.l.b16 %v1593
        %v1716 = vunpack.c.l.b16 %v1594
        %v1717 = vunpack.c.l.b16 %v1595
        %v1718 = vunpack.c.l.b16 %v1596
        %v1719 = vunpack.c.l.b16 %v1597
        %v1720 = vunpack.c.l.b16 %v1598
        %v1721 = vunpack.c.l.b16 %v1599
        %v1722 = vunpack.c.l.b16 %v1600
        %v1723 = vunpack.c.l.b16 %v1601
        %v1724 = vunpack.c.l.b16 %v1602
        %v1725 = vunpack.c.l.b16 %v1603
        %v1726 = vpack.c.b16 %v1711, %v1710
        %v1727 = vpack.c.b16 %v1713, %v1712
        %v1728 = vpack.c.b16 %v1715, %v1714
        %v1729 = vpack.c.b16 %v1717, %v1716
        %v1730 = vpack.c.b16 %v1719, %v1718
        %v1731 = vpack.c.b16 %v1721, %v1720
        %v1732 = vpack.c.b16 %v1723, %v1722
        %v1733 = vpack.c.b16 %v1725, %v1724
        %1742 = vmatpush.bf16.msra.mxu0 %v1733
        %1743 = vmatpush.bf16.msra.mxu0 %v1732
        %1744 = vmatpush.bf16.msra.mxu0 %v1731
        %1745 = vmatpush.bf16.msra.mxu0 %v1730
        %1746 = vmatpush.bf16.msra.mxu0 %v1729
        %1747 = vmatpush.bf16.msra.mxu0 %v1728
        %1748 = vmatpush.bf16.msra.mxu0 %v1727
        %1749 = vmatpush.bf16.msra.mxu0 %v1726
        %1750 = vmatmul.bf16.gmra.mxu0 %v1664
        %v1751 = vpop.f32.mrf.mxu0
        %v1752 = vadd.f32 0.0, %v1751
        %v1753 = vpop.f32.mrf.mxu0
        %v1754 = vadd.f32 0.0, %v1753
        %1755 = vmatmul.bf16.gmra.mxu0 %v1665
        %v1756 = vpop.f32.mrf.mxu0
        %v1757 = vadd.f32 0.0, %v1756
        %v1758 = vpop.f32.mrf.mxu0
        %v1759 = vadd.f32 0.0, %v1758
        %1760 = vmatmul.bf16.gmra.mxu0 %v1666
        %v1761 = vpop.f32.mrf.mxu0
        %v1762 = vadd.f32 0.0, %v1761
        %v1763 = vpop.f32.mrf.mxu0
        %v1764 = vadd.f32 0.0, %v1763
        %1765 = vmatmul.bf16.gmra.mxu0 %v1667
        %v1766 = vpop.f32.mrf.mxu0
        %v1767 = vadd.f32 0.0, %v1766
        %v1768 = vpop.f32.mrf.mxu0
        %v1769 = vadd.f32 0.0, %v1768
        %1770 = vmatmul.bf16.gmra.mxu0 %v1668
        %v1771 = vpop.f32.mrf.mxu0
        %v1772 = vadd.f32 0.0, %v1771
        %v1773 = vpop.f32.mrf.mxu0
        %v1774 = vadd.f32 0.0, %v1773
        %1775 = vmatmul.bf16.gmra.mxu0 %v1669
        %v1776 = vpop.f32.mrf.mxu0
        %v1777 = vadd.f32 0.0, %v1776
        %v1778 = vpop.f32.mrf.mxu0
        %v1779 = vadd.f32 0.0, %v1778
        %1780 = vmatmul.bf16.gmra.mxu0 %v1670
        %v1781 = vpop.f32.mrf.mxu0
        %v1782 = vadd.f32 0.0, %v1781
        %v1783 = vpop.f32.mrf.mxu0
        %v1784 = vadd.f32 0.0, %v1783
        %1785 = vmatmul.bf16.gmra.mxu0 %v1671
        %v1786 = vpop.f32.mrf.mxu0
        %v1787 = vadd.f32 0.0, %v1786
        %v1788 = vpop.f32.mrf.mxu0
        %v1789 = vadd.f32 0.0, %v1788
        %1790 = vmatmul.bf16.gmra.mxu0 %v1672
        %v1791 = vpop.f32.mrf.mxu0
        %v1792 = vadd.f32 0.0, %v1791
        %v1793 = vpop.f32.mrf.mxu0
        %v1794 = vadd.f32 0.0, %v1793
        %1795 = vmatmul.bf16.gmra.mxu0 %v1673
        %v1796 = vpop.f32.mrf.mxu0
        %v1797 = vadd.f32 0.0, %v1796
        %v1798 = vpop.f32.mrf.mxu0
        %v1799 = vadd.f32 0.0, %v1798
        %1800 = vmatmul.bf16.gmra.mxu0 %v1674
        %v1801 = vpop.f32.mrf.mxu0
        %v1802 = vadd.f32 0.0, %v1801
        %v1803 = vpop.f32.mrf.mxu0
        %v1804 = vadd.f32 0.0, %v1803
        %1805 = vmatmul.bf16.gmra.mxu0 %v1675
        %v1806 = vpop.f32.mrf.mxu0
        %v1807 = vadd.f32 0.0, %v1806
        %v1808 = vpop.f32.mrf.mxu0
        %v1809 = vadd.f32 0.0, %v1808
        %1810 = vmatmul.bf16.gmra.mxu0 %v1676
        %v1811 = vpop.f32.mrf.mxu0
        %v1812 = vadd.f32 0.0, %v1811
        %v1813 = vpop.f32.mrf.mxu0
        %v1814 = vadd.f32 0.0, %v1813
        %1815 = vmatmul.bf16.gmra.mxu0 %v1677
        %v1816 = vpop.f32.mrf.mxu0
        %v1817 = vadd.f32 0.0, %v1816
        %v1818 = vpop.f32.mrf.mxu0
        %v1819 = vadd.f32 0.0, %v1818
        %1820 = vmatmul.bf16.gmra.mxu0 %v1678
        %v1821 = vpop.f32.mrf.mxu0
        %v1822 = vadd.f32 0.0, %v1821
        %v1823 = vpop.f32.mrf.mxu0
        %v1824 = vadd.f32 0.0, %v1823
        %1825 = vdwg.mxu0
        %v1826 = vadd.f32 %v1523, %v1752
        %v1827 = vadd.f32 %v1524, %v1754
        %v1828 = vadd.f32 %v1525, %v1757
        %v1829 = vadd.f32 %v1526, %v1759
        %v1830 = vadd.f32 %v1527, %v1762
        %v1831 = vadd.f32 %v1528, %v1764
        %v1832 = vadd.f32 %v1529, %v1767
        %v1833 = vadd.f32 %v1530, %v1769
        %v1834 = vadd.f32 %v1531, %v1772
        %v1835 = vadd.f32 %v1532, %v1774
        %v1836 = vadd.f32 %v1533, %v1777
        %v1837 = vadd.f32 %v1534, %v1779
        %v1838 = vadd.f32 %v1535, %v1782
        %v1839 = vadd.f32 %v1536, %v1784
        %v1840 = vadd.f32 %v1537, %v1787
        %v1841 = vadd.f32 %v1538, %v1789
        %v1842 = vadd.f32 %v1539, %v1792
        %v1843 = vadd.f32 %v1540, %v1794
        %v1844 = vadd.f32 %v1541, %v1797
        %v1845 = vadd.f32 %v1542, %v1799
        %v1846 = vadd.f32 %v1543, %v1802
        %v1847 = vadd.f32 %v1544, %v1804
        %v1848 = vadd.f32 %v1545, %v1807
        %v1849 = vadd.f32 %v1546, %v1809
        %v1850 = vadd.f32 %v1547, %v1812
        %v1851 = vadd.f32 %v1548, %v1814
        %v1852 = vadd.f32 %v1549, %v1817
        %v1853 = vadd.f32 %v1550, %v1819
        %v1854 = vadd.f32 %v1551, %v1822
        %v1855 = vadd.f32 %v1552, %v1824
        %v1856 = vld [vmem:[%s1556] sm:$0xf]
        %v1857 = vld [vmem:[%s1556 + $0x4] sm:$0xf]
        %v1858 = vld [vmem:[%s1556 + $0x8] sm:$0xf]
        %v1859 = vld [vmem:[%s1556 + $0xc] sm:$0x1]
        %v1860 = vld [vmem:[%s1556 + $0x10] sm:$0xf]
        %v1861 = vld [vmem:[%s1556 + $0x14] sm:$0xf]
        %v1862 = vld [vmem:[%s1556 + $0x18] sm:$0xf]
        %v1863 = vld [vmem:[%s1556 + $0x1c] sm:$0x1]
        %v1864 = vld [vmem:[%s1556 + $0x20] sm:$0xf]
        %v1865 = vld [vmem:[%s1556 + $0x24] sm:$0xf]
        %v1866 = vld [vmem:[%s1556 + $0x28] sm:$0xf]
        %v1867 = vld [vmem:[%s1556 + $0x2c] sm:$0x1]
        %v1868 = vld [vmem:[%s1556 + $0x30] sm:$0xf]
        %v1869 = vld [vmem:[%s1556 + $0x34] sm:$0xf]
        %v1870 = vld [vmem:[%s1556 + $0x38] sm:$0xf]
        %v1871 = vld [vmem:[%s1556 + $0x3c] sm:$0x1]
        %v1872 = vld [vmem:[%s1556 + $0x40] sm:$0xf]
        %v1873 = vld [vmem:[%s1556 + $0x44] sm:$0xf]
        %v1874 = vld [vmem:[%s1556 + $0x48] sm:$0xf]
        %v1875 = vld [vmem:[%s1556 + $0x4c] sm:$0x1]
        %v1876 = vld [vmem:[%s1556 + $0x50] sm:$0xf]
        %v1877 = vld [vmem:[%s1556 + $0x54] sm:$0xf]
        %v1878 = vld [vmem:[%s1556 + $0x58] sm:$0xf]
        %v1879 = vld [vmem:[%s1556 + $0x5c] sm:$0x1]
        %v1880 = vld [vmem:[%s1556 + $0x60] sm:$0xf]
        %v1881 = vld [vmem:[%s1556 + $0x64] sm:$0xf]
        %v1882 = vld [vmem:[%s1556 + $0x68] sm:$0xf]
        %v1883 = vld [vmem:[%s1556 + $0x6c] sm:$0x1]
        %v1884 = vld [vmem:[%s1556 + $0x70] sm:$0xf]
        %v1885 = vld [vmem:[%s1556 + $0x74] sm:$0xf]
        %v1886 = vld [vmem:[%s1556 + $0x78] sm:$0xf]
        %v1887 = vld [vmem:[%s1556 + $0x7c] sm:$0x1]
        %v1888 = vld [vmem:[%s1556 + $0x80] sm:$0xf]
        %v1889 = vld [vmem:[%s1556 + $0x84] sm:$0xf]
        %v1890 = vld [vmem:[%s1556 + $0x88] sm:$0xf]
        %v1891 = vld [vmem:[%s1556 + $0x8c] sm:$0x1]
        %v1892 = vld [vmem:[%s1556 + $0x90] sm:$0xf]
        %v1893 = vld [vmem:[%s1556 + $0x94] sm:$0xf]
        %v1894 = vld [vmem:[%s1556 + $0x98] sm:$0xf]
        %v1895 = vld [vmem:[%s1556 + $0x9c] sm:$0x1]
        %v1897 = vshrl.u32 %v1856, 16
        %v1899 = vrot.slane %v1897, 4
        %v1900 = vshll.u32 %v1856, 16
        %v1902 = vrot.slane %v1900, 5
        %v1903 = vor.u32 %v1899, %v1902
        %v1904 = vrot.slane %v1903, 4
        %v1906 = vshll.u32 %v1857, 16
        %v1908 = vrot.slane %v1906, 5
        %v1909 = vsel %vm409, %v1904, %v1908
        %v1910 = vshrl.u32 %v1857, 16
        %v1912 = vrot.slane %v1910, 4
        %v1913 = vor.u32 %v1912, %v1908
        %v1914 = vrot.slane %v1913, 4
        %v1916 = vshll.u32 %v1858, 16
        %v1918 = vrot.slane %v1916, 5
        %v1919 = vsel %vm409, %v1914, %v1918
        %v1920 = vshrl.u32 %v1858, 16
        %v1922 = vrot.slane %v1920, 4
        %v1923 = vor.u32 %v1922, %v1918
        %v1924 = vrot.slane %v1923, 4
        %v1926 = vshll.u32 %v1859, 16
        %v1928 = vrot.slane %v1926, 5
        %v1929 = vsel %vm409, %v1924, %v1928
        %v1931 = vshrl.u32 %v1860, 16
        %v1933 = vrot.slane %v1931, 4
        %v1934 = vshll.u32 %v1860, 16
        %v1936 = vrot.slane %v1934, 5
        %v1937 = vor.u32 %v1933, %v1936
        %v1938 = vrot.slane %v1937, 4
        %v1940 = vshll.u32 %v1861, 16
        %v1942 = vrot.slane %v1940, 5
        %v1943 = vsel %vm409, %v1938, %v1942
        %v1944 = vshrl.u32 %v1861, 16
        %v1946 = vrot.slane %v1944, 4
        %v1947 = vor.u32 %v1946, %v1942
        %v1948 = vrot.slane %v1947, 4
        %v1950 = vshll.u32 %v1862, 16
        %v1952 = vrot.slane %v1950, 5
        %v1953 = vsel %vm409, %v1948, %v1952
        %v1954 = vshrl.u32 %v1862, 16
        %v1956 = vrot.slane %v1954, 4
        %v1957 = vor.u32 %v1956, %v1952
        %v1958 = vrot.slane %v1957, 4
        %v1960 = vshll.u32 %v1863, 16
        %v1962 = vrot.slane %v1960, 5
        %v1963 = vsel %vm409, %v1958, %v1962
        %v1965 = vshrl.u32 %v1864, 16
        %v1967 = vrot.slane %v1965, 4
        %v1968 = vshll.u32 %v1864, 16
        %v1970 = vrot.slane %v1968, 5
        %v1971 = vor.u32 %v1967, %v1970
        %v1972 = vrot.slane %v1971, 4
        %v1974 = vshll.u32 %v1865, 16
        %v1976 = vrot.slane %v1974, 5
        %v1977 = vsel %vm409, %v1972, %v1976
        %v1978 = vshrl.u32 %v1865, 16
        %v1980 = vrot.slane %v1978, 4
        %v1981 = vor.u32 %v1980, %v1976
        %v1982 = vrot.slane %v1981, 4
        %v1984 = vshll.u32 %v1866, 16
        %v1986 = vrot.slane %v1984, 5
        %v1987 = vsel %vm409, %v1982, %v1986
        %v1988 = vshrl.u32 %v1866, 16
        %v1990 = vrot.slane %v1988, 4
        %v1991 = vor.u32 %v1990, %v1986
        %v1992 = vrot.slane %v1991, 4
        %v1994 = vshll.u32 %v1867, 16
        %v1996 = vrot.slane %v1994, 5
        %v1997 = vsel %vm409, %v1992, %v1996
        %v1999 = vshrl.u32 %v1868, 16
        %v2001 = vrot.slane %v1999, 4
        %v2002 = vshll.u32 %v1868, 16
        %v2004 = vrot.slane %v2002, 5
        %v2005 = vor.u32 %v2001, %v2004
        %v2006 = vrot.slane %v2005, 4
        %v2008 = vshll.u32 %v1869, 16
        %v2010 = vrot.slane %v2008, 5
        %v2011 = vsel %vm409, %v2006, %v2010
        %v2012 = vshrl.u32 %v1869, 16
        %v2014 = vrot.slane %v2012, 4
        %v2015 = vor.u32 %v2014, %v2010
        %v2016 = vrot.slane %v2015, 4
        %v2018 = vshll.u32 %v1870, 16
        %v2020 = vrot.slane %v2018, 5
        %v2021 = vsel %vm409, %v2016, %v2020
        %v2022 = vshrl.u32 %v1870, 16
        %v2024 = vrot.slane %v2022, 4
        %v2025 = vor.u32 %v2024, %v2020
        %v2026 = vrot.slane %v2025, 4
        %v2028 = vshll.u32 %v1871, 16
        %v2030 = vrot.slane %v2028, 5
        %v2031 = vsel %vm409, %v2026, %v2030
        %v2033 = vshrl.u32 %v1872, 16
        %v2035 = vrot.slane %v2033, 4
        %v2036 = vshll.u32 %v1872, 16
        %v2038 = vrot.slane %v2036, 5
        %v2039 = vor.u32 %v2035, %v2038
        %v2040 = vrot.slane %v2039, 4
        %v2042 = vshll.u32 %v1873, 16
        %v2044 = vrot.slane %v2042, 5
        %v2045 = vsel %vm409, %v2040, %v2044
        %v2046 = vshrl.u32 %v1873, 16
        %v2048 = vrot.slane %v2046, 4
        %v2049 = vor.u32 %v2048, %v2044
        %v2050 = vrot.slane %v2049, 4
        %v2052 = vshll.u32 %v1874, 16
        %v2054 = vrot.slane %v2052, 5
        %v2055 = vsel %vm409, %v2050, %v2054
        %v2056 = vshrl.u32 %v1874, 16
        %v2058 = vrot.slane %v2056, 4
        %v2059 = vor.u32 %v2058, %v2054
        %v2060 = vrot.slane %v2059, 4
        %v2062 = vshll.u32 %v1875, 16
        %v2064 = vrot.slane %v2062, 5
        %v2065 = vsel %vm409, %v2060, %v2064
        %v2067 = vshrl.u32 %v1876, 16
        %v2069 = vrot.slane %v2067, 4
        %v2070 = vshll.u32 %v1876, 16
        %v2072 = vrot.slane %v2070, 5
        %v2073 = vor.u32 %v2069, %v2072
        %v2074 = vrot.slane %v2073, 4
        %v2076 = vshll.u32 %v1877, 16
        %v2078 = vrot.slane %v2076, 5
        %v2079 = vsel %vm409, %v2074, %v2078
        %v2080 = vshrl.u32 %v1877, 16
        %v2082 = vrot.slane %v2080, 4
        %v2083 = vor.u32 %v2082, %v2078
        %v2084 = vrot.slane %v2083, 4
        %v2086 = vshll.u32 %v1878, 16
        %v2088 = vrot.slane %v2086, 5
        %v2089 = vsel %vm409, %v2084, %v2088
        %v2090 = vshrl.u32 %v1878, 16
        %v2092 = vrot.slane %v2090, 4
        %v2093 = vor.u32 %v2092, %v2088
        %v2094 = vrot.slane %v2093, 4
        %v2096 = vshll.u32 %v1879, 16
        %v2098 = vrot.slane %v2096, 5
        %v2099 = vsel %vm409, %v2094, %v2098
        %v2101 = vshrl.u32 %v1880, 16
        %v2103 = vrot.slane %v2101, 4
        %v2104 = vshll.u32 %v1880, 16
        %v2106 = vrot.slane %v2104, 5
        %v2107 = vor.u32 %v2103, %v2106
        %v2108 = vrot.slane %v2107, 4
        %v2110 = vshll.u32 %v1881, 16
        %v2112 = vrot.slane %v2110, 5
        %v2113 = vsel %vm409, %v2108, %v2112
        %v2114 = vshrl.u32 %v1881, 16
        %v2116 = vrot.slane %v2114, 4
        %v2117 = vor.u32 %v2116, %v2112
        %v2118 = vrot.slane %v2117, 4
        %v2120 = vshll.u32 %v1882, 16
        %v2122 = vrot.slane %v2120, 5
        %v2123 = vsel %vm409, %v2118, %v2122
        %v2124 = vshrl.u32 %v1882, 16
        %v2126 = vrot.slane %v2124, 4
        %v2127 = vor.u32 %v2126, %v2122
        %v2128 = vrot.slane %v2127, 4
        %v2130 = vshll.u32 %v1883, 16
        %v2132 = vrot.slane %v2130, 5
        %v2133 = vsel %vm409, %v2128, %v2132
        %v2135 = vshrl.u32 %v1884, 16
        %v2137 = vrot.slane %v2135, 4
        %v2138 = vshll.u32 %v1884, 16
        %v2140 = vrot.slane %v2138, 5
        %v2141 = vor.u32 %v2137, %v2140
        %v2142 = vrot.slane %v2141, 4
        %v2144 = vshll.u32 %v1885, 16
        %v2146 = vrot.slane %v2144, 5
        %v2147 = vsel %vm409, %v2142, %v2146
        %v2148 = vshrl.u32 %v1885, 16
        %v2150 = vrot.slane %v2148, 4
        %v2151 = vor.u32 %v2150, %v2146
        %v2152 = vrot.slane %v2151, 4
        %v2154 = vshll.u32 %v1886, 16
        %v2156 = vrot.slane %v2154, 5
        %v2157 = vsel %vm409, %v2152, %v2156
        %v2158 = vshrl.u32 %v1886, 16
        %v2160 = vrot.slane %v2158, 4
        %v2161 = vor.u32 %v2160, %v2156
        %v2162 = vrot.slane %v2161, 4
        %v2164 = vshll.u32 %v1887, 16
        %v2166 = vrot.slane %v2164, 5
        %v2167 = vsel %vm409, %v2162, %v2166
        %v2169 = vshrl.u32 %v1888, 16
        %v2171 = vrot.slane %v2169, 4
        %v2172 = vshll.u32 %v1888, 16
        %v2174 = vrot.slane %v2172, 5
        %v2175 = vor.u32 %v2171, %v2174
        %v2176 = vrot.slane %v2175, 4
        %v2178 = vshll.u32 %v1889, 16
        %v2180 = vrot.slane %v2178, 5
        %v2181 = vsel %vm409, %v2176, %v2180
        %v2182 = vshrl.u32 %v1889, 16
        %v2184 = vrot.slane %v2182, 4
        %v2185 = vor.u32 %v2184, %v2180
        %v2186 = vrot.slane %v2185, 4
        %v2188 = vshll.u32 %v1890, 16
        %v2190 = vrot.slane %v2188, 5
        %v2191 = vsel %vm409, %v2186, %v2190
        %v2192 = vshrl.u32 %v1890, 16
        %v2194 = vrot.slane %v2192, 4
        %v2195 = vor.u32 %v2194, %v2190
        %v2196 = vrot.slane %v2195, 4
        %v2198 = vshll.u32 %v1891, 16
        %v2200 = vrot.slane %v2198, 5
        %v2201 = vsel %vm409, %v2196, %v2200
        %v2203 = vshrl.u32 %v1892, 16
        %v2205 = vrot.slane %v2203, 4
        %v2206 = vshll.u32 %v1892, 16
        %v2208 = vrot.slane %v2206, 5
        %v2209 = vor.u32 %v2205, %v2208
        %v2210 = vrot.slane %v2209, 4
        %v2212 = vshll.u32 %v1893, 16
        %v2214 = vrot.slane %v2212, 5
        %v2215 = vsel %vm409, %v2210, %v2214
        %v2216 = vshrl.u32 %v1893, 16
        %v2218 = vrot.slane %v2216, 4
        %v2219 = vor.u32 %v2218, %v2214
        %v2220 = vrot.slane %v2219, 4
        %v2222 = vshll.u32 %v1894, 16
        %v2224 = vrot.slane %v2222, 5
        %v2225 = vsel %vm409, %v2220, %v2224
        %v2226 = vshrl.u32 %v1894, 16
        %v2228 = vrot.slane %v2226, 4
        %v2229 = vor.u32 %v2228, %v2224
        %v2230 = vrot.slane %v2229, 4
        %v2232 = vshll.u32 %v1895, 16
        %v2234 = vrot.slane %v2232, 5
        %v2235 = vsel %vm409, %v2230, %v2234
        %s2236 = scalar_lea.vmem [#allocation6], 256
        %v2237 = vld [vmem:[%s2236] sm:$0xf]
        %v2238 = vld [vmem:[%s2236 + $0x4] sm:$0xf]
        %v2239 = vld [vmem:[%s2236 + $0x8] sm:$0xf]
        %v2240 = vld [vmem:[%s2236 + $0xc] sm:$0xf]
        %v2241 = vld [vmem:[%s2236 + $0x10] sm:$0xf]
        %v2242 = vld [vmem:[%s2236 + $0x14] sm:$0xf]
        %v2243 = vld [vmem:[%s2236 + $0x18] sm:$0xf]
        %v2244 = vld [vmem:[%s2236 + $0x1c] sm:$0xf]
        %v2245 = vld [vmem:[%s2236 + $0x20] sm:$0xf]
        %v2246 = vld [vmem:[%s2236 + $0x24] sm:$0xf]
        %v2247 = vld [vmem:[%s2236 + $0x28] sm:$0xf]
        %v2248 = vld [vmem:[%s2236 + $0x2c] sm:$0xf]
        %v2249 = vld [vmem:[%s2236 + $0x30] sm:$0xf]
        %v2250 = vld [vmem:[%s2236 + $0x34] sm:$0xf]
        %v2251 = vld [vmem:[%s2236 + $0x38] sm:$0xf]
        %v2252 = vld [vmem:[%s2236 + $0x3c] sm:$0xf]
        %v2253 = vunpack.c.l.b16 %v1909
        %v2254 = vunpack.c.l.b16 %v1919
        %v2255 = vunpack.c.l.b16 %v1929
        %v2256 = vunpack.c.l.b16 %v1943
        %v2257 = vunpack.c.l.b16 %v1953
        %v2258 = vunpack.c.l.b16 %v1963
        %v2259 = vunpack.c.l.b16 %v1977
        %v2260 = vunpack.c.l.b16 %v1987
        %v2261 = vunpack.c.l.b16 %v1997
        %v2262 = vunpack.c.l.b16 %v2011
        %v2263 = vunpack.c.l.b16 %v2021
        %v2264 = vunpack.c.l.b16 %v2031
        %v2265 = vunpack.c.l.b16 %v2045
        %v2266 = vunpack.c.l.b16 %v2055
        %v2267 = vunpack.c.l.b16 %v2065
        %v2268 = vunpack.c.l.b16 %v2079
        %v2269 = vunpack.c.l.b16 %v2089
        %v2270 = vunpack.c.l.b16 %v2099
        %v2271 = vunpack.c.l.b16 %v2113
        %v2272 = vunpack.c.l.b16 %v2123
        %v2273 = vunpack.c.l.b16 %v2133
        %v2274 = vunpack.c.l.b16 %v2147
        %v2275 = vunpack.c.l.b16 %v2157
        %v2276 = vunpack.c.l.b16 %v2167
        %v2277 = vunpack.c.l.b16 %v2181
        %v2278 = vunpack.c.l.b16 %v2191
        %v2279 = vunpack.c.l.b16 %v2201
        %v2280 = vunpack.c.l.b16 %v2215
        %v2281 = vunpack.c.l.b16 %v2225
        %v2282 = vunpack.c.l.b16 %v2235
        %v2283 = vpack.c.b16 %v2254, %v2253
        %v2284 = vpack.c.b16 %v2256, %v2255
        %v2285 = vpack.c.b16 %v2258, %v2257
        %v2286 = vpack.c.b16 %v2260, %v2259
        %v2287 = vpack.c.b16 %v2262, %v2261
        %v2288 = vpack.c.b16 %v2264, %v2263
        %v2289 = vpack.c.b16 %v2266, %v2265
        %v2290 = vpack.c.b16 %v2268, %v2267
        %v2291 = vpack.c.b16 %v2270, %v2269
        %v2292 = vpack.c.b16 %v2272, %v2271
        %v2293 = vpack.c.b16 %v2274, %v2273
        %v2294 = vpack.c.b16 %v2276, %v2275
        %v2295 = vpack.c.b16 %v2278, %v2277
        %v2296 = vpack.c.b16 %v2280, %v2279
        %v2297 = vpack.c.b16 %v2282, %v2281
        %v2329 = vunpack.c.l.b16 %v2237
        %v2330 = vunpack.c.l.b16 %v2238
        %v2331 = vunpack.c.l.b16 %v2239
        %v2332 = vunpack.c.l.b16 %v2240
        %v2333 = vunpack.c.l.b16 %v2241
        %v2334 = vunpack.c.l.b16 %v2242
        %v2335 = vunpack.c.l.b16 %v2243
        %v2336 = vunpack.c.l.b16 %v2244
        %v2337 = vunpack.c.l.b16 %v2245
        %v2338 = vunpack.c.l.b16 %v2246
        %v2339 = vunpack.c.l.b16 %v2247
        %v2340 = vunpack.c.l.b16 %v2248
        %v2341 = vunpack.c.l.b16 %v2249
        %v2342 = vunpack.c.l.b16 %v2250
        %v2343 = vunpack.c.l.b16 %v2251
        %v2344 = vunpack.c.l.b16 %v2252
        %v2345 = vpack.c.b16 %v2330, %v2329
        %v2346 = vpack.c.b16 %v2332, %v2331
        %v2347 = vpack.c.b16 %v2334, %v2333
        %v2348 = vpack.c.b16 %v2336, %v2335
        %v2349 = vpack.c.b16 %v2338, %v2337
        %v2350 = vpack.c.b16 %v2340, %v2339
        %v2351 = vpack.c.b16 %v2342, %v2341
        %v2352 = vpack.c.b16 %v2344, %v2343
        %2361 = vmatpush.bf16.msra.mxu0 %v2352
        %2362 = vmatpush.bf16.msra.mxu0 %v2351
        %2363 = vmatpush.bf16.msra.mxu0 %v2350
        %2364 = vmatpush.bf16.msra.mxu0 %v2349
        %2365 = vmatpush.bf16.msra.mxu0 %v2348
        %2366 = vmatpush.bf16.msra.mxu0 %v2347
        %2367 = vmatpush.bf16.msra.mxu0 %v2346
        %2368 = vmatpush.bf16.msra.mxu0 %v2345
        %2369 = vmatmul.bf16.gmra.mxu0 %v2283
        %v2370 = vpop.f32.mrf.mxu0
        %v2371 = vadd.f32 0.0, %v2370
        %v2372 = vpop.f32.mrf.mxu0
        %v2373 = vadd.f32 0.0, %v2372
        %2374 = vmatmul.bf16.gmra.mxu0 %v2284
        %v2375 = vpop.f32.mrf.mxu0
        %v2376 = vadd.f32 0.0, %v2375
        %v2377 = vpop.f32.mrf.mxu0
        %v2378 = vadd.f32 0.0, %v2377
        %2379 = vmatmul.bf16.gmra.mxu0 %v2285
        %v2380 = vpop.f32.mrf.mxu0
        %v2381 = vadd.f32 0.0, %v2380
        %v2382 = vpop.f32.mrf.mxu0
        %v2383 = vadd.f32 0.0, %v2382
        %2384 = vmatmul.bf16.gmra.mxu0 %v2286
        %v2385 = vpop.f32.mrf.mxu0
        %v2386 = vadd.f32 0.0, %v2385
        %v2387 = vpop.f32.mrf.mxu0
        %v2388 = vadd.f32 0.0, %v2387
        %2389 = vmatmul.bf16.gmra.mxu0 %v2287
        %v2390 = vpop.f32.mrf.mxu0
        %v2391 = vadd.f32 0.0, %v2390
        %v2392 = vpop.f32.mrf.mxu0
        %v2393 = vadd.f32 0.0, %v2392
        %2394 = vmatmul.bf16.gmra.mxu0 %v2288
        %v2395 = vpop.f32.mrf.mxu0
        %v2396 = vadd.f32 0.0, %v2395
        %v2397 = vpop.f32.mrf.mxu0
        %v2398 = vadd.f32 0.0, %v2397
        %2399 = vmatmul.bf16.gmra.mxu0 %v2289
        %v2400 = vpop.f32.mrf.mxu0
        %v2401 = vadd.f32 0.0, %v2400
        %v2402 = vpop.f32.mrf.mxu0
        %v2403 = vadd.f32 0.0, %v2402
        %2404 = vmatmul.bf16.gmra.mxu0 %v2290
        %v2405 = vpop.f32.mrf.mxu0
        %v2406 = vadd.f32 0.0, %v2405
        %v2407 = vpop.f32.mrf.mxu0
        %v2408 = vadd.f32 0.0, %v2407
        %2409 = vmatmul.bf16.gmra.mxu0 %v2291
        %v2410 = vpop.f32.mrf.mxu0
        %v2411 = vadd.f32 0.0, %v2410
        %v2412 = vpop.f32.mrf.mxu0
        %v2413 = vadd.f32 0.0, %v2412
        %2414 = vmatmul.bf16.gmra.mxu0 %v2292
        %v2415 = vpop.f32.mrf.mxu0
        %v2416 = vadd.f32 0.0, %v2415
        %v2417 = vpop.f32.mrf.mxu0
        %v2418 = vadd.f32 0.0, %v2417
        %2419 = vmatmul.bf16.gmra.mxu0 %v2293
        %v2420 = vpop.f32.mrf.mxu0
        %v2421 = vadd.f32 0.0, %v2420
        %v2422 = vpop.f32.mrf.mxu0
        %v2423 = vadd.f32 0.0, %v2422
        %2424 = vmatmul.bf16.gmra.mxu0 %v2294
        %v2425 = vpop.f32.mrf.mxu0
        %v2426 = vadd.f32 0.0, %v2425
        %v2427 = vpop.f32.mrf.mxu0
        %v2428 = vadd.f32 0.0, %v2427
        %2429 = vmatmul.bf16.gmra.mxu0 %v2295
        %v2430 = vpop.f32.mrf.mxu0
        %v2431 = vadd.f32 0.0, %v2430
        %v2432 = vpop.f32.mrf.mxu0
        %v2433 = vadd.f32 0.0, %v2432
        %2434 = vmatmul.bf16.gmra.mxu0 %v2296
        %v2435 = vpop.f32.mrf.mxu0
        %v2436 = vadd.f32 0.0, %v2435
        %v2437 = vpop.f32.mrf.mxu0
        %v2438 = vadd.f32 0.0, %v2437
        %2439 = vmatmul.bf16.gmra.mxu0 %v2297
        %v2440 = vpop.f32.mrf.mxu0
        %v2441 = vadd.f32 0.0, %v2440
        %v2442 = vpop.f32.mrf.mxu0
        %v2443 = vadd.f32 0.0, %v2442
        %2444 = vdwg.mxu0
        %v2445 = vadd.f32 %v1826, %v2371
        %v2446 = vadd.f32 %v1827, %v2373
        %v2447 = vadd.f32 %v1828, %v2376
        %v2448 = vadd.f32 %v1829, %v2378
        %v2449 = vadd.f32 %v1830, %v2381
        %v2450 = vadd.f32 %v1831, %v2383
        %v2451 = vadd.f32 %v1832, %v2386
        %v2452 = vadd.f32 %v1833, %v2388
        %v2453 = vadd.f32 %v1834, %v2391
        %v2454 = vadd.f32 %v1835, %v2393
        %v2455 = vadd.f32 %v1836, %v2396
        %v2456 = vadd.f32 %v1837, %v2398
        %v2457 = vadd.f32 %v1838, %v2401
        %v2458 = vadd.f32 %v1839, %v2403
        %v2459 = vadd.f32 %v1840, %v2406
        %v2460 = vadd.f32 %v1841, %v2408
        %v2461 = vadd.f32 %v1842, %v2411
        %v2462 = vadd.f32 %v1843, %v2413
        %v2463 = vadd.f32 %v1844, %v2416
        %v2464 = vadd.f32 %v1845, %v2418
        %v2465 = vadd.f32 %v1846, %v2421
        %v2466 = vadd.f32 %v1847, %v2423
        %v2467 = vadd.f32 %v1848, %v2426
        %v2468 = vadd.f32 %v1849, %v2428
        %v2469 = vadd.f32 %v1850, %v2431
        %v2470 = vadd.f32 %v1851, %v2433
        %v2471 = vadd.f32 %v1852, %v2436
        %v2472 = vadd.f32 %v1853, %v2438
        %v2473 = vadd.f32 %v1854, %v2441
        %v2474 = vadd.f32 %v1855, %v2443
        %v2475 = vld [vmem:[%s1556] sm:$0xe]
        %v2476 = vld [vmem:[%s1556 + $0x10] sm:$0xe]
        %v2477 = vld [vmem:[%s1556 + $0x20] sm:$0xe]
        %v2478 = vld [vmem:[%s1556 + $0x30] sm:$0xe]
        %v2479 = vld [vmem:[%s1556 + $0x40] sm:$0xe]
        %v2480 = vld [vmem:[%s1556 + $0x50] sm:$0xe]
        %v2481 = vld [vmem:[%s1556 + $0x60] sm:$0xe]
        %v2482 = vld [vmem:[%s1556 + $0x70] sm:$0xe]
        %v2483 = vld [vmem:[%s1556 + $0x80] sm:$0xe]
        %v2484 = vld [vmem:[%s1556 + $0x90] sm:$0xe]
        %v2525 = vrot.slane %v2475, 5
        %v2526 = vrot.slane %v2525, 4
        %v2527 = vrot.slane %v1857, 5
        %v2528 = vsel %vm1213, %v2526, %v2527
        %v2529 = vrot.slane %v2527, 4
        %v2530 = vrot.slane %v1858, 5
        %v2531 = vsel %vm1213, %v2529, %v2530
        %v2532 = vrot.slane %v2530, 4
        %v2533 = vrot.slane %v1859, 5
        %v2534 = vsel %vm1213, %v2532, %v2533
        %v2535 = vrot.slane %v2476, 5
        %v2536 = vrot.slane %v2535, 4
        %v2537 = vrot.slane %v1861, 5
        %v2538 = vsel %vm1213, %v2536, %v2537
        %v2539 = vrot.slane %v2537, 4
        %v2540 = vrot.slane %v1862, 5
        %v2541 = vsel %vm1213, %v2539, %v2540
        %v2542 = vrot.slane %v2540, 4
        %v2543 = vrot.slane %v1863, 5
        %v2544 = vsel %vm1213, %v2542, %v2543
        %v2545 = vrot.slane %v2477, 5
        %v2546 = vrot.slane %v2545, 4
        %v2547 = vrot.slane %v1865, 5
        %v2548 = vsel %vm1213, %v2546, %v2547
        %v2549 = vrot.slane %v2547, 4
        %v2550 = vrot.slane %v1866, 5
        %v2551 = vsel %vm1213, %v2549, %v2550
        %v2552 = vrot.slane %v2550, 4
        %v2553 = vrot.slane %v1867, 5
        %v2554 = vsel %vm1213, %v2552, %v2553
        %v2555 = vrot.slane %v2478, 5
        %v2556 = vrot.slane %v2555, 4
        %v2557 = vrot.slane %v1869, 5
        %v2558 = vsel %vm1213, %v2556, %v2557
        %v2559 = vrot.slane %v2557, 4
        %v2560 = vrot.slane %v1870, 5
        %v2561 = vsel %vm1213, %v2559, %v2560
        %v2562 = vrot.slane %v2560, 4
        %v2563 = vrot.slane %v1871, 5
        %v2564 = vsel %vm1213, %v2562, %v2563
        %v2565 = vrot.slane %v2479, 5
        %v2566 = vrot.slane %v2565, 4
        %v2567 = vrot.slane %v1873, 5
        %v2568 = vsel %vm1213, %v2566, %v2567
        %v2569 = vrot.slane %v2567, 4
        %v2570 = vrot.slane %v1874, 5
        %v2571 = vsel %vm1213, %v2569, %v2570
        %v2572 = vrot.slane %v2570, 4
        %v2573 = vrot.slane %v1875, 5
        %v2574 = vsel %vm1213, %v2572, %v2573
        %v2575 = vrot.slane %v2480, 5
        %v2576 = vrot.slane %v2575, 4
        %v2577 = vrot.slane %v1877, 5
        %v2578 = vsel %vm1213, %v2576, %v2577
        %v2579 = vrot.slane %v2577, 4
        %v2580 = vrot.slane %v1878, 5
        %v2581 = vsel %vm1213, %v2579, %v2580
        %v2582 = vrot.slane %v2580, 4
        %v2583 = vrot.slane %v1879, 5
        %v2584 = vsel %vm1213, %v2582, %v2583
        %v2585 = vrot.slane %v2481, 5
        %v2586 = vrot.slane %v2585, 4
        %v2587 = vrot.slane %v1881, 5
        %v2588 = vsel %vm1213, %v2586, %v2587
        %v2589 = vrot.slane %v2587, 4
        %v2590 = vrot.slane %v1882, 5
        %v2591 = vsel %vm1213, %v2589, %v2590
        %v2592 = vrot.slane %v2590, 4
        %v2593 = vrot.slane %v1883, 5
        %v2594 = vsel %vm1213, %v2592, %v2593
        %v2595 = vrot.slane %v2482, 5
        %v2596 = vrot.slane %v2595, 4
        %v2597 = vrot.slane %v1885, 5
        %v2598 = vsel %vm1213, %v2596, %v2597
        %v2599 = vrot.slane %v2597, 4
        %v2600 = vrot.slane %v1886, 5
        %v2601 = vsel %vm1213, %v2599, %v2600
        %v2602 = vrot.slane %v2600, 4
        %v2603 = vrot.slane %v1887, 5
        %v2604 = vsel %vm1213, %v2602, %v2603
        %v2605 = vrot.slane %v2483, 5
        %v2606 = vrot.slane %v2605, 4
        %v2607 = vrot.slane %v1889, 5
        %v2608 = vsel %vm1213, %v2606, %v2607
        %v2609 = vrot.slane %v2607, 4
        %v2610 = vrot.slane %v1890, 5
        %v2611 = vsel %vm1213, %v2609, %v2610
        %v2612 = vrot.slane %v2610, 4
        %v2613 = vrot.slane %v1891, 5
        %v2614 = vsel %vm1213, %v2612, %v2613
        %v2615 = vrot.slane %v2484, 5
        %v2616 = vrot.slane %v2615, 4
        %v2617 = vrot.slane %v1893, 5
        %v2618 = vsel %vm1213, %v2616, %v2617
        %v2619 = vrot.slane %v2617, 4
        %v2620 = vrot.slane %v1894, 5
        %v2621 = vsel %vm1213, %v2619, %v2620
        %v2622 = vrot.slane %v2620, 4
        %v2623 = vrot.slane %v1895, 5
        %v2624 = vsel %vm1213, %v2622, %v2623
        %s2625 = scalar_lea.vmem [#allocation6], 320
        %v2626 = vld [vmem:[%s2625] sm:$0xf]
        %v2627 = vld [vmem:[%s2625 + $0x4] sm:$0xf]
        %v2628 = vld [vmem:[%s2625 + $0x8] sm:$0xf]
        %v2629 = vld [vmem:[%s2625 + $0xc] sm:$0xf]
        %v2630 = vld [vmem:[%s2625 + $0x10] sm:$0xf]
        %v2631 = vld [vmem:[%s2625 + $0x14] sm:$0xf]
        %v2632 = vld [vmem:[%s2625 + $0x18] sm:$0xf]
        %v2633 = vld [vmem:[%s2625 + $0x1c] sm:$0xf]
        %v2634 = vld [vmem:[%s2625 + $0x20] sm:$0xf]
        %v2635 = vld [vmem:[%s2625 + $0x24] sm:$0xf]
        %v2636 = vld [vmem:[%s2625 + $0x28] sm:$0xf]
        %v2637 = vld [vmem:[%s2625 + $0x2c] sm:$0xf]
        %v2638 = vld [vmem:[%s2625 + $0x30] sm:$0xf]
        %v2639 = vld [vmem:[%s2625 + $0x34] sm:$0xf]
        %v2640 = vld [vmem:[%s2625 + $0x38] sm:$0xf]
        %v2641 = vld [vmem:[%s2625 + $0x3c] sm:$0xf]
        %v2642 = vunpack.c.l.b16 %v2528
        %v2643 = vunpack.c.l.b16 %v2531
        %v2644 = vunpack.c.l.b16 %v2534
        %v2645 = vunpack.c.l.b16 %v2538
        %v2646 = vunpack.c.l.b16 %v2541
        %v2647 = vunpack.c.l.b16 %v2544
        %v2648 = vunpack.c.l.b16 %v2548
        %v2649 = vunpack.c.l.b16 %v2551
        %v2650 = vunpack.c.l.b16 %v2554
        %v2651 = vunpack.c.l.b16 %v2558
        %v2652 = vunpack.c.l.b16 %v2561
        %v2653 = vunpack.c.l.b16 %v2564
        %v2654 = vunpack.c.l.b16 %v2568
        %v2655 = vunpack.c.l.b16 %v2571
        %v2656 = vunpack.c.l.b16 %v2574
        %v2657 = vunpack.c.l.b16 %v2578
        %v2658 = vunpack.c.l.b16 %v2581
        %v2659 = vunpack.c.l.b16 %v2584
        %v2660 = vunpack.c.l.b16 %v2588
        %v2661 = vunpack.c.l.b16 %v2591
        %v2662 = vunpack.c.l.b16 %v2594
        %v2663 = vunpack.c.l.b16 %v2598
        %v2664 = vunpack.c.l.b16 %v2601
        %v2665 = vunpack.c.l.b16 %v2604
        %v2666 = vunpack.c.l.b16 %v2608
        %v2667 = vunpack.c.l.b16 %v2611
        %v2668 = vunpack.c.l.b16 %v2614
        %v2669 = vunpack.c.l.b16 %v2618
        %v2670 = vunpack.c.l.b16 %v2621
        %v2671 = vunpack.c.l.b16 %v2624
        %v2672 = vpack.c.b16 %v2643, %v2642
        %v2673 = vpack.c.b16 %v2645, %v2644
        %v2674 = vpack.c.b16 %v2647, %v2646
        %v2675 = vpack.c.b16 %v2649, %v2648
        %v2676 = vpack.c.b16 %v2651, %v2650
        %v2677 = vpack.c.b16 %v2653, %v2652
        %v2678 = vpack.c.b16 %v2655, %v2654
        %v2679 = vpack.c.b16 %v2657, %v2656
        %v2680 = vpack.c.b16 %v2659, %v2658
        %v2681 = vpack.c.b16 %v2661, %v2660
        %v2682 = vpack.c.b16 %v2663, %v2662
        %v2683 = vpack.c.b16 %v2665, %v2664
        %v2684 = vpack.c.b16 %v2667, %v2666
        %v2685 = vpack.c.b16 %v2669, %v2668
        %v2686 = vpack.c.b16 %v2671, %v2670
        %v2718 = vunpack.c.l.b16 %v2626
        %v2719 = vunpack.c.l.b16 %v2627
        %v2720 = vunpack.c.l.b16 %v2628
        %v2721 = vunpack.c.l.b16 %v2629
        %v2722 = vunpack.c.l.b16 %v2630
        %v2723 = vunpack.c.l.b16 %v2631
        %v2724 = vunpack.c.l.b16 %v2632
        %v2725 = vunpack.c.l.b16 %v2633
        %v2726 = vunpack.c.l.b16 %v2634
        %v2727 = vunpack.c.l.b16 %v2635
        %v2728 = vunpack.c.l.b16 %v2636
        %v2729 = vunpack.c.l.b16 %v2637
        %v2730 = vunpack.c.l.b16 %v2638
        %v2731 = vunpack.c.l.b16 %v2639
        %v2732 = vunpack.c.l.b16 %v2640
        %v2733 = vunpack.c.l.b16 %v2641
        %v2734 = vpack.c.b16 %v2719, %v2718
        %v2735 = vpack.c.b16 %v2721, %v2720
        %v2736 = vpack.c.b16 %v2723, %v2722
        %v2737 = vpack.c.b16 %v2725, %v2724
        %v2738 = vpack.c.b16 %v2727, %v2726
        %v2739 = vpack.c.b16 %v2729, %v2728
        %v2740 = vpack.c.b16 %v2731, %v2730
        %v2741 = vpack.c.b16 %v2733, %v2732
        %2750 = vmatpush.bf16.msra.mxu0 %v2741
        %2751 = vmatpush.bf16.msra.mxu0 %v2740
        %2752 = vmatpush.bf16.msra.mxu0 %v2739
        %2753 = vmatpush.bf16.msra.mxu0 %v2738
        %2754 = vmatpush.bf16.msra.mxu0 %v2737
        %2755 = vmatpush.bf16.msra.mxu0 %v2736
        %2756 = vmatpush.bf16.msra.mxu0 %v2735
        %2757 = vmatpush.bf16.msra.mxu0 %v2734
        %2758 = vmatmul.bf16.gmra.mxu0 %v2672
        %v2759 = vpop.f32.mrf.mxu0
        %v2760 = vadd.f32 0.0, %v2759
        %v2761 = vpop.f32.mrf.mxu0
        %v2762 = vadd.f32 0.0, %v2761
        %2763 = vmatmul.bf16.gmra.mxu0 %v2673
        %v2764 = vpop.f32.mrf.mxu0
        %v2765 = vadd.f32 0.0, %v2764
        %v2766 = vpop.f32.mrf.mxu0
        %v2767 = vadd.f32 0.0, %v2766
        %2768 = vmatmul.bf16.gmra.mxu0 %v2674
        %v2769 = vpop.f32.mrf.mxu0
        %v2770 = vadd.f32 0.0, %v2769
        %v2771 = vpop.f32.mrf.mxu0
        %v2772 = vadd.f32 0.0, %v2771
        %2773 = vmatmul.bf16.gmra.mxu0 %v2675
        %v2774 = vpop.f32.mrf.mxu0
        %v2775 = vadd.f32 0.0, %v2774
        %v2776 = vpop.f32.mrf.mxu0
        %v2777 = vadd.f32 0.0, %v2776
        %2778 = vmatmul.bf16.gmra.mxu0 %v2676
        %v2779 = vpop.f32.mrf.mxu0
        %v2780 = vadd.f32 0.0, %v2779
        %v2781 = vpop.f32.mrf.mxu0
        %v2782 = vadd.f32 0.0, %v2781
        %2783 = vmatmul.bf16.gmra.mxu0 %v2677
        %v2784 = vpop.f32.mrf.mxu0
        %v2785 = vadd.f32 0.0, %v2784
        %v2786 = vpop.f32.mrf.mxu0
        %v2787 = vadd.f32 0.0, %v2786
        %2788 = vmatmul.bf16.gmra.mxu0 %v2678
        %v2789 = vpop.f32.mrf.mxu0
        %v2790 = vadd.f32 0.0, %v2789
        %v2791 = vpop.f32.mrf.mxu0
        %v2792 = vadd.f32 0.0, %v2791
        %2793 = vmatmul.bf16.gmra.mxu0 %v2679
        %v2794 = vpop.f32.mrf.mxu0
        %v2795 = vadd.f32 0.0, %v2794
        %v2796 = vpop.f32.mrf.mxu0
        %v2797 = vadd.f32 0.0, %v2796
        %2798 = vmatmul.bf16.gmra.mxu0 %v2680
        %v2799 = vpop.f32.mrf.mxu0
        %v2800 = vadd.f32 0.0, %v2799
        %v2801 = vpop.f32.mrf.mxu0
        %v2802 = vadd.f32 0.0, %v2801
        %2803 = vmatmul.bf16.gmra.mxu0 %v2681
        %v2804 = vpop.f32.mrf.mxu0
        %v2805 = vadd.f32 0.0, %v2804
        %v2806 = vpop.f32.mrf.mxu0
        %v2807 = vadd.f32 0.0, %v2806
        %2808 = vmatmul.bf16.gmra.mxu0 %v2682
        %v2809 = vpop.f32.mrf.mxu0
        %v2810 = vadd.f32 0.0, %v2809
        %v2811 = vpop.f32.mrf.mxu0
        %v2812 = vadd.f32 0.0, %v2811
        %2813 = vmatmul.bf16.gmra.mxu0 %v2683
        %v2814 = vpop.f32.mrf.mxu0
        %v2815 = vadd.f32 0.0, %v2814
        %v2816 = vpop.f32.mrf.mxu0
        %v2817 = vadd.f32 0.0, %v2816
        %2818 = vmatmul.bf16.gmra.mxu0 %v2684
        %v2819 = vpop.f32.mrf.mxu0
        %v2820 = vadd.f32 0.0, %v2819
        %v2821 = vpop.f32.mrf.mxu0
        %v2822 = vadd.f32 0.0, %v2821
        %2823 = vmatmul.bf16.gmra.mxu0 %v2685
        %v2824 = vpop.f32.mrf.mxu0
        %v2825 = vadd.f32 0.0, %v2824
        %v2826 = vpop.f32.mrf.mxu0
        %v2827 = vadd.f32 0.0, %v2826
        %2828 = vmatmul.bf16.gmra.mxu0 %v2686
        %v2829 = vpop.f32.mrf.mxu0
        %v2830 = vadd.f32 0.0, %v2829
        %v2831 = vpop.f32.mrf.mxu0
        %v2832 = vadd.f32 0.0, %v2831
        %2833 = vdwg.mxu0
        %v2834 = vadd.f32 %v2445, %v2760
        %v2835 = vadd.f32 %v2446, %v2762
        %v2836 = vadd.f32 %v2447, %v2765
        %v2837 = vadd.f32 %v2448, %v2767
        %v2838 = vadd.f32 %v2449, %v2770
        %v2839 = vadd.f32 %v2450, %v2772
        %v2840 = vadd.f32 %v2451, %v2775
        %v2841 = vadd.f32 %v2452, %v2777
        %v2842 = vadd.f32 %v2453, %v2780
        %v2843 = vadd.f32 %v2454, %v2782
        %v2844 = vadd.f32 %v2455, %v2785
        %v2845 = vadd.f32 %v2456, %v2787
        %v2846 = vadd.f32 %v2457, %v2790
        %v2847 = vadd.f32 %v2458, %v2792
        %v2848 = vadd.f32 %v2459, %v2795
        %v2849 = vadd.f32 %v2460, %v2797
        %v2850 = vadd.f32 %v2461, %v2800
        %v2851 = vadd.f32 %v2462, %v2802
        %v2852 = vadd.f32 %v2463, %v2805
        %v2853 = vadd.f32 %v2464, %v2807
        %v2854 = vadd.f32 %v2465, %v2810
        %v2855 = vadd.f32 %v2466, %v2812
        %v2856 = vadd.f32 %v2467, %v2815
        %v2857 = vadd.f32 %v2468, %v2817
        %v2858 = vadd.f32 %v2469, %v2820
        %v2859 = vadd.f32 %v2470, %v2822
        %v2860 = vadd.f32 %v2471, %v2825
        %v2861 = vadd.f32 %v2472, %v2827
        %v2862 = vadd.f32 %v2473, %v2830
        %v2863 = vadd.f32 %v2474, %v2832
        %s2864 = sadd.s32 %s347, 2
        %s2865 = smul.u32 %s2864, 4
        %s2866 = smul.addr %s2865, 4
        %s2867 = scalar_lea.vmem %s304, %s2866 [#allocation3]
        %v2868 = vld [vmem:[%s2867] sm:$0xf]
        %v2869 = vld [vmem:[%s2867 + $0x4] sm:$0xf]
        %v2870 = vld [vmem:[%s2867 + $0x8] sm:$0xf]
        %v2871 = vld [vmem:[%s2867 + $0x10] sm:$0xf]
        %v2872 = vld [vmem:[%s2867 + $0x14] sm:$0xf]
        %v2873 = vld [vmem:[%s2867 + $0x18] sm:$0xf]
        %v2874 = vld [vmem:[%s2867 + $0x20] sm:$0xf]
        %v2875 = vld [vmem:[%s2867 + $0x24] sm:$0xf]
        %v2876 = vld [vmem:[%s2867 + $0x28] sm:$0xf]
        %v2877 = vld [vmem:[%s2867 + $0x30] sm:$0xf]
        %v2878 = vld [vmem:[%s2867 + $0x34] sm:$0xf]
        %v2879 = vld [vmem:[%s2867 + $0x38] sm:$0xf]
        %v2880 = vld [vmem:[%s2867 + $0x40] sm:$0xf]
        %v2881 = vld [vmem:[%s2867 + $0x44] sm:$0xf]
        %v2882 = vld [vmem:[%s2867 + $0x48] sm:$0xf]
        %v2883 = vld [vmem:[%s2867 + $0x50] sm:$0xf]
        %v2884 = vld [vmem:[%s2867 + $0x54] sm:$0xf]
        %v2885 = vld [vmem:[%s2867 + $0x58] sm:$0xf]
        %v2886 = vld [vmem:[%s2867 + $0x60] sm:$0xf]
        %v2887 = vld [vmem:[%s2867 + $0x64] sm:$0xf]
        %v2888 = vld [vmem:[%s2867 + $0x68] sm:$0xf]
        %v2889 = vld [vmem:[%s2867 + $0x70] sm:$0xf]
        %v2890 = vld [vmem:[%s2867 + $0x74] sm:$0xf]
        %v2891 = vld [vmem:[%s2867 + $0x78] sm:$0xf]
        %v2892 = vld [vmem:[%s2867 + $0x80] sm:$0xf]
        %v2893 = vld [vmem:[%s2867 + $0x84] sm:$0xf]
        %v2894 = vld [vmem:[%s2867 + $0x88] sm:$0xf]
        %v2895 = vld [vmem:[%s2867 + $0x90] sm:$0xf]
        %v2896 = vld [vmem:[%s2867 + $0x94] sm:$0xf]
        %v2897 = vld [vmem:[%s2867 + $0x98] sm:$0xf]
        %s2898 = scalar_lea.vmem [#allocation6], 384
        %v2899 = vld [vmem:[%s2898] sm:$0xf]
        %v2900 = vld [vmem:[%s2898 + $0x4] sm:$0xf]
        %v2901 = vld [vmem:[%s2898 + $0x8] sm:$0xf]
        %v2902 = vld [vmem:[%s2898 + $0xc] sm:$0xf]
        %v2903 = vld [vmem:[%s2898 + $0x10] sm:$0xf]
        %v2904 = vld [vmem:[%s2898 + $0x14] sm:$0xf]
        %v2905 = vld [vmem:[%s2898 + $0x18] sm:$0xf]
        %v2906 = vld [vmem:[%s2898 + $0x1c] sm:$0xf]
        %v2907 = vld [vmem:[%s2898 + $0x20] sm:$0xf]
        %v2908 = vld [vmem:[%s2898 + $0x24] sm:$0xf]
        %v2909 = vld [vmem:[%s2898 + $0x28] sm:$0xf]
        %v2910 = vld [vmem:[%s2898 + $0x2c] sm:$0xf]
        %v2911 = vld [vmem:[%s2898 + $0x30] sm:$0xf]
        %v2912 = vld [vmem:[%s2898 + $0x34] sm:$0xf]
        %v2913 = vld [vmem:[%s2898 + $0x38] sm:$0xf]
        %v2914 = vld [vmem:[%s2898 + $0x3c] sm:$0xf]
        %v2945 = vunpack.c.l.b16 %v2868
        %v2946 = vunpack.c.l.b16 %v2869
        %v2947 = vunpack.c.l.b16 %v2870
        %v2948 = vunpack.c.l.b16 %v2871
        %v2949 = vunpack.c.l.b16 %v2872
        %v2950 = vunpack.c.l.b16 %v2873
        %v2951 = vunpack.c.l.b16 %v2874
        %v2952 = vunpack.c.l.b16 %v2875
        %v2953 = vunpack.c.l.b16 %v2876
        %v2954 = vunpack.c.l.b16 %v2877
        %v2955 = vunpack.c.l.b16 %v2878
        %v2956 = vunpack.c.l.b16 %v2879
        %v2957 = vunpack.c.l.b16 %v2880
        %v2958 = vunpack.c.l.b16 %v2881
        %v2959 = vunpack.c.l.b16 %v2882
        %v2960 = vunpack.c.l.b16 %v2883
        %v2961 = vunpack.c.l.b16 %v2884
        %v2962 = vunpack.c.l.b16 %v2885
        %v2963 = vunpack.c.l.b16 %v2886
        %v2964 = vunpack.c.l.b16 %v2887
        %v2965 = vunpack.c.l.b16 %v2888
        %v2966 = vunpack.c.l.b16 %v2889
        %v2967 = vunpack.c.l.b16 %v2890
        %v2968 = vunpack.c.l.b16 %v2891
        %v2969 = vunpack.c.l.b16 %v2892
        %v2970 = vunpack.c.l.b16 %v2893
        %v2971 = vunpack.c.l.b16 %v2894
        %v2972 = vunpack.c.l.b16 %v2895
        %v2973 = vunpack.c.l.b16 %v2896
        %v2974 = vunpack.c.l.b16 %v2897
        %v2975 = vpack.c.b16 %v2946, %v2945
        %v2976 = vpack.c.b16 %v2948, %v2947
        %v2977 = vpack.c.b16 %v2950, %v2949
        %v2978 = vpack.c.b16 %v2952, %v2951
        %v2979 = vpack.c.b16 %v2954, %v2953
        %v2980 = vpack.c.b16 %v2956, %v2955
        %v2981 = vpack.c.b16 %v2958, %v2957
        %v2982 = vpack.c.b16 %v2960, %v2959
        %v2983 = vpack.c.b16 %v2962, %v2961
        %v2984 = vpack.c.b16 %v2964, %v2963
        %v2985 = vpack.c.b16 %v2966, %v2965
        %v2986 = vpack.c.b16 %v2968, %v2967
        %v2987 = vpack.c.b16 %v2970, %v2969
        %v2988 = vpack.c.b16 %v2972, %v2971
        %v2989 = vpack.c.b16 %v2974, %v2973
        %v3021 = vunpack.c.l.b16 %v2899
        %v3022 = vunpack.c.l.b16 %v2900
        %v3023 = vunpack.c.l.b16 %v2901
        %v3024 = vunpack.c.l.b16 %v2902
        %v3025 = vunpack.c.l.b16 %v2903
        %v3026 = vunpack.c.l.b16 %v2904
        %v3027 = vunpack.c.l.b16 %v2905
        %v3028 = vunpack.c.l.b16 %v2906
        %v3029 = vunpack.c.l.b16 %v2907
        %v3030 = vunpack.c.l.b16 %v2908
        %v3031 = vunpack.c.l.b16 %v2909
        %v3032 = vunpack.c.l.b16 %v2910
        %v3033 = vunpack.c.l.b16 %v2911
        %v3034 = vunpack.c.l.b16 %v2912
        %v3035 = vunpack.c.l.b16 %v2913
        %v3036 = vunpack.c.l.b16 %v2914
        %v3037 = vpack.c.b16 %v3022, %v3021
        %v3038 = vpack.c.b16 %v3024, %v3023
        %v3039 = vpack.c.b16 %v3026, %v3025
        %v3040 = vpack.c.b16 %v3028, %v3027
        %v3041 = vpack.c.b16 %v3030, %v3029
        %v3042 = vpack.c.b16 %v3032, %v3031
        %v3043 = vpack.c.b16 %v3034, %v3033
        %v3044 = vpack.c.b16 %v3036, %v3035
        %3053 = vmatpush.bf16.msra.mxu0 %v3044
        %3054 = vmatpush.bf16.msra.mxu0 %v3043
        %3055 = vmatpush.bf16.msra.mxu0 %v3042
        %3056 = vmatpush.bf16.msra.mxu0 %v3041
        %3057 = vmatpush.bf16.msra.mxu0 %v3040
        %3058 = vmatpush.bf16.msra.mxu0 %v3039
        %3059 = vmatpush.bf16.msra.mxu0 %v3038
        %3060 = vmatpush.bf16.msra.mxu0 %v3037
        %3061 = vmatmul.bf16.gmra.mxu0 %v2975
        %v3062 = vpop.f32.mrf.mxu0
        %v3063 = vadd.f32 0.0, %v3062
        %v3064 = vpop.f32.mrf.mxu0
        %v3065 = vadd.f32 0.0, %v3064
        %3066 = vmatmul.bf16.gmra.mxu0 %v2976
        %v3067 = vpop.f32.mrf.mxu0
        %v3068 = vadd.f32 0.0, %v3067
        %v3069 = vpop.f32.mrf.mxu0
        %v3070 = vadd.f32 0.0, %v3069
        %3071 = vmatmul.bf16.gmra.mxu0 %v2977
        %v3072 = vpop.f32.mrf.mxu0
        %v3073 = vadd.f32 0.0, %v3072
        %v3074 = vpop.f32.mrf.mxu0
        %v3075 = vadd.f32 0.0, %v3074
        %3076 = vmatmul.bf16.gmra.mxu0 %v2978
        %v3077 = vpop.f32.mrf.mxu0
        %v3078 = vadd.f32 0.0, %v3077
        %v3079 = vpop.f32.mrf.mxu0
        %v3080 = vadd.f32 0.0, %v3079
        %3081 = vmatmul.bf16.gmra.mxu0 %v2979
        %v3082 = vpop.f32.mrf.mxu0
        %v3083 = vadd.f32 0.0, %v3082
        %v3084 = vpop.f32.mrf.mxu0
        %v3085 = vadd.f32 0.0, %v3084
        %3086 = vmatmul.bf16.gmra.mxu0 %v2980
        %v3087 = vpop.f32.mrf.mxu0
        %v3088 = vadd.f32 0.0, %v3087
        %v3089 = vpop.f32.mrf.mxu0
        %v3090 = vadd.f32 0.0, %v3089
        %3091 = vmatmul.bf16.gmra.mxu0 %v2981
        %v3092 = vpop.f32.mrf.mxu0
        %v3093 = vadd.f32 0.0, %v3092
        %v3094 = vpop.f32.mrf.mxu0
        %v3095 = vadd.f32 0.0, %v3094
        %3096 = vmatmul.bf16.gmra.mxu0 %v2982
        %v3097 = vpop.f32.mrf.mxu0
        %v3098 = vadd.f32 0.0, %v3097
        %v3099 = vpop.f32.mrf.mxu0
        %v3100 = vadd.f32 0.0, %v3099
        %3101 = vmatmul.bf16.gmra.mxu0 %v2983
        %v3102 = vpop.f32.mrf.mxu0
        %v3103 = vadd.f32 0.0, %v3102
        %v3104 = vpop.f32.mrf.mxu0
        %v3105 = vadd.f32 0.0, %v3104
        %3106 = vmatmul.bf16.gmra.mxu0 %v2984
        %v3107 = vpop.f32.mrf.mxu0
        %v3108 = vadd.f32 0.0, %v3107
        %v3109 = vpop.f32.mrf.mxu0
        %v3110 = vadd.f32 0.0, %v3109
        %3111 = vmatmul.bf16.gmra.mxu0 %v2985
        %v3112 = vpop.f32.mrf.mxu0
        %v3113 = vadd.f32 0.0, %v3112
        %v3114 = vpop.f32.mrf.mxu0
        %v3115 = vadd.f32 0.0, %v3114
        %3116 = vmatmul.bf16.gmra.mxu0 %v2986
        %v3117 = vpop.f32.mrf.mxu0
        %v3118 = vadd.f32 0.0, %v3117
        %v3119 = vpop.f32.mrf.mxu0
        %v3120 = vadd.f32 0.0, %v3119
        %3121 = vmatmul.bf16.gmra.mxu0 %v2987
        %v3122 = vpop.f32.mrf.mxu0
        %v3123 = vadd.f32 0.0, %v3122
        %v3124 = vpop.f32.mrf.mxu0
        %v3125 = vadd.f32 0.0, %v3124
        %3126 = vmatmul.bf16.gmra.mxu0 %v2988
        %v3127 = vpop.f32.mrf.mxu0
        %v3128 = vadd.f32 0.0, %v3127
        %v3129 = vpop.f32.mrf.mxu0
        %v3130 = vadd.f32 0.0, %v3129
        %3131 = vmatmul.bf16.gmra.mxu0 %v2989
        %v3132 = vpop.f32.mrf.mxu0
        %v3133 = vadd.f32 0.0, %v3132
        %v3134 = vpop.f32.mrf.mxu0
        %v3135 = vadd.f32 0.0, %v3134
        %3136 = vdwg.mxu0
        %v3137 = vadd.f32 %v2834, %v3063
        %v3138 = vadd.f32 %v2835, %v3065
        %v3139 = vadd.f32 %v2836, %v3068
        %v3140 = vadd.f32 %v2837, %v3070
        %v3141 = vadd.f32 %v2838, %v3073
        %v3142 = vadd.f32 %v2839, %v3075
        %v3143 = vadd.f32 %v2840, %v3078
        %v3144 = vadd.f32 %v2841, %v3080
        %v3145 = vadd.f32 %v2842, %v3083
        %v3146 = vadd.f32 %v2843, %v3085
        %v3147 = vadd.f32 %v2844, %v3088
        %v3148 = vadd.f32 %v2845, %v3090
        %v3149 = vadd.f32 %v2846, %v3093
        %v3150 = vadd.f32 %v2847, %v3095
        %v3151 = vadd.f32 %v2848, %v3098
        %v3152 = vadd.f32 %v2849, %v3100
        %v3153 = vadd.f32 %v2850, %v3103
        %v3154 = vadd.f32 %v2851, %v3105
        %v3155 = vadd.f32 %v2852, %v3108
        %v3156 = vadd.f32 %v2853, %v3110
        %v3157 = vadd.f32 %v2854, %v3113
        %v3158 = vadd.f32 %v2855, %v3115
        %v3159 = vadd.f32 %v2856, %v3118
        %v3160 = vadd.f32 %v2857, %v3120
        %v3161 = vadd.f32 %v2858, %v3123
        %v3162 = vadd.f32 %v2859, %v3125
        %v3163 = vadd.f32 %v2860, %v3128
        %v3164 = vadd.f32 %v2861, %v3130
        %v3165 = vadd.f32 %v2862, %v3133
        %v3166 = vadd.f32 %v2863, %v3135
        %v3167 = vld [vmem:[%s2867] sm:$0xf]
        %v3168 = vld [vmem:[%s2867 + $0x4] sm:$0xf]
        %v3169 = vld [vmem:[%s2867 + $0x8] sm:$0xf]
        %v3170 = vld [vmem:[%s2867 + $0xc] sm:$0x1]
        %v3171 = vld [vmem:[%s2867 + $0x10] sm:$0xf]
        %v3172 = vld [vmem:[%s2867 + $0x14] sm:$0xf]
        %v3173 = vld [vmem:[%s2867 + $0x18] sm:$0xf]
        %v3174 = vld [vmem:[%s2867 + $0x1c] sm:$0x1]
        %v3175 = vld [vmem:[%s2867 + $0x20] sm:$0xf]
        %v3176 = vld [vmem:[%s2867 + $0x24] sm:$0xf]
        %v3177 = vld [vmem:[%s2867 + $0x28] sm:$0xf]
        %v3178 = vld [vmem:[%s2867 + $0x2c] sm:$0x1]
        %v3179 = vld [vmem:[%s2867 + $0x30] sm:$0xf]
        %v3180 = vld [vmem:[%s2867 + $0x34] sm:$0xf]
        %v3181 = vld [vmem:[%s2867 + $0x38] sm:$0xf]
        %v3182 = vld [vmem:[%s2867 + $0x3c] sm:$0x1]
        %v3183 = vld [vmem:[%s2867 + $0x40] sm:$0xf]
        %v3184 = vld [vmem:[%s2867 + $0x44] sm:$0xf]
        %v3185 = vld [vmem:[%s2867 + $0x48] sm:$0xf]
        %v3186 = vld [vmem:[%s2867 + $0x4c] sm:$0x1]
        %v3187 = vld [vmem:[%s2867 + $0x50] sm:$0xf]
        %v3188 = vld [vmem:[%s2867 + $0x54] sm:$0xf]
        %v3189 = vld [vmem:[%s2867 + $0x58] sm:$0xf]
        %v3190 = vld [vmem:[%s2867 + $0x5c] sm:$0x1]
        %v3191 = vld [vmem:[%s2867 + $0x60] sm:$0xf]
        %v3192 = vld [vmem:[%s2867 + $0x64] sm:$0xf]
        %v3193 = vld [vmem:[%s2867 + $0x68] sm:$0xf]
        %v3194 = vld [vmem:[%s2867 + $0x6c] sm:$0x1]
        %v3195 = vld [vmem:[%s2867 + $0x70] sm:$0xf]
        %v3196 = vld [vmem:[%s2867 + $0x74] sm:$0xf]
        %v3197 = vld [vmem:[%s2867 + $0x78] sm:$0xf]
        %v3198 = vld [vmem:[%s2867 + $0x7c] sm:$0x1]
        %v3199 = vld [vmem:[%s2867 + $0x80] sm:$0xf]
        %v3200 = vld [vmem:[%s2867 + $0x84] sm:$0xf]
        %v3201 = vld [vmem:[%s2867 + $0x88] sm:$0xf]
        %v3202 = vld [vmem:[%s2867 + $0x8c] sm:$0x1]
        %v3203 = vld [vmem:[%s2867 + $0x90] sm:$0xf]
        %v3204 = vld [vmem:[%s2867 + $0x94] sm:$0xf]
        %v3205 = vld [vmem:[%s2867 + $0x98] sm:$0xf]
        %v3206 = vld [vmem:[%s2867 + $0x9c] sm:$0x1]
        %v3208 = vshrl.u32 %v3167, 16
        %v3210 = vrot.slane %v3208, 4
        %v3211 = vshll.u32 %v3167, 16
        %v3213 = vrot.slane %v3211, 5
        %v3214 = vor.u32 %v3210, %v3213
        %v3215 = vrot.slane %v3214, 4
        %v3217 = vshll.u32 %v3168, 16
        %v3219 = vrot.slane %v3217, 5
        %v3220 = vsel %vm409, %v3215, %v3219
        %v3221 = vshrl.u32 %v3168, 16
        %v3223 = vrot.slane %v3221, 4
        %v3224 = vor.u32 %v3223, %v3219
        %v3225 = vrot.slane %v3224, 4
        %v3227 = vshll.u32 %v3169, 16
        %v3229 = vrot.slane %v3227, 5
        %v3230 = vsel %vm409, %v3225, %v3229
        %v3231 = vshrl.u32 %v3169, 16
        %v3233 = vrot.slane %v3231, 4
        %v3234 = vor.u32 %v3233, %v3229
        %v3235 = vrot.slane %v3234, 4
        %v3237 = vshll.u32 %v3170, 16
        %v3239 = vrot.slane %v3237, 5
        %v3240 = vsel %vm409, %v3235, %v3239
        %v3242 = vshrl.u32 %v3171, 16
        %v3244 = vrot.slane %v3242, 4
        %v3245 = vshll.u32 %v3171, 16
        %v3247 = vrot.slane %v3245, 5
        %v3248 = vor.u32 %v3244, %v3247
        %v3249 = vrot.slane %v3248, 4
        %v3251 = vshll.u32 %v3172, 16
        %v3253 = vrot.slane %v3251, 5
        %v3254 = vsel %vm409, %v3249, %v3253
        %v3255 = vshrl.u32 %v3172, 16
        %v3257 = vrot.slane %v3255, 4
        %v3258 = vor.u32 %v3257, %v3253
        %v3259 = vrot.slane %v3258, 4
        %v3261 = vshll.u32 %v3173, 16
        %v3263 = vrot.slane %v3261, 5
        %v3264 = vsel %vm409, %v3259, %v3263
        %v3265 = vshrl.u32 %v3173, 16
        %v3267 = vrot.slane %v3265, 4
        %v3268 = vor.u32 %v3267, %v3263
        %v3269 = vrot.slane %v3268, 4
        %v3271 = vshll.u32 %v3174, 16
        %v3273 = vrot.slane %v3271, 5
        %v3274 = vsel %vm409, %v3269, %v3273
        %v3276 = vshrl.u32 %v3175, 16
        %v3278 = vrot.slane %v3276, 4
        %v3279 = vshll.u32 %v3175, 16
        %v3281 = vrot.slane %v3279, 5
        %v3282 = vor.u32 %v3278, %v3281
        %v3283 = vrot.slane %v3282, 4
        %v3285 = vshll.u32 %v3176, 16
        %v3287 = vrot.slane %v3285, 5
        %v3288 = vsel %vm409, %v3283, %v3287
        %v3289 = vshrl.u32 %v3176, 16
        %v3291 = vrot.slane %v3289, 4
        %v3292 = vor.u32 %v3291, %v3287
        %v3293 = vrot.slane %v3292, 4
        %v3295 = vshll.u32 %v3177, 16
        %v3297 = vrot.slane %v3295, 5
        %v3298 = vsel %vm409, %v3293, %v3297
        %v3299 = vshrl.u32 %v3177, 16
        %v3301 = vrot.slane %v3299, 4
        %v3302 = vor.u32 %v3301, %v3297
        %v3303 = vrot.slane %v3302, 4
        %v3305 = vshll.u32 %v3178, 16
        %v3307 = vrot.slane %v3305, 5
        %v3308 = vsel %vm409, %v3303, %v3307
        %v3310 = vshrl.u32 %v3179, 16
        %v3312 = vrot.slane %v3310, 4
        %v3313 = vshll.u32 %v3179, 16
        %v3315 = vrot.slane %v3313, 5
        %v3316 = vor.u32 %v3312, %v3315
        %v3317 = vrot.slane %v3316, 4
        %v3319 = vshll.u32 %v3180, 16
        %v3321 = vrot.slane %v3319, 5
        %v3322 = vsel %vm409, %v3317, %v3321
        %v3323 = vshrl.u32 %v3180, 16
        %v3325 = vrot.slane %v3323, 4
        %v3326 = vor.u32 %v3325, %v3321
        %v3327 = vrot.slane %v3326, 4
        %v3329 = vshll.u32 %v3181, 16
        %v3331 = vrot.slane %v3329, 5
        %v3332 = vsel %vm409, %v3327, %v3331
        %v3333 = vshrl.u32 %v3181, 16
        %v3335 = vrot.slane %v3333, 4
        %v3336 = vor.u32 %v3335, %v3331
        %v3337 = vrot.slane %v3336, 4
        %v3339 = vshll.u32 %v3182, 16
        %v3341 = vrot.slane %v3339, 5
        %v3342 = vsel %vm409, %v3337, %v3341
        %v3344 = vshrl.u32 %v3183, 16
        %v3346 = vrot.slane %v3344, 4
        %v3347 = vshll.u32 %v3183, 16
        %v3349 = vrot.slane %v3347, 5
        %v3350 = vor.u32 %v3346, %v3349
        %v3351 = vrot.slane %v3350, 4
        %v3353 = vshll.u32 %v3184, 16
        %v3355 = vrot.slane %v3353, 5
        %v3356 = vsel %vm409, %v3351, %v3355
        %v3357 = vshrl.u32 %v3184, 16
        %v3359 = vrot.slane %v3357, 4
        %v3360 = vor.u32 %v3359, %v3355
        %v3361 = vrot.slane %v3360, 4
        %v3363 = vshll.u32 %v3185, 16
        %v3365 = vrot.slane %v3363, 5
        %v3366 = vsel %vm409, %v3361, %v3365
        %v3367 = vshrl.u32 %v3185, 16
        %v3369 = vrot.slane %v3367, 4
        %v3370 = vor.u32 %v3369, %v3365
        %v3371 = vrot.slane %v3370, 4
        %v3373 = vshll.u32 %v3186, 16
        %v3375 = vrot.slane %v3373, 5
        %v3376 = vsel %vm409, %v3371, %v3375
        %v3378 = vshrl.u32 %v3187, 16
        %v3380 = vrot.slane %v3378, 4
        %v3381 = vshll.u32 %v3187, 16
        %v3383 = vrot.slane %v3381, 5
        %v3384 = vor.u32 %v3380, %v3383
        %v3385 = vrot.slane %v3384, 4
        %v3387 = vshll.u32 %v3188, 16
        %v3389 = vrot.slane %v3387, 5
        %v3390 = vsel %vm409, %v3385, %v3389
        %v3391 = vshrl.u32 %v3188, 16
        %v3393 = vrot.slane %v3391, 4
        %v3394 = vor.u32 %v3393, %v3389
        %v3395 = vrot.slane %v3394, 4
        %v3397 = vshll.u32 %v3189, 16
        %v3399 = vrot.slane %v3397, 5
        %v3400 = vsel %vm409, %v3395, %v3399
        %v3401 = vshrl.u32 %v3189, 16
        %v3403 = vrot.slane %v3401, 4
        %v3404 = vor.u32 %v3403, %v3399
        %v3405 = vrot.slane %v3404, 4
        %v3407 = vshll.u32 %v3190, 16
        %v3409 = vrot.slane %v3407, 5
        %v3410 = vsel %vm409, %v3405, %v3409
        %v3412 = vshrl.u32 %v3191, 16
        %v3414 = vrot.slane %v3412, 4
        %v3415 = vshll.u32 %v3191, 16
        %v3417 = vrot.slane %v3415, 5
        %v3418 = vor.u32 %v3414, %v3417
        %v3419 = vrot.slane %v3418, 4
        %v3421 = vshll.u32 %v3192, 16
        %v3423 = vrot.slane %v3421, 5
        %v3424 = vsel %vm409, %v3419, %v3423
        %v3425 = vshrl.u32 %v3192, 16
        %v3427 = vrot.slane %v3425, 4
        %v3428 = vor.u32 %v3427, %v3423
        %v3429 = vrot.slane %v3428, 4
        %v3431 = vshll.u32 %v3193, 16
        %v3433 = vrot.slane %v3431, 5
        %v3434 = vsel %vm409, %v3429, %v3433
        %v3435 = vshrl.u32 %v3193, 16
        %v3437 = vrot.slane %v3435, 4
        %v3438 = vor.u32 %v3437, %v3433
        %v3439 = vrot.slane %v3438, 4
        %v3441 = vshll.u32 %v3194, 16
        %v3443 = vrot.slane %v3441, 5
        %v3444 = vsel %vm409, %v3439, %v3443
        %v3446 = vshrl.u32 %v3195, 16
        %v3448 = vrot.slane %v3446, 4
        %v3449 = vshll.u32 %v3195, 16
        %v3451 = vrot.slane %v3449, 5
        %v3452 = vor.u32 %v3448, %v3451
        %v3453 = vrot.slane %v3452, 4
        %v3455 = vshll.u32 %v3196, 16
        %v3457 = vrot.slane %v3455, 5
        %v3458 = vsel %vm409, %v3453, %v3457
        %v3459 = vshrl.u32 %v3196, 16
        %v3461 = vrot.slane %v3459, 4
        %v3462 = vor.u32 %v3461, %v3457
        %v3463 = vrot.slane %v3462, 4
        %v3465 = vshll.u32 %v3197, 16
        %v3467 = vrot.slane %v3465, 5
        %v3468 = vsel %vm409, %v3463, %v3467
        %v3469 = vshrl.u32 %v3197, 16
        %v3471 = vrot.slane %v3469, 4
        %v3472 = vor.u32 %v3471, %v3467
        %v3473 = vrot.slane %v3472, 4
        %v3475 = vshll.u32 %v3198, 16
        %v3477 = vrot.slane %v3475, 5
        %v3478 = vsel %vm409, %v3473, %v3477
        %v3480 = vshrl.u32 %v3199, 16
        %v3482 = vrot.slane %v3480, 4
        %v3483 = vshll.u32 %v3199, 16
        %v3485 = vrot.slane %v3483, 5
        %v3486 = vor.u32 %v3482, %v3485
        %v3487 = vrot.slane %v3486, 4
        %v3489 = vshll.u32 %v3200, 16
        %v3491 = vrot.slane %v3489, 5
        %v3492 = vsel %vm409, %v3487, %v3491
        %v3493 = vshrl.u32 %v3200, 16
        %v3495 = vrot.slane %v3493, 4
        %v3496 = vor.u32 %v3495, %v3491
        %v3497 = vrot.slane %v3496, 4
        %v3499 = vshll.u32 %v3201, 16
        %v3501 = vrot.slane %v3499, 5
        %v3502 = vsel %vm409, %v3497, %v3501
        %v3503 = vshrl.u32 %v3201, 16
        %v3505 = vrot.slane %v3503, 4
        %v3506 = vor.u32 %v3505, %v3501
        %v3507 = vrot.slane %v3506, 4
        %v3509 = vshll.u32 %v3202, 16
        %v3511 = vrot.slane %v3509, 5
        %v3512 = vsel %vm409, %v3507, %v3511
        %v3514 = vshrl.u32 %v3203, 16
        %v3516 = vrot.slane %v3514, 4
        %v3517 = vshll.u32 %v3203, 16
        %v3519 = vrot.slane %v3517, 5
        %v3520 = vor.u32 %v3516, %v3519
        %v3521 = vrot.slane %v3520, 4
        %v3523 = vshll.u32 %v3204, 16
        %v3525 = vrot.slane %v3523, 5
        %v3526 = vsel %vm409, %v3521, %v3525
        %v3527 = vshrl.u32 %v3204, 16
        %v3529 = vrot.slane %v3527, 4
        %v3530 = vor.u32 %v3529, %v3525
        %v3531 = vrot.slane %v3530, 4
        %v3533 = vshll.u32 %v3205, 16
        %v3535 = vrot.slane %v3533, 5
        %v3536 = vsel %vm409, %v3531, %v3535
        %v3537 = vshrl.u32 %v3205, 16
        %v3539 = vrot.slane %v3537, 4
        %v3540 = vor.u32 %v3539, %v3535
        %v3541 = vrot.slane %v3540, 4
        %v3543 = vshll.u32 %v3206, 16
        %v3545 = vrot.slane %v3543, 5
        %v3546 = vsel %vm409, %v3541, %v3545
        %s3547 = scalar_lea.vmem [#allocation6], 448
        %v3548 = vld [vmem:[%s3547] sm:$0xf]
        %v3549 = vld [vmem:[%s3547 + $0x4] sm:$0xf]
        %v3550 = vld [vmem:[%s3547 + $0x8] sm:$0xf]
        %v3551 = vld [vmem:[%s3547 + $0xc] sm:$0xf]
        %v3552 = vld [vmem:[%s3547 + $0x10] sm:$0xf]
        %v3553 = vld [vmem:[%s3547 + $0x14] sm:$0xf]
        %v3554 = vld [vmem:[%s3547 + $0x18] sm:$0xf]
        %v3555 = vld [vmem:[%s3547 + $0x1c] sm:$0xf]
        %v3556 = vld [vmem:[%s3547 + $0x20] sm:$0xf]
        %v3557 = vld [vmem:[%s3547 + $0x24] sm:$0xf]
        %v3558 = vld [vmem:[%s3547 + $0x28] sm:$0xf]
        %v3559 = vld [vmem:[%s3547 + $0x2c] sm:$0xf]
        %v3560 = vld [vmem:[%s3547 + $0x30] sm:$0xf]
        %v3561 = vld [vmem:[%s3547 + $0x34] sm:$0xf]
        %v3562 = vld [vmem:[%s3547 + $0x38] sm:$0xf]
        %v3563 = vld [vmem:[%s3547 + $0x3c] sm:$0xf]
        %v3564 = vunpack.c.l.b16 %v3220
        %v3565 = vunpack.c.l.b16 %v3230
        %v3566 = vunpack.c.l.b16 %v3240
        %v3567 = vunpack.c.l.b16 %v3254
        %v3568 = vunpack.c.l.b16 %v3264
        %v3569 = vunpack.c.l.b16 %v3274
        %v3570 = vunpack.c.l.b16 %v3288
        %v3571 = vunpack.c.l.b16 %v3298
        %v3572 = vunpack.c.l.b16 %v3308
        %v3573 = vunpack.c.l.b16 %v3322
        %v3574 = vunpack.c.l.b16 %v3332
        %v3575 = vunpack.c.l.b16 %v3342
        %v3576 = vunpack.c.l.b16 %v3356
        %v3577 = vunpack.c.l.b16 %v3366
        %v3578 = vunpack.c.l.b16 %v3376
        %v3579 = vunpack.c.l.b16 %v3390
        %v3580 = vunpack.c.l.b16 %v3400
        %v3581 = vunpack.c.l.b16 %v3410
        %v3582 = vunpack.c.l.b16 %v3424
        %v3583 = vunpack.c.l.b16 %v3434
        %v3584 = vunpack.c.l.b16 %v3444
        %v3585 = vunpack.c.l.b16 %v3458
        %v3586 = vunpack.c.l.b16 %v3468
        %v3587 = vunpack.c.l.b16 %v3478
        %v3588 = vunpack.c.l.b16 %v3492
        %v3589 = vunpack.c.l.b16 %v3502
        %v3590 = vunpack.c.l.b16 %v3512
        %v3591 = vunpack.c.l.b16 %v3526
        %v3592 = vunpack.c.l.b16 %v3536
        %v3593 = vunpack.c.l.b16 %v3546
        %v3594 = vpack.c.b16 %v3565, %v3564
        %v3595 = vpack.c.b16 %v3567, %v3566
        %v3596 = vpack.c.b16 %v3569, %v3568
        %v3597 = vpack.c.b16 %v3571, %v3570
        %v3598 = vpack.c.b16 %v3573, %v3572
        %v3599 = vpack.c.b16 %v3575, %v3574
        %v3600 = vpack.c.b16 %v3577, %v3576
        %v3601 = vpack.c.b16 %v3579, %v3578
        %v3602 = vpack.c.b16 %v3581, %v3580
        %v3603 = vpack.c.b16 %v3583, %v3582
        %v3604 = vpack.c.b16 %v3585, %v3584
        %v3605 = vpack.c.b16 %v3587, %v3586
        %v3606 = vpack.c.b16 %v3589, %v3588
        %v3607 = vpack.c.b16 %v3591, %v3590
        %v3608 = vpack.c.b16 %v3593, %v3592
        %v3640 = vunpack.c.l.b16 %v3548
        %v3641 = vunpack.c.l.b16 %v3549
        %v3642 = vunpack.c.l.b16 %v3550
        %v3643 = vunpack.c.l.b16 %v3551
        %v3644 = vunpack.c.l.b16 %v3552
        %v3645 = vunpack.c.l.b16 %v3553
        %v3646 = vunpack.c.l.b16 %v3554
        %v3647 = vunpack.c.l.b16 %v3555
        %v3648 = vunpack.c.l.b16 %v3556
        %v3649 = vunpack.c.l.b16 %v3557
        %v3650 = vunpack.c.l.b16 %v3558
        %v3651 = vunpack.c.l.b16 %v3559
        %v3652 = vunpack.c.l.b16 %v3560
        %v3653 = vunpack.c.l.b16 %v3561
        %v3654 = vunpack.c.l.b16 %v3562
        %v3655 = vunpack.c.l.b16 %v3563
        %v3656 = vpack.c.b16 %v3641, %v3640
        %v3657 = vpack.c.b16 %v3643, %v3642
        %v3658 = vpack.c.b16 %v3645, %v3644
        %v3659 = vpack.c.b16 %v3647, %v3646
        %v3660 = vpack.c.b16 %v3649, %v3648
        %v3661 = vpack.c.b16 %v3651, %v3650
        %v3662 = vpack.c.b16 %v3653, %v3652
        %v3663 = vpack.c.b16 %v3655, %v3654
        %3672 = vmatpush.bf16.msra.mxu0 %v3663
        %3673 = vmatpush.bf16.msra.mxu0 %v3662
        %3674 = vmatpush.bf16.msra.mxu0 %v3661
        %3675 = vmatpush.bf16.msra.mxu0 %v3660
        %3676 = vmatpush.bf16.msra.mxu0 %v3659
        %3677 = vmatpush.bf16.msra.mxu0 %v3658
        %3678 = vmatpush.bf16.msra.mxu0 %v3657
        %3679 = vmatpush.bf16.msra.mxu0 %v3656
        %3680 = vmatmul.bf16.gmra.mxu0 %v3594
        %v3681 = vpop.f32.mrf.mxu0
        %v3682 = vadd.f32 0.0, %v3681
        %v3683 = vpop.f32.mrf.mxu0
        %v3684 = vadd.f32 0.0, %v3683
        %3685 = vmatmul.bf16.gmra.mxu0 %v3595
        %v3686 = vpop.f32.mrf.mxu0
        %v3687 = vadd.f32 0.0, %v3686
        %v3688 = vpop.f32.mrf.mxu0
        %v3689 = vadd.f32 0.0, %v3688
        %3690 = vmatmul.bf16.gmra.mxu0 %v3596
        %v3691 = vpop.f32.mrf.mxu0
        %v3692 = vadd.f32 0.0, %v3691
        %v3693 = vpop.f32.mrf.mxu0
        %v3694 = vadd.f32 0.0, %v3693
        %3695 = vmatmul.bf16.gmra.mxu0 %v3597
        %v3696 = vpop.f32.mrf.mxu0
        %v3697 = vadd.f32 0.0, %v3696
        %v3698 = vpop.f32.mrf.mxu0
        %v3699 = vadd.f32 0.0, %v3698
        %3700 = vmatmul.bf16.gmra.mxu0 %v3598
        %v3701 = vpop.f32.mrf.mxu0
        %v3702 = vadd.f32 0.0, %v3701
        %v3703 = vpop.f32.mrf.mxu0
        %v3704 = vadd.f32 0.0, %v3703
        %3705 = vmatmul.bf16.gmra.mxu0 %v3599
        %v3706 = vpop.f32.mrf.mxu0
        %v3707 = vadd.f32 0.0, %v3706
        %v3708 = vpop.f32.mrf.mxu0
        %v3709 = vadd.f32 0.0, %v3708
        %3710 = vmatmul.bf16.gmra.mxu0 %v3600
        %v3711 = vpop.f32.mrf.mxu0
        %v3712 = vadd.f32 0.0, %v3711
        %v3713 = vpop.f32.mrf.mxu0
        %v3714 = vadd.f32 0.0, %v3713
        %3715 = vmatmul.bf16.gmra.mxu0 %v3601
        %v3716 = vpop.f32.mrf.mxu0
        %v3717 = vadd.f32 0.0, %v3716
        %v3718 = vpop.f32.mrf.mxu0
        %v3719 = vadd.f32 0.0, %v3718
        %3720 = vmatmul.bf16.gmra.mxu0 %v3602
        %v3721 = vpop.f32.mrf.mxu0
        %v3722 = vadd.f32 0.0, %v3721
        %v3723 = vpop.f32.mrf.mxu0
        %v3724 = vadd.f32 0.0, %v3723
        %3725 = vmatmul.bf16.gmra.mxu0 %v3603
        %v3726 = vpop.f32.mrf.mxu0
        %v3727 = vadd.f32 0.0, %v3726
        %v3728 = vpop.f32.mrf.mxu0
        %v3729 = vadd.f32 0.0, %v3728
        %3730 = vmatmul.bf16.gmra.mxu0 %v3604
        %v3731 = vpop.f32.mrf.mxu0
        %v3732 = vadd.f32 0.0, %v3731
        %v3733 = vpop.f32.mrf.mxu0
        %v3734 = vadd.f32 0.0, %v3733
        %3735 = vmatmul.bf16.gmra.mxu0 %v3605
        %v3736 = vpop.f32.mrf.mxu0
        %v3737 = vadd.f32 0.0, %v3736
        %v3738 = vpop.f32.mrf.mxu0
        %v3739 = vadd.f32 0.0, %v3738
        %3740 = vmatmul.bf16.gmra.mxu0 %v3606
        %v3741 = vpop.f32.mrf.mxu0
        %v3742 = vadd.f32 0.0, %v3741
        %v3743 = vpop.f32.mrf.mxu0
        %v3744 = vadd.f32 0.0, %v3743
        %3745 = vmatmul.bf16.gmra.mxu0 %v3607
        %v3746 = vpop.f32.mrf.mxu0
        %v3747 = vadd.f32 0.0, %v3746
        %v3748 = vpop.f32.mrf.mxu0
        %v3749 = vadd.f32 0.0, %v3748
        %3750 = vmatmul.bf16.gmra.mxu0 %v3608
        %v3751 = vpop.f32.mrf.mxu0
        %v3752 = vadd.f32 0.0, %v3751
        %v3753 = vpop.f32.mrf.mxu0
        %v3754 = vadd.f32 0.0, %v3753
        %3755 = vdwg.mxu0
        %v3756 = vadd.f32 %v3137, %v3682
        %v3757 = vadd.f32 %v3138, %v3684
        %v3758 = vadd.f32 %v3139, %v3687
        %v3759 = vadd.f32 %v3140, %v3689
        %v3760 = vadd.f32 %v3141, %v3692
        %v3761 = vadd.f32 %v3142, %v3694
        %v3762 = vadd.f32 %v3143, %v3697
        %v3763 = vadd.f32 %v3144, %v3699
        %v3764 = vadd.f32 %v3145, %v3702
        %v3765 = vadd.f32 %v3146, %v3704
        %v3766 = vadd.f32 %v3147, %v3707
        %v3767 = vadd.f32 %v3148, %v3709
        %v3768 = vadd.f32 %v3149, %v3712
        %v3769 = vadd.f32 %v3150, %v3714
        %v3770 = vadd.f32 %v3151, %v3717
        %v3771 = vadd.f32 %v3152, %v3719
        %v3772 = vadd.f32 %v3153, %v3722
        %v3773 = vadd.f32 %v3154, %v3724
        %v3774 = vadd.f32 %v3155, %v3727
        %v3775 = vadd.f32 %v3156, %v3729
        %v3776 = vadd.f32 %v3157, %v3732
        %v3777 = vadd.f32 %v3158, %v3734
        %v3778 = vadd.f32 %v3159, %v3737
        %v3779 = vadd.f32 %v3160, %v3739
        %v3780 = vadd.f32 %v3161, %v3742
        %v3781 = vadd.f32 %v3162, %v3744
        %v3782 = vadd.f32 %v3163, %v3747
        %v3783 = vadd.f32 %v3164, %v3749
        %v3784 = vadd.f32 %v3165, %v3752
        %v3785 = vadd.f32 %v3166, %v3754
        %v3786 = vld [vmem:[%s2867] sm:$0xe]
        %v3787 = vld [vmem:[%s2867 + $0x10] sm:$0xe]
        %v3788 = vld [vmem:[%s2867 + $0x20] sm:$0xe]
        %v3789 = vld [vmem:[%s2867 + $0x30] sm:$0xe]
        %v3790 = vld [vmem:[%s2867 + $0x40] sm:$0xe]
        %v3791 = vld [vmem:[%s2867 + $0x50] sm:$0xe]
        %v3792 = vld [vmem:[%s2867 + $0x60] sm:$0xe]
        %v3793 = vld [vmem:[%s2867 + $0x70] sm:$0xe]
        %v3794 = vld [vmem:[%s2867 + $0x80] sm:$0xe]
        %v3795 = vld [vmem:[%s2867 + $0x90] sm:$0xe]
        %v3836 = vrot.slane %v3786, 5
        %v3837 = vrot.slane %v3836, 4
        %v3838 = vrot.slane %v3168, 5
        %v3839 = vsel %vm1213, %v3837, %v3838
        %v3840 = vrot.slane %v3838, 4
        %v3841 = vrot.slane %v3169, 5
        %v3842 = vsel %vm1213, %v3840, %v3841
        %v3843 = vrot.slane %v3841, 4
        %v3844 = vrot.slane %v3170, 5
        %v3845 = vsel %vm1213, %v3843, %v3844
        %v3846 = vrot.slane %v3787, 5
        %v3847 = vrot.slane %v3846, 4
        %v3848 = vrot.slane %v3172, 5
        %v3849 = vsel %vm1213, %v3847, %v3848
        %v3850 = vrot.slane %v3848, 4
        %v3851 = vrot.slane %v3173, 5
        %v3852 = vsel %vm1213, %v3850, %v3851
        %v3853 = vrot.slane %v3851, 4
        %v3854 = vrot.slane %v3174, 5
        %v3855 = vsel %vm1213, %v3853, %v3854
        %v3856 = vrot.slane %v3788, 5
        %v3857 = vrot.slane %v3856, 4
        %v3858 = vrot.slane %v3176, 5
        %v3859 = vsel %vm1213, %v3857, %v3858
        %v3860 = vrot.slane %v3858, 4
        %v3861 = vrot.slane %v3177, 5
        %v3862 = vsel %vm1213, %v3860, %v3861
        %v3863 = vrot.slane %v3861, 4
        %v3864 = vrot.slane %v3178, 5
        %v3865 = vsel %vm1213, %v3863, %v3864
        %v3866 = vrot.slane %v3789, 5
        %v3867 = vrot.slane %v3866, 4
        %v3868 = vrot.slane %v3180, 5
        %v3869 = vsel %vm1213, %v3867, %v3868
        %v3870 = vrot.slane %v3868, 4
        %v3871 = vrot.slane %v3181, 5
        %v3872 = vsel %vm1213, %v3870, %v3871
        %v3873 = vrot.slane %v3871, 4
        %v3874 = vrot.slane %v3182, 5
        %v3875 = vsel %vm1213, %v3873, %v3874
        %v3876 = vrot.slane %v3790, 5
        %v3877 = vrot.slane %v3876, 4
        %v3878 = vrot.slane %v3184, 5
        %v3879 = vsel %vm1213, %v3877, %v3878
        %v3880 = vrot.slane %v3878, 4
        %v3881 = vrot.slane %v3185, 5
        %v3882 = vsel %vm1213, %v3880, %v3881
        %v3883 = vrot.slane %v3881, 4
        %v3884 = vrot.slane %v3186, 5
        %v3885 = vsel %vm1213, %v3883, %v3884
        %v3886 = vrot.slane %v3791, 5
        %v3887 = vrot.slane %v3886, 4
        %v3888 = vrot.slane %v3188, 5
        %v3889 = vsel %vm1213, %v3887, %v3888
        %v3890 = vrot.slane %v3888, 4
        %v3891 = vrot.slane %v3189, 5
        %v3892 = vsel %vm1213, %v3890, %v3891
        %v3893 = vrot.slane %v3891, 4
        %v3894 = vrot.slane %v3190, 5
        %v3895 = vsel %vm1213, %v3893, %v3894
        %v3896 = vrot.slane %v3792, 5
        %v3897 = vrot.slane %v3896, 4
        %v3898 = vrot.slane %v3192, 5
        %v3899 = vsel %vm1213, %v3897, %v3898
        %v3900 = vrot.slane %v3898, 4
        %v3901 = vrot.slane %v3193, 5
        %v3902 = vsel %vm1213, %v3900, %v3901
        %v3903 = vrot.slane %v3901, 4
        %v3904 = vrot.slane %v3194, 5
        %v3905 = vsel %vm1213, %v3903, %v3904
        %v3906 = vrot.slane %v3793, 5
        %v3907 = vrot.slane %v3906, 4
        %v3908 = vrot.slane %v3196, 5
        %v3909 = vsel %vm1213, %v3907, %v3908
        %v3910 = vrot.slane %v3908, 4
        %v3911 = vrot.slane %v3197, 5
        %v3912 = vsel %vm1213, %v3910, %v3911
        %v3913 = vrot.slane %v3911, 4
        %v3914 = vrot.slane %v3198, 5
        %v3915 = vsel %vm1213, %v3913, %v3914
        %v3916 = vrot.slane %v3794, 5
        %v3917 = vrot.slane %v3916, 4
        %v3918 = vrot.slane %v3200, 5
        %v3919 = vsel %vm1213, %v3917, %v3918
        %v3920 = vrot.slane %v3918, 4
        %v3921 = vrot.slane %v3201, 5
        %v3922 = vsel %vm1213, %v3920, %v3921
        %v3923 = vrot.slane %v3921, 4
        %v3924 = vrot.slane %v3202, 5
        %v3925 = vsel %vm1213, %v3923, %v3924
        %v3926 = vrot.slane %v3795, 5
        %v3927 = vrot.slane %v3926, 4
        %v3928 = vrot.slane %v3204, 5
        %v3929 = vsel %vm1213, %v3927, %v3928
        %v3930 = vrot.slane %v3928, 4
        %v3931 = vrot.slane %v3205, 5
        %v3932 = vsel %vm1213, %v3930, %v3931
        %v3933 = vrot.slane %v3931, 4
        %v3934 = vrot.slane %v3206, 5
        %v3935 = vsel %vm1213, %v3933, %v3934
        %s3936 = scalar_lea.vmem [#allocation6], 512
        %v3937 = vld [vmem:[%s3936] sm:$0xf]
        %v3938 = vld [vmem:[%s3936 + $0x4] sm:$0xf]
        %v3939 = vld [vmem:[%s3936 + $0x8] sm:$0xf]
        %v3940 = vld [vmem:[%s3936 + $0xc] sm:$0xf]
        %v3941 = vld [vmem:[%s3936 + $0x10] sm:$0xf]
        %v3942 = vld [vmem:[%s3936 + $0x14] sm:$0xf]
        %v3943 = vld [vmem:[%s3936 + $0x18] sm:$0xf]
        %v3944 = vld [vmem:[%s3936 + $0x1c] sm:$0xf]
        %v3945 = vld [vmem:[%s3936 + $0x20] sm:$0xf]
        %v3946 = vld [vmem:[%s3936 + $0x24] sm:$0xf]
        %v3947 = vld [vmem:[%s3936 + $0x28] sm:$0xf]
        %v3948 = vld [vmem:[%s3936 + $0x2c] sm:$0xf]
        %v3949 = vld [vmem:[%s3936 + $0x30] sm:$0xf]
        %v3950 = vld [vmem:[%s3936 + $0x34] sm:$0xf]
        %v3951 = vld [vmem:[%s3936 + $0x38] sm:$0xf]
        %v3952 = vld [vmem:[%s3936 + $0x3c] sm:$0xf]
        %v3953 = vunpack.c.l.b16 %v3839
        %v3954 = vunpack.c.l.b16 %v3842
        %v3955 = vunpack.c.l.b16 %v3845
        %v3956 = vunpack.c.l.b16 %v3849
        %v3957 = vunpack.c.l.b16 %v3852
        %v3958 = vunpack.c.l.b16 %v3855
        %v3959 = vunpack.c.l.b16 %v3859
        %v3960 = vunpack.c.l.b16 %v3862
        %v3961 = vunpack.c.l.b16 %v3865
        %v3962 = vunpack.c.l.b16 %v3869
        %v3963 = vunpack.c.l.b16 %v3872
        %v3964 = vunpack.c.l.b16 %v3875
        %v3965 = vunpack.c.l.b16 %v3879
        %v3966 = vunpack.c.l.b16 %v3882
        %v3967 = vunpack.c.l.b16 %v3885
        %v3968 = vunpack.c.l.b16 %v3889
        %v3969 = vunpack.c.l.b16 %v3892
        %v3970 = vunpack.c.l.b16 %v3895
        %v3971 = vunpack.c.l.b16 %v3899
        %v3972 = vunpack.c.l.b16 %v3902
        %v3973 = vunpack.c.l.b16 %v3905
        %v3974 = vunpack.c.l.b16 %v3909
        %v3975 = vunpack.c.l.b16 %v3912
        %v3976 = vunpack.c.l.b16 %v3915
        %v3977 = vunpack.c.l.b16 %v3919
        %v3978 = vunpack.c.l.b16 %v3922
        %v3979 = vunpack.c.l.b16 %v3925
        %v3980 = vunpack.c.l.b16 %v3929
        %v3981 = vunpack.c.l.b16 %v3932
        %v3982 = vunpack.c.l.b16 %v3935
        %v3983 = vpack.c.b16 %v3954, %v3953
        %v3984 = vpack.c.b16 %v3956, %v3955
        %v3985 = vpack.c.b16 %v3958, %v3957
        %v3986 = vpack.c.b16 %v3960, %v3959
        %v3987 = vpack.c.b16 %v3962, %v3961
        %v3988 = vpack.c.b16 %v3964, %v3963
        %v3989 = vpack.c.b16 %v3966, %v3965
        %v3990 = vpack.c.b16 %v3968, %v3967
        %v3991 = vpack.c.b16 %v3970, %v3969
        %v3992 = vpack.c.b16 %v3972, %v3971
        %v3993 = vpack.c.b16 %v3974, %v3973
        %v3994 = vpack.c.b16 %v3976, %v3975
        %v3995 = vpack.c.b16 %v3978, %v3977
        %v3996 = vpack.c.b16 %v3980, %v3979
        %v3997 = vpack.c.b16 %v3982, %v3981
        %v4029 = vunpack.c.l.b16 %v3937
        %v4030 = vunpack.c.l.b16 %v3938
        %v4031 = vunpack.c.l.b16 %v3939
        %v4032 = vunpack.c.l.b16 %v3940
        %v4033 = vunpack.c.l.b16 %v3941
        %v4034 = vunpack.c.l.b16 %v3942
        %v4035 = vunpack.c.l.b16 %v3943
        %v4036 = vunpack.c.l.b16 %v3944
        %v4037 = vunpack.c.l.b16 %v3945
        %v4038 = vunpack.c.l.b16 %v3946
        %v4039 = vunpack.c.l.b16 %v3947
        %v4040 = vunpack.c.l.b16 %v3948
        %v4041 = vunpack.c.l.b16 %v3949
        %v4042 = vunpack.c.l.b16 %v3950
        %v4043 = vunpack.c.l.b16 %v3951
        %v4044 = vunpack.c.l.b16 %v3952
        %v4045 = vpack.c.b16 %v4030, %v4029
        %v4046 = vpack.c.b16 %v4032, %v4031
        %v4047 = vpack.c.b16 %v4034, %v4033
        %v4048 = vpack.c.b16 %v4036, %v4035
        %v4049 = vpack.c.b16 %v4038, %v4037
        %v4050 = vpack.c.b16 %v4040, %v4039
        %v4051 = vpack.c.b16 %v4042, %v4041
        %v4052 = vpack.c.b16 %v4044, %v4043
        %4061 = vmatpush.bf16.msra.mxu0 %v4052
        %4062 = vmatpush.bf16.msra.mxu0 %v4051
        %4063 = vmatpush.bf16.msra.mxu0 %v4050
        %4064 = vmatpush.bf16.msra.mxu0 %v4049
        %4065 = vmatpush.bf16.msra.mxu0 %v4048
        %4066 = vmatpush.bf16.msra.mxu0 %v4047
        %4067 = vmatpush.bf16.msra.mxu0 %v4046
        %4068 = vmatpush.bf16.msra.mxu0 %v4045
        %4069 = vmatmul.bf16.gmra.mxu0 %v3983
        %v4070 = vpop.f32.mrf.mxu0
        %v4071 = vadd.f32 0.0, %v4070
        %v4072 = vpop.f32.mrf.mxu0
        %v4073 = vadd.f32 0.0, %v4072
        %4074 = vmatmul.bf16.gmra.mxu0 %v3984
        %v4075 = vpop.f32.mrf.mxu0
        %v4076 = vadd.f32 0.0, %v4075
        %v4077 = vpop.f32.mrf.mxu0
        %v4078 = vadd.f32 0.0, %v4077
        %4079 = vmatmul.bf16.gmra.mxu0 %v3985
        %v4080 = vpop.f32.mrf.mxu0
        %v4081 = vadd.f32 0.0, %v4080
        %v4082 = vpop.f32.mrf.mxu0
        %v4083 = vadd.f32 0.0, %v4082
        %4084 = vmatmul.bf16.gmra.mxu0 %v3986
        %v4085 = vpop.f32.mrf.mxu0
        %v4086 = vadd.f32 0.0, %v4085
        %v4087 = vpop.f32.mrf.mxu0
        %v4088 = vadd.f32 0.0, %v4087
        %4089 = vmatmul.bf16.gmra.mxu0 %v3987
        %v4090 = vpop.f32.mrf.mxu0
        %v4091 = vadd.f32 0.0, %v4090
        %v4092 = vpop.f32.mrf.mxu0
        %v4093 = vadd.f32 0.0, %v4092
        %4094 = vmatmul.bf16.gmra.mxu0 %v3988
        %v4095 = vpop.f32.mrf.mxu0
        %v4096 = vadd.f32 0.0, %v4095
        %v4097 = vpop.f32.mrf.mxu0
        %v4098 = vadd.f32 0.0, %v4097
        %4099 = vmatmul.bf16.gmra.mxu0 %v3989
        %v4100 = vpop.f32.mrf.mxu0
        %v4101 = vadd.f32 0.0, %v4100
        %v4102 = vpop.f32.mrf.mxu0
        %v4103 = vadd.f32 0.0, %v4102
        %4104 = vmatmul.bf16.gmra.mxu0 %v3990
        %v4105 = vpop.f32.mrf.mxu0
        %v4106 = vadd.f32 0.0, %v4105
        %v4107 = vpop.f32.mrf.mxu0
        %v4108 = vadd.f32 0.0, %v4107
        %4109 = vmatmul.bf16.gmra.mxu0 %v3991
        %v4110 = vpop.f32.mrf.mxu0
        %v4111 = vadd.f32 0.0, %v4110
        %v4112 = vpop.f32.mrf.mxu0
        %v4113 = vadd.f32 0.0, %v4112
        %4114 = vmatmul.bf16.gmra.mxu0 %v3992
        %v4115 = vpop.f32.mrf.mxu0
        %v4116 = vadd.f32 0.0, %v4115
        %v4117 = vpop.f32.mrf.mxu0
        %v4118 = vadd.f32 0.0, %v4117
        %4119 = vmatmul.bf16.gmra.mxu0 %v3993
        %v4120 = vpop.f32.mrf.mxu0
        %v4121 = vadd.f32 0.0, %v4120
        %v4122 = vpop.f32.mrf.mxu0
        %v4123 = vadd.f32 0.0, %v4122
        %4124 = vmatmul.bf16.gmra.mxu0 %v3994
        %v4125 = vpop.f32.mrf.mxu0
        %v4126 = vadd.f32 0.0, %v4125
        %v4127 = vpop.f32.mrf.mxu0
        %v4128 = vadd.f32 0.0, %v4127
        %4129 = vmatmul.bf16.gmra.mxu0 %v3995
        %v4130 = vpop.f32.mrf.mxu0
        %v4131 = vadd.f32 0.0, %v4130
        %v4132 = vpop.f32.mrf.mxu0
        %v4133 = vadd.f32 0.0, %v4132
        %4134 = vmatmul.bf16.gmra.mxu0 %v3996
        %v4135 = vpop.f32.mrf.mxu0
        %v4136 = vadd.f32 0.0, %v4135
        %v4137 = vpop.f32.mrf.mxu0
        %v4138 = vadd.f32 0.0, %v4137
        %4139 = vmatmul.bf16.gmra.mxu0 %v3997
        %v4140 = vpop.f32.mrf.mxu0
        %v4141 = vadd.f32 0.0, %v4140
        %v4142 = vpop.f32.mrf.mxu0
        %v4143 = vadd.f32 0.0, %v4142
        %4144 = vdwg.mxu0
        %v4145 = vadd.f32 %v3756, %v4071
        %v4146 = vadd.f32 %v3757, %v4073
        %v4147 = vadd.f32 %v3758, %v4076
        %v4148 = vadd.f32 %v3759, %v4078
        %v4149 = vadd.f32 %v3760, %v4081
        %v4150 = vadd.f32 %v3761, %v4083
        %v4151 = vadd.f32 %v3762, %v4086
        %v4152 = vadd.f32 %v3763, %v4088
        %v4153 = vadd.f32 %v3764, %v4091
        %v4154 = vadd.f32 %v3765, %v4093
        %v4155 = vadd.f32 %v3766, %v4096
        %v4156 = vadd.f32 %v3767, %v4098
        %v4157 = vadd.f32 %v3768, %v4101
        %v4158 = vadd.f32 %v3769, %v4103
        %v4159 = vadd.f32 %v3770, %v4106
        %v4160 = vadd.f32 %v3771, %v4108
        %v4161 = vadd.f32 %v3772, %v4111
        %v4162 = vadd.f32 %v3773, %v4113
        %v4163 = vadd.f32 %v3774, %v4116
        %v4164 = vadd.f32 %v3775, %v4118
        %v4165 = vadd.f32 %v3776, %v4121
        %v4166 = vadd.f32 %v3777, %v4123
        %v4167 = vadd.f32 %v3778, %v4126
        %v4168 = vadd.f32 %v3779, %v4128
        %v4169 = vadd.f32 %v3780, %v4131
        %v4170 = vadd.f32 %v3781, %v4133
        %v4171 = vadd.f32 %v3782, %v4136
        %v4172 = vadd.f32 %v3783, %v4138
        %v4173 = vadd.f32 %v3784, %v4141
        %v4174 = vadd.f32 %v3785, %v4143
        %v4175 = vld [vmem:[%s2] sm:$0x1]
        %v4177 = vperm.slane %v4175, 0
        %v4179 = vmul.f32 %v4145, %v4177
        %v4180 = vmul.f32 %v4146, %v4177
        %v4181 = vmul.f32 %v4147, %v4177
        %v4182 = vmul.f32 %v4148, %v4177
        %v4183 = vmul.f32 %v4149, %v4177
        %v4184 = vmul.f32 %v4150, %v4177
        %v4185 = vmul.f32 %v4151, %v4177
        %v4186 = vmul.f32 %v4152, %v4177
        %v4187 = vmul.f32 %v4153, %v4177
        %v4188 = vmul.f32 %v4154, %v4177
        %v4189 = vmul.f32 %v4155, %v4177
        %v4190 = vmul.f32 %v4156, %v4177
        %v4191 = vmul.f32 %v4157, %v4177
        %v4192 = vmul.f32 %v4158, %v4177
        %v4193 = vmul.f32 %v4159, %v4177
        %v4194 = vmul.f32 %v4160, %v4177
        %v4195 = vmul.f32 %v4161, %v4177
        %v4196 = vmul.f32 %v4162, %v4177
        %v4197 = vmul.f32 %v4163, %v4177
        %v4198 = vmul.f32 %v4164, %v4177
        %v4199 = vmul.f32 %v4165, %v4177
        %v4200 = vmul.f32 %v4166, %v4177
        %v4201 = vmul.f32 %v4167, %v4177
        %v4202 = vmul.f32 %v4168, %v4177
        %v4203 = vmul.f32 %v4169, %v4177
        %v4204 = vmul.f32 %v4170, %v4177
        %v4205 = vmul.f32 %v4171, %v4177
        %v4206 = vmul.f32 %v4172, %v4177
        %v4207 = vmul.f32 %v4173, %v4177
        %v4208 = vmul.f32 %v4174, %v4177
        %v4209 = vld [vmem:[%s3] sm:$0x1]
        %v4211 = vperm.slane %v4209, 0
        %v4213 = vadd.f32 %v4179, %v4211
        %v4214 = vadd.f32 %v4180, %v4211
        %v4215 = vadd.f32 %v4181, %v4211
        %v4216 = vadd.f32 %v4182, %v4211
        %v4217 = vadd.f32 %v4183, %v4211
        %v4218 = vadd.f32 %v4184, %v4211
        %v4219 = vadd.f32 %v4185, %v4211
        %v4220 = vadd.f32 %v4186, %v4211
        %v4221 = vadd.f32 %v4187, %v4211
        %v4222 = vadd.f32 %v4188, %v4211
        %v4223 = vadd.f32 %v4189, %v4211
        %v4224 = vadd.f32 %v4190, %v4211
        %v4225 = vadd.f32 %v4191, %v4211
        %v4226 = vadd.f32 %v4192, %v4211
        %v4227 = vadd.f32 %v4193, %v4211
        %v4228 = vadd.f32 %v4194, %v4211
        %v4229 = vadd.f32 %v4195, %v4211
        %v4230 = vadd.f32 %v4196, %v4211
        %v4231 = vadd.f32 %v4197, %v4211
        %v4232 = vadd.f32 %v4198, %v4211
        %v4233 = vadd.f32 %v4199, %v4211
        %v4234 = vadd.f32 %v4200, %v4211
        %v4235 = vadd.f32 %v4201, %v4211
        %v4236 = vadd.f32 %v4202, %v4211
        %v4237 = vadd.f32 %v4203, %v4211
        %v4238 = vadd.f32 %v4204, %v4211
        %v4239 = vadd.f32 %v4205, %v4211
        %v4240 = vadd.f32 %v4206, %v4211
        %v4241 = vadd.f32 %v4207, %v4211
        %v4242 = vadd.f32 %v4208, %v4211
        %v4243 = vmax.f32 %v4213, 0.0
        %v4244 = vmax.f32 %v4214, 0.0
        %v4245 = vmax.f32 %v4215, 0.0
        %v4246 = vmax.f32 %v4216, 0.0
        %v4247 = vmax.f32 %v4217, 0.0
        %v4248 = vmax.f32 %v4218, 0.0
        %v4249 = vmax.f32 %v4219, 0.0
        %v4250 = vmax.f32 %v4220, 0.0
        %v4251 = vmax.f32 %v4221, 0.0
        %v4252 = vmax.f32 %v4222, 0.0
        %v4253 = vmax.f32 %v4223, 0.0
        %v4254 = vmax.f32 %v4224, 0.0
        %v4255 = vmax.f32 %v4225, 0.0
        %v4256 = vmax.f32 %v4226, 0.0
        %v4257 = vmax.f32 %v4227, 0.0
        %v4258 = vmax.f32 %v4228, 0.0
        %v4259 = vmax.f32 %v4229, 0.0
        %v4260 = vmax.f32 %v4230, 0.0
        %v4261 = vmax.f32 %v4231, 0.0
        %v4262 = vmax.f32 %v4232, 0.0
        %v4263 = vmax.f32 %v4233, 0.0
        %v4264 = vmax.f32 %v4234, 0.0
        %v4265 = vmax.f32 %v4235, 0.0
        %v4266 = vmax.f32 %v4236, 0.0
        %v4267 = vmax.f32 %v4237, 0.0
        %v4268 = vmax.f32 %v4238, 0.0
        %v4269 = vmax.f32 %v4239, 0.0
        %v4270 = vmax.f32 %v4240, 0.0
        %v4271 = vmax.f32 %v4241, 0.0
        %v4272 = vmax.f32 %v4242, 0.0
        %s4273 = ssub.s32 %s347, 1
        %v4274 = vstv %s4273
        %v4275 = vadd.s32 %v4274, 1
        %v4276 = vadd.s32 %v4274, 2
        %v4277 = vadd.s32 %v4274, 3
        %v4278 = vadd.s32 %v4274, 4
        %v4279 = vadd.s32 %v4274, 5
        %v4280 = vadd.s32 %v4274, 6
        %v4281 = vadd.s32 %v4274, 7
        %v4282 = vadd.s32 %v4274, 8
        %v4283 = vadd.s32 %v4274, 9
        %v4284 = vlaneseq
        %v4285 = vshrl.u32 %v4284, 7
        %v4286 = vadd.s32 %v4285, 8
        %v4287 = vadd.s32 %v4285, 16
        %vm4288 = vcmp.ge.s32.totalorder %v4274, 0
        %vm4289 = vcmp.ge.s32.totalorder %v4275, 0
        %vm4290 = vcmp.ge.s32.totalorder %v4276, 0
        %vm4291 = vcmp.ge.s32.totalorder %v4277, 0
        %vm4292 = vcmp.ge.s32.totalorder %v4278, 0
        %vm4293 = vcmp.ge.s32.totalorder %v4279, 0
        %vm4294 = vcmp.ge.s32.totalorder %v4280, 0
        %vm4295 = vcmp.ge.s32.totalorder %v4281, 0
        %vm4296 = vcmp.ge.s32.totalorder %v4282, 0
        %vm4297 = vcmp.ge.s32.totalorder %v4283, 0
        %vm4298 = vcmp.lt.s32.totalorder %v4274, 16
        %vm4299 = vcmp.lt.s32.totalorder %v4275, 16
        %vm4300 = vcmp.lt.s32.totalorder %v4276, 16
        %vm4301 = vcmp.lt.s32.totalorder %v4277, 16
        %vm4302 = vcmp.lt.s32.totalorder %v4278, 16
        %vm4303 = vcmp.lt.s32.totalorder %v4279, 16
        %vm4304 = vcmp.lt.s32.totalorder %v4280, 16
        %vm4305 = vcmp.lt.s32.totalorder %v4281, 16
        %vm4306 = vcmp.lt.s32.totalorder %v4282, 16
        %vm4307 = vcmp.lt.s32.totalorder %v4283, 16
        %vm4308 = vmand %vm4288, %vm4298
        %vm4309 = vmand %vm4289, %vm4299
        %vm4310 = vmand %vm4290, %vm4300
        %vm4311 = vmand %vm4291, %vm4301
        %vm4312 = vmand %vm4292, %vm4302
        %vm4313 = vmand %vm4293, %vm4303
        %vm4314 = vmand %vm4294, %vm4304
        %vm4315 = vmand %vm4295, %vm4305
        %vm4316 = vmand %vm4296, %vm4306
        %vm4317 = vmand %vm4297, %vm4307
        %vm4318 = vcmp.ge.s32.totalorder %v4285, 1
        %vm4319 = vcmp.ge.s32.totalorder %v4286, 1
        %vm4320 = vcmp.ge.s32.totalorder %v4287, 1
        %v4321 = vsel %vm4308, 1, 0
        %v4322 = vsel %vm4309, 1, 0
        %v4323 = vsel %vm4310, 1, 0
        %v4324 = vsel %vm4311, 1, 0
        %v4325 = vsel %vm4312, 1, 0
        %v4326 = vsel %vm4313, 1, 0
        %v4327 = vsel %vm4314, 1, 0
        %v4328 = vsel %vm4315, 1, 0
        %v4329 = vsel %vm4316, 1, 0
        %v4330 = vsel %vm4317, 1, 0
        %vm4331 = vcmp.eq.s32.totalorder %v4321, 1
        %vm4332 = vcmp.eq.s32.totalorder %v4322, 1
        %vm4333 = vcmp.eq.s32.totalorder %v4323, 1
        %vm4334 = vcmp.eq.s32.totalorder %v4324, 1
        %vm4335 = vcmp.eq.s32.totalorder %v4325, 1
        %vm4336 = vcmp.eq.s32.totalorder %v4326, 1
        %vm4337 = vcmp.eq.s32.totalorder %v4327, 1
        %vm4338 = vcmp.eq.s32.totalorder %v4328, 1
        %vm4339 = vcmp.eq.s32.totalorder %v4329, 1
        %vm4340 = vcmp.eq.s32.totalorder %v4330, 1
        %v4341 = vsel %vm4318, 1, 0
        %v4342 = vsel %vm4319, 1, 0
        %v4343 = vsel %vm4320, 1, 0
        %vm4344 = vcmp.eq.s32.totalorder %v4341, 1
        %vm4345 = vcmp.eq.s32.totalorder %v4342, 1
        %vm4346 = vcmp.eq.s32.totalorder %v4343, 1
        %vm4347 = vmand %vm4331, %vm4344
        %vm4348 = vmand %vm4331, %vm4345
        %vm4349 = vmand %vm4331, %vm4346
        %vm4350 = vmand %vm4332, %vm4344
        %vm4351 = vmand %vm4332, %vm4345
        %vm4352 = vmand %vm4332, %vm4346
        %vm4353 = vmand %vm4333, %vm4344
        %vm4354 = vmand %vm4333, %vm4345
        %vm4355 = vmand %vm4333, %vm4346
        %vm4356 = vmand %vm4334, %vm4344
        %vm4357 = vmand %vm4334, %vm4345
        %vm4358 = vmand %vm4334, %vm4346
        %vm4359 = vmand %vm4335, %vm4344
        %vm4360 = vmand %vm4335, %vm4345
        %vm4361 = vmand %vm4335, %vm4346
        %vm4362 = vmand %vm4336, %vm4344
        %vm4363 = vmand %vm4336, %vm4345
        %vm4364 = vmand %vm4336, %vm4346
        %vm4365 = vmand %vm4337, %vm4344
        %vm4366 = vmand %vm4337, %vm4345
        %vm4367 = vmand %vm4337, %vm4346
        %vm4368 = vmand %vm4338, %vm4344
        %vm4369 = vmand %vm4338, %vm4345
        %vm4370 = vmand %vm4338, %vm4346
        %vm4371 = vmand %vm4339, %vm4344
        %vm4372 = vmand %vm4339, %vm4345
        %vm4373 = vmand %vm4339, %vm4346
        %vm4374 = vmand %vm4340, %vm4344
        %vm4375 = vmand %vm4340, %vm4345
        %vm4376 = vmand %vm4340, %vm4346
        %vm4377 = vcmp.le.s32.totalorder %v4285, 16
        %vm4378 = vcmp.le.s32.totalorder %v4286, 16
        %vm4379 = vcmp.le.s32.totalorder %v4287, 16
        %v4380 = vsel %vm4377, 1, 0
        %v4381 = vsel %vm4378, 1, 0
        %v4382 = vsel %vm4379, 1, 0
        %vm4383 = vcmp.eq.s32.totalorder %v4380, 1
        %vm4384 = vcmp.eq.s32.totalorder %v4381, 1
        %vm4385 = vcmp.eq.s32.totalorder %v4382, 1
        %vm4386 = vmand %vm4347, %vm4383
        %vm4387 = vmand %vm4348, %vm4384
        %vm4388 = vmand %vm4349, %vm4385
        %vm4389 = vmand %vm4350, %vm4383
        %vm4390 = vmand %vm4351, %vm4384
        %vm4391 = vmand %vm4352, %vm4385
        %vm4392 = vmand %vm4353, %vm4383
        %vm4393 = vmand %vm4354, %vm4384
        %vm4394 = vmand %vm4355, %vm4385
        %vm4395 = vmand %vm4356, %vm4383
        %vm4396 = vmand %vm4357, %vm4384
        %vm4397 = vmand %vm4358, %vm4385
        %vm4398 = vmand %vm4359, %vm4383
        %vm4399 = vmand %vm4360, %vm4384
        %vm4400 = vmand %vm4361, %vm4385
        %vm4401 = vmand %vm4362, %vm4383
        %vm4402 = vmand %vm4363, %vm4384
        %vm4403 = vmand %vm4364, %vm4385
        %vm4404 = vmand %vm4365, %vm4383
        %vm4405 = vmand %vm4366, %vm4384
        %vm4406 = vmand %vm4367, %vm4385
        %vm4407 = vmand %vm4368, %vm4383
        %vm4408 = vmand %vm4369, %vm4384
        %vm4409 = vmand %vm4370, %vm4385
        %vm4410 = vmand %vm4371, %vm4383
        %vm4411 = vmand %vm4372, %vm4384
        %vm4412 = vmand %vm4373, %vm4385
        %vm4413 = vmand %vm4374, %vm4383
        %vm4414 = vmand %vm4375, %vm4384
        %vm4415 = vmand %vm4376, %vm4385
        %v4416 = vsel %vm4386, 1, 0
        %v4417 = vsel %vm4387, 1, 0
        %v4418 = vsel %vm4388, 1, 0
        %v4419 = vsel %vm4389, 1, 0
        %v4420 = vsel %vm4390, 1, 0
        %v4421 = vsel %vm4391, 1, 0
        %v4422 = vsel %vm4392, 1, 0
        %v4423 = vsel %vm4393, 1, 0
        %v4424 = vsel %vm4394, 1, 0
        %v4425 = vsel %vm4395, 1, 0
        %v4426 = vsel %vm4396, 1, 0
        %v4427 = vsel %vm4397, 1, 0
        %v4428 = vsel %vm4398, 1, 0
        %v4429 = vsel %vm4399, 1, 0
        %v4430 = vsel %vm4400, 1, 0
        %v4431 = vsel %vm4401, 1, 0
        %v4432 = vsel %vm4402, 1, 0
        %v4433 = vsel %vm4403, 1, 0
        %v4434 = vsel %vm4404, 1, 0
        %v4435 = vsel %vm4405, 1, 0
        %v4436 = vsel %vm4406, 1, 0
        %v4437 = vsel %vm4407, 1, 0
        %v4438 = vsel %vm4408, 1, 0
        %v4439 = vsel %vm4409, 1, 0
        %v4440 = vsel %vm4410, 1, 0
        %v4441 = vsel %vm4411, 1, 0
        %v4442 = vsel %vm4412, 1, 0
        %v4443 = vsel %vm4413, 1, 0
        %v4444 = vsel %vm4414, 1, 0
        %v4445 = vsel %vm4415, 1, 0
        %vm4446 = vcmp.eq.s32.totalorder %v4416, 1
        %vm4447 = vcmp.eq.s32.totalorder %v4417, 1
        %vm4448 = vcmp.eq.s32.totalorder %v4418, 1
        %vm4449 = vcmp.eq.s32.totalorder %v4419, 1
        %vm4450 = vcmp.eq.s32.totalorder %v4420, 1
        %vm4451 = vcmp.eq.s32.totalorder %v4421, 1
        %vm4452 = vcmp.eq.s32.totalorder %v4422, 1
        %vm4453 = vcmp.eq.s32.totalorder %v4423, 1
        %vm4454 = vcmp.eq.s32.totalorder %v4424, 1
        %vm4455 = vcmp.eq.s32.totalorder %v4425, 1
        %vm4456 = vcmp.eq.s32.totalorder %v4426, 1
        %vm4457 = vcmp.eq.s32.totalorder %v4427, 1
        %vm4458 = vcmp.eq.s32.totalorder %v4428, 1
        %vm4459 = vcmp.eq.s32.totalorder %v4429, 1
        %vm4460 = vcmp.eq.s32.totalorder %v4430, 1
        %vm4461 = vcmp.eq.s32.totalorder %v4431, 1
        %vm4462 = vcmp.eq.s32.totalorder %v4432, 1
        %vm4463 = vcmp.eq.s32.totalorder %v4433, 1
        %vm4464 = vcmp.eq.s32.totalorder %v4434, 1
        %vm4465 = vcmp.eq.s32.totalorder %v4435, 1
        %vm4466 = vcmp.eq.s32.totalorder %v4436, 1
        %vm4467 = vcmp.eq.s32.totalorder %v4437, 1
        %vm4468 = vcmp.eq.s32.totalorder %v4438, 1
        %vm4469 = vcmp.eq.s32.totalorder %v4439, 1
        %vm4470 = vcmp.eq.s32.totalorder %v4440, 1
        %vm4471 = vcmp.eq.s32.totalorder %v4441, 1
        %vm4472 = vcmp.eq.s32.totalorder %v4442, 1
        %vm4473 = vcmp.eq.s32.totalorder %v4443, 1
        %vm4474 = vcmp.eq.s32.totalorder %v4444, 1
        %vm4475 = vcmp.eq.s32.totalorder %v4445, 1
        %v4476 = vsel %vm4446, %v4243, 0.0
        %v4477 = vsel %vm4447, %v4244, 0.0
        %v4478 = vsel %vm4448, %v4245, 0.0
        %v4479 = vsel %vm4449, %v4246, 0.0
        %v4480 = vsel %vm4450, %v4247, 0.0
        %v4481 = vsel %vm4451, %v4248, 0.0
        %v4482 = vsel %vm4452, %v4249, 0.0
        %v4483 = vsel %vm4453, %v4250, 0.0
        %v4484 = vsel %vm4454, %v4251, 0.0
        %v4485 = vsel %vm4455, %v4252, 0.0
        %v4486 = vsel %vm4456, %v4253, 0.0
        %v4487 = vsel %vm4457, %v4254, 0.0
        %v4488 = vsel %vm4458, %v4255, 0.0
        %v4489 = vsel %vm4459, %v4256, 0.0
        %v4490 = vsel %vm4460, %v4257, 0.0
        %v4491 = vsel %vm4461, %v4258, 0.0
        %v4492 = vsel %vm4462, %v4259, 0.0
        %v4493 = vsel %vm4463, %v4260, 0.0
        %v4494 = vsel %vm4464, %v4261, 0.0
        %v4495 = vsel %vm4465, %v4262, 0.0
        %v4496 = vsel %vm4466, %v4263, 0.0
        %v4497 = vsel %vm4467, %v4264, 0.0
        %v4498 = vsel %vm4468, %v4265, 0.0
        %v4499 = vsel %vm4469, %v4266, 0.0
        %v4500 = vsel %vm4470, %v4267, 0.0
        %v4501 = vsel %vm4471, %v4268, 0.0
        %v4502 = vsel %vm4472, %v4269, 0.0
        %v4503 = vsel %vm4473, %v4270, 0.0
        %v4504 = vsel %vm4474, %v4271, 0.0
        %v4505 = vsel %vm4475, %v4272, 0.0
        %v4506 = vpack.c.bf16 %v4476, %v4476
        %v4507 = vpack.c.bf16 %v4477, %v4477
        %v4508 = vpack.c.bf16 %v4478, %v4478
        %v4509 = vpack.c.bf16 %v4479, %v4479
        %v4510 = vpack.c.bf16 %v4480, %v4480
        %v4511 = vpack.c.bf16 %v4481, %v4481
        %v4512 = vpack.c.bf16 %v4482, %v4482
        %v4513 = vpack.c.bf16 %v4483, %v4483
        %v4514 = vpack.c.bf16 %v4484, %v4484
        %v4515 = vpack.c.bf16 %v4485, %v4485
        %v4516 = vpack.c.bf16 %v4486, %v4486
        %v4517 = vpack.c.bf16 %v4487, %v4487
        %v4518 = vpack.c.bf16 %v4488, %v4488
        %v4519 = vpack.c.bf16 %v4489, %v4489
        %v4520 = vpack.c.bf16 %v4490, %v4490
        %v4521 = vpack.c.bf16 %v4491, %v4491
        %v4522 = vpack.c.bf16 %v4492, %v4492
        %v4523 = vpack.c.bf16 %v4493, %v4493
        %v4524 = vpack.c.bf16 %v4494, %v4494
        %v4525 = vpack.c.bf16 %v4495, %v4495
        %v4526 = vpack.c.bf16 %v4496, %v4496
        %v4527 = vpack.c.bf16 %v4497, %v4497
        %v4528 = vpack.c.bf16 %v4498, %v4498
        %v4529 = vpack.c.bf16 %v4499, %v4499
        %v4530 = vpack.c.bf16 %v4500, %v4500
        %v4531 = vpack.c.bf16 %v4501, %v4501
        %v4532 = vpack.c.bf16 %v4502, %v4502
        %v4533 = vpack.c.bf16 %v4503, %v4503
        %v4534 = vpack.c.bf16 %v4504, %v4504
        %v4535 = vpack.c.bf16 %v4505, %v4505
        %4536 = vst [vmem:[#allocation2] sm:$0xf] %v4506
        %4537 = vst [vmem:[#allocation2 + $0x4] sm:$0xf] %v4507
        %4538 = vst [vmem:[#allocation2 + $0x8] sm:$0xf] %v4508
        %4539 = vst [vmem:[#allocation2 + $0xc] sm:$0xf] %v4509
        %4540 = vst [vmem:[#allocation2 + $0x10] sm:$0xf] %v4510
        %4541 = vst [vmem:[#allocation2 + $0x14] sm:$0xf] %v4511
        %4542 = vst [vmem:[#allocation2 + $0x18] sm:$0xf] %v4512
        %4543 = vst [vmem:[#allocation2 + $0x1c] sm:$0xf] %v4513
        %4544 = vst [vmem:[#allocation2 + $0x20] sm:$0xf] %v4514
        %4545 = vst [vmem:[#allocation2 + $0x24] sm:$0xf] %v4515
        %4546 = vst [vmem:[#allocation2 + $0x28] sm:$0xf] %v4516
        %4547 = vst [vmem:[#allocation2 + $0x2c] sm:$0xf] %v4517
        %4548 = vst [vmem:[#allocation2 + $0x30] sm:$0xf] %v4518
        %4549 = vst [vmem:[#allocation2 + $0x34] sm:$0xf] %v4519
        %4550 = vst [vmem:[#allocation2 + $0x38] sm:$0xf] %v4520
        %4551 = vst [vmem:[#allocation2 + $0x3c] sm:$0xf] %v4521
        %4552 = vst [vmem:[#allocation2 + $0x40] sm:$0xf] %v4522
        %4553 = vst [vmem:[#allocation2 + $0x44] sm:$0xf] %v4523
        %4554 = vst [vmem:[#allocation2 + $0x48] sm:$0xf] %v4524
        %4555 = vst [vmem:[#allocation2 + $0x4c] sm:$0xf] %v4525
        %4556 = vst [vmem:[#allocation2 + $0x50] sm:$0xf] %v4526
        %4557 = vst [vmem:[#allocation2 + $0x54] sm:$0xf] %v4527
        %4558 = vst [vmem:[#allocation2 + $0x58] sm:$0xf] %v4528
        %4559 = vst [vmem:[#allocation2 + $0x5c] sm:$0xf] %v4529
        %4560 = vst [vmem:[#allocation2 + $0x60] sm:$0xf] %v4530
        %4561 = vst [vmem:[#allocation2 + $0x64] sm:$0xf] %v4531
        %4562 = vst [vmem:[#allocation2 + $0x68] sm:$0xf] %v4532
        %4563 = vst [vmem:[#allocation2 + $0x6c] sm:$0xf] %v4533
        %4564 = vst [vmem:[#allocation2 + $0x70] sm:$0xf] %v4534
        %4565 = vst [vmem:[#allocation2 + $0x74] sm:$0xf] %v4535
        %v4566 = vld [vmem:[#allocation2] sm:$0xf]
        %v4567 = vld [vmem:[#allocation2 + $0x4] sm:$0xf]
        %v4568 = vld [vmem:[#allocation2 + $0xc] sm:$0xf]
        %v4569 = vld [vmem:[#allocation2 + $0x10] sm:$0xf]
        %v4570 = vld [vmem:[#allocation2 + $0x18] sm:$0xf]
        %v4571 = vld [vmem:[#allocation2 + $0x1c] sm:$0xf]
        %v4572 = vld [vmem:[#allocation2 + $0x24] sm:$0xf]
        %v4573 = vld [vmem:[#allocation2 + $0x28] sm:$0xf]
        %v4574 = vld [vmem:[#allocation2 + $0x30] sm:$0xf]
        %v4575 = vld [vmem:[#allocation2 + $0x34] sm:$0xf]
        %v4576 = vld [vmem:[#allocation2 + $0x3c] sm:$0xf]
        %v4577 = vld [vmem:[#allocation2 + $0x40] sm:$0xf]
        %v4578 = vld [vmem:[#allocation2 + $0x48] sm:$0xf]
        %v4579 = vld [vmem:[#allocation2 + $0x4c] sm:$0xf]
        %v4580 = vld [vmem:[#allocation2 + $0x54] sm:$0xf]
        %v4581 = vld [vmem:[#allocation2 + $0x58] sm:$0xf]
        %v4582 = vld [vmem:[#allocation8] sm:$0xf]
        %v4583 = vld [vmem:[#allocation8 + $0x4] sm:$0xf]
        %v4584 = vld [vmem:[#allocation8 + $0x8] sm:$0xf]
        %v4585 = vld [vmem:[#allocation8 + $0xc] sm:$0xf]
        %v4586 = vld [vmem:[#allocation8 + $0x10] sm:$0xf]
        %v4587 = vld [vmem:[#allocation8 + $0x14] sm:$0xf]
        %v4588 = vld [vmem:[#allocation8 + $0x18] sm:$0xf]
        %v4589 = vld [vmem:[#allocation8 + $0x1c] sm:$0xf]
        %v4590 = vld [vmem:[#allocation8 + $0x20] sm:$0xf]
        %v4591 = vld [vmem:[#allocation8 + $0x24] sm:$0xf]
        %v4592 = vld [vmem:[#allocation8 + $0x28] sm:$0xf]
        %v4593 = vld [vmem:[#allocation8 + $0x2c] sm:$0xf]
        %v4594 = vld [vmem:[#allocation8 + $0x30] sm:$0xf]
        %v4595 = vld [vmem:[#allocation8 + $0x34] sm:$0xf]
        %v4596 = vld [vmem:[#allocation8 + $0x38] sm:$0xf]
        %v4597 = vld [vmem:[#allocation8 + $0x3c] sm:$0xf]
        %v4598 = vld [vmem:[#allocation2 + $0x8] sm:$0x1]
        %v4599 = vld [vmem:[#allocation2 + $0x14] sm:$0x1]
        %v4600 = vld [vmem:[#allocation2 + $0x20] sm:$0x1]
        %v4601 = vld [vmem:[#allocation2 + $0x2c] sm:$0x1]
        %v4602 = vld [vmem:[#allocation2 + $0x38] sm:$0x1]
        %v4603 = vld [vmem:[#allocation2 + $0x44] sm:$0x1]
        %v4604 = vld [vmem:[#allocation2 + $0x50] sm:$0x1]
        %v4605 = vld [vmem:[#allocation2 + $0x5c] sm:$0x1]
        %v4607 = vshrl.u32 %v4566, 16
        %v4609 = vrot.slane %v4607, 4
        %v4610 = vshll.u32 %v4566, 16
        %v4612 = vrot.slane %v4610, 5
        %v4613 = vor.u32 %v4609, %v4612
        %v4614 = vrot.slane %v4613, 4
        %v4616 = vshll.u32 %v4567, 16
        %v4618 = vrot.slane %v4616, 5
        %v4619 = vsel %vm409, %v4614, %v4618
        %v4620 = vshrl.u32 %v4567, 16
        %v4622 = vrot.slane %v4620, 4
        %v4623 = vor.u32 %v4622, %v4618
        %v4624 = vrot.slane %v4623, 4
        %v4626 = vshll.u32 %v4598, 16
        %v4628 = vrot.slane %v4626, 5
        %v4629 = vsel %vm409, %v4624, %v4628
        %v4631 = vshrl.u32 %v4568, 16
        %v4633 = vrot.slane %v4631, 4
        %v4634 = vshll.u32 %v4568, 16
        %v4636 = vrot.slane %v4634, 5
        %v4637 = vor.u32 %v4633, %v4636
        %v4638 = vrot.slane %v4637, 4
        %v4640 = vshll.u32 %v4569, 16
        %v4642 = vrot.slane %v4640, 5
        %v4643 = vsel %vm409, %v4638, %v4642
        %v4644 = vshrl.u32 %v4569, 16
        %v4646 = vrot.slane %v4644, 4
        %v4647 = vor.u32 %v4646, %v4642
        %v4648 = vrot.slane %v4647, 4
        %v4650 = vshll.u32 %v4599, 16
        %v4652 = vrot.slane %v4650, 5
        %v4653 = vsel %vm409, %v4648, %v4652
        %v4655 = vshrl.u32 %v4570, 16
        %v4657 = vrot.slane %v4655, 4
        %v4658 = vshll.u32 %v4570, 16
        %v4660 = vrot.slane %v4658, 5
        %v4661 = vor.u32 %v4657, %v4660
        %v4662 = vrot.slane %v4661, 4
        %v4664 = vshll.u32 %v4571, 16
        %v4666 = vrot.slane %v4664, 5
        %v4667 = vsel %vm409, %v4662, %v4666
        %v4668 = vshrl.u32 %v4571, 16
        %v4670 = vrot.slane %v4668, 4
        %v4671 = vor.u32 %v4670, %v4666
        %v4672 = vrot.slane %v4671, 4
        %v4674 = vshll.u32 %v4600, 16
        %v4676 = vrot.slane %v4674, 5
        %v4677 = vsel %vm409, %v4672, %v4676
        %v4679 = vshrl.u32 %v4572, 16
        %v4681 = vrot.slane %v4679, 4
        %v4682 = vshll.u32 %v4572, 16
        %v4684 = vrot.slane %v4682, 5
        %v4685 = vor.u32 %v4681, %v4684
        %v4686 = vrot.slane %v4685, 4
        %v4688 = vshll.u32 %v4573, 16
        %v4690 = vrot.slane %v4688, 5
        %v4691 = vsel %vm409, %v4686, %v4690
        %v4692 = vshrl.u32 %v4573, 16
        %v4694 = vrot.slane %v4692, 4
        %v4695 = vor.u32 %v4694, %v4690
        %v4696 = vrot.slane %v4695, 4
        %v4698 = vshll.u32 %v4601, 16
        %v4700 = vrot.slane %v4698, 5
        %v4701 = vsel %vm409, %v4696, %v4700
        %v4703 = vshrl.u32 %v4574, 16
        %v4705 = vrot.slane %v4703, 4
        %v4706 = vshll.u32 %v4574, 16
        %v4708 = vrot.slane %v4706, 5
        %v4709 = vor.u32 %v4705, %v4708
        %v4710 = vrot.slane %v4709, 4
        %v4712 = vshll.u32 %v4575, 16
        %v4714 = vrot.slane %v4712, 5
        %v4715 = vsel %vm409, %v4710, %v4714
        %v4716 = vshrl.u32 %v4575, 16
        %v4718 = vrot.slane %v4716, 4
        %v4719 = vor.u32 %v4718, %v4714
        %v4720 = vrot.slane %v4719, 4
        %v4722 = vshll.u32 %v4602, 16
        %v4724 = vrot.slane %v4722, 5
        %v4725 = vsel %vm409, %v4720, %v4724
        %v4727 = vshrl.u32 %v4576, 16
        %v4729 = vrot.slane %v4727, 4
        %v4730 = vshll.u32 %v4576, 16
        %v4732 = vrot.slane %v4730, 5
        %v4733 = vor.u32 %v4729, %v4732
        %v4734 = vrot.slane %v4733, 4
        %v4736 = vshll.u32 %v4577, 16
        %v4738 = vrot.slane %v4736, 5
        %v4739 = vsel %vm409, %v4734, %v4738
        %v4740 = vshrl.u32 %v4577, 16
        %v4742 = vrot.slane %v4740, 4
        %v4743 = vor.u32 %v4742, %v4738
        %v4744 = vrot.slane %v4743, 4
        %v4746 = vshll.u32 %v4603, 16
        %v4748 = vrot.slane %v4746, 5
        %v4749 = vsel %vm409, %v4744, %v4748
        %v4751 = vshrl.u32 %v4578, 16
        %v4753 = vrot.slane %v4751, 4
        %v4754 = vshll.u32 %v4578, 16
        %v4756 = vrot.slane %v4754, 5
        %v4757 = vor.u32 %v4753, %v4756
        %v4758 = vrot.slane %v4757, 4
        %v4760 = vshll.u32 %v4579, 16
        %v4762 = vrot.slane %v4760, 5
        %v4763 = vsel %vm409, %v4758, %v4762
        %v4764 = vshrl.u32 %v4579, 16
        %v4766 = vrot.slane %v4764, 4
        %v4767 = vor.u32 %v4766, %v4762
        %v4768 = vrot.slane %v4767, 4
        %v4770 = vshll.u32 %v4604, 16
        %v4772 = vrot.slane %v4770, 5
        %v4773 = vsel %vm409, %v4768, %v4772
        %v4775 = vshrl.u32 %v4580, 16
        %v4777 = vrot.slane %v4775, 4
        %v4778 = vshll.u32 %v4580, 16
        %v4780 = vrot.slane %v4778, 5
        %v4781 = vor.u32 %v4777, %v4780
        %v4782 = vrot.slane %v4781, 4
        %v4784 = vshll.u32 %v4581, 16
        %v4786 = vrot.slane %v4784, 5
        %v4787 = vsel %vm409, %v4782, %v4786
        %v4788 = vshrl.u32 %v4581, 16
        %v4790 = vrot.slane %v4788, 4
        %v4791 = vor.u32 %v4790, %v4786
        %v4792 = vrot.slane %v4791, 4
        %v4794 = vshll.u32 %v4605, 16
        %v4796 = vrot.slane %v4794, 5
        %v4797 = vsel %vm409, %v4792, %v4796
        %s4798 = scalar_lea.vmem [#allocation8], 64
        %v4799 = vld [vmem:[%s4798] sm:$0xf]
        %v4800 = vld [vmem:[%s4798 + $0x4] sm:$0xf]
        %v4801 = vld [vmem:[%s4798 + $0x8] sm:$0xf]
        %v4802 = vld [vmem:[%s4798 + $0xc] sm:$0xf]
        %v4803 = vld [vmem:[%s4798 + $0x10] sm:$0xf]
        %v4804 = vld [vmem:[%s4798 + $0x14] sm:$0xf]
        %v4805 = vld [vmem:[%s4798 + $0x18] sm:$0xf]
        %v4806 = vld [vmem:[%s4798 + $0x1c] sm:$0xf]
        %v4807 = vld [vmem:[%s4798 + $0x20] sm:$0xf]
        %v4808 = vld [vmem:[%s4798 + $0x24] sm:$0xf]
        %v4809 = vld [vmem:[%s4798 + $0x28] sm:$0xf]
        %v4810 = vld [vmem:[%s4798 + $0x2c] sm:$0xf]
        %v4811 = vld [vmem:[%s4798 + $0x30] sm:$0xf]
        %v4812 = vld [vmem:[%s4798 + $0x34] sm:$0xf]
        %v4813 = vld [vmem:[%s4798 + $0x38] sm:$0xf]
        %v4814 = vld [vmem:[%s4798 + $0x3c] sm:$0xf]
        %v4815 = vunpack.c.l.b16 %v4619
        %v4816 = vunpack.c.l.b16 %v4629
        %v4817 = vunpack.c.l.b16 %v4643
        %v4818 = vunpack.c.l.b16 %v4653
        %v4819 = vunpack.c.l.b16 %v4667
        %v4820 = vunpack.c.l.b16 %v4677
        %v4821 = vunpack.c.l.b16 %v4691
        %v4822 = vunpack.c.l.b16 %v4701
        %v4823 = vunpack.c.l.b16 %v4715
        %v4824 = vunpack.c.l.b16 %v4725
        %v4825 = vunpack.c.l.b16 %v4739
        %v4826 = vunpack.c.l.b16 %v4749
        %v4827 = vunpack.c.l.b16 %v4763
        %v4828 = vunpack.c.l.b16 %v4773
        %v4829 = vunpack.c.l.b16 %v4787
        %v4830 = vunpack.c.l.b16 %v4797
        %v4831 = vpack.c.b16 %v4816, %v4815
        %v4832 = vpack.c.b16 %v4818, %v4817
        %v4833 = vpack.c.b16 %v4820, %v4819
        %v4834 = vpack.c.b16 %v4822, %v4821
        %v4835 = vpack.c.b16 %v4824, %v4823
        %v4836 = vpack.c.b16 %v4826, %v4825
        %v4837 = vpack.c.b16 %v4828, %v4827
        %v4838 = vpack.c.b16 %v4830, %v4829
        %v4863 = vunpack.c.l.b16 %v4799
        %v4864 = vunpack.c.l.b16 %v4800
        %v4865 = vunpack.c.l.b16 %v4801
        %v4866 = vunpack.c.l.b16 %v4802
        %v4867 = vunpack.c.l.b16 %v4803
        %v4868 = vunpack.c.l.b16 %v4804
        %v4869 = vunpack.c.l.b16 %v4805
        %v4870 = vunpack.c.l.b16 %v4806
        %v4871 = vunpack.c.l.b16 %v4807
        %v4872 = vunpack.c.l.b16 %v4808
        %v4873 = vunpack.c.l.b16 %v4809
        %v4874 = vunpack.c.l.b16 %v4810
        %v4875 = vunpack.c.l.b16 %v4811
        %v4876 = vunpack.c.l.b16 %v4812
        %v4877 = vunpack.c.l.b16 %v4813
        %v4878 = vunpack.c.l.b16 %v4814
        %v4879 = vpack.c.b16 %v4864, %v4863
        %v4880 = vpack.c.b16 %v4866, %v4865
        %v4881 = vpack.c.b16 %v4868, %v4867
        %v4882 = vpack.c.b16 %v4870, %v4869
        %v4883 = vpack.c.b16 %v4872, %v4871
        %v4884 = vpack.c.b16 %v4874, %v4873
        %v4885 = vpack.c.b16 %v4876, %v4875
        %v4886 = vpack.c.b16 %v4878, %v4877
        %4895 = vmatpush.bf16.msra.mxu0 %v4886
        %4896 = vmatpush.bf16.msra.mxu0 %v4885
        %4897 = vmatpush.bf16.msra.mxu0 %v4884
        %4898 = vmatpush.bf16.msra.mxu0 %v4883
        %4899 = vmatpush.bf16.msra.mxu0 %v4882
        %4900 = vmatpush.bf16.msra.mxu0 %v4881
        %4901 = vmatpush.bf16.msra.mxu0 %v4880
        %4902 = vmatpush.bf16.msra.mxu0 %v4879
        %4903 = vmatmul.bf16.gmra.mxu0 %v4831
        %v4904 = vpop.f32.mrf.mxu0
        %v4905 = vadd.f32 0.0, %v4904
        %v4906 = vpop.f32.mrf.mxu0
        %v4907 = vadd.f32 0.0, %v4906
        %4908 = vmatmul.bf16.gmra.mxu0 %v4832
        %v4909 = vpop.f32.mrf.mxu0
        %v4910 = vadd.f32 0.0, %v4909
        %v4911 = vpop.f32.mrf.mxu0
        %v4912 = vadd.f32 0.0, %v4911
        %4913 = vmatmul.bf16.gmra.mxu0 %v4833
        %v4914 = vpop.f32.mrf.mxu0
        %v4915 = vadd.f32 0.0, %v4914
        %v4916 = vpop.f32.mrf.mxu0
        %v4917 = vadd.f32 0.0, %v4916
        %4918 = vmatmul.bf16.gmra.mxu0 %v4834
        %v4919 = vpop.f32.mrf.mxu0
        %v4920 = vadd.f32 0.0, %v4919
        %v4921 = vpop.f32.mrf.mxu0
        %v4922 = vadd.f32 0.0, %v4921
        %4923 = vmatmul.bf16.gmra.mxu0 %v4835
        %v4924 = vpop.f32.mrf.mxu0
        %v4925 = vadd.f32 0.0, %v4924
        %v4926 = vpop.f32.mrf.mxu0
        %v4927 = vadd.f32 0.0, %v4926
        %4928 = vmatmul.bf16.gmra.mxu0 %v4836
        %v4929 = vpop.f32.mrf.mxu0
        %v4930 = vadd.f32 0.0, %v4929
        %v4931 = vpop.f32.mrf.mxu0
        %v4932 = vadd.f32 0.0, %v4931
        %4933 = vmatmul.bf16.gmra.mxu0 %v4837
        %v4934 = vpop.f32.mrf.mxu0
        %v4935 = vadd.f32 0.0, %v4934
        %v4936 = vpop.f32.mrf.mxu0
        %v4937 = vadd.f32 0.0, %v4936
        %4938 = vmatmul.bf16.gmra.mxu0 %v4838
        %v4939 = vpop.f32.mrf.mxu0
        %v4940 = vadd.f32 0.0, %v4939
        %v4941 = vpop.f32.mrf.mxu0
        %v4942 = vadd.f32 0.0, %v4941
        %4943 = vdwg.mxu0
        %v4960 = vunpack.c.l.b16 %v4566
        %v4961 = vunpack.c.l.b16 %v4567
        %v4962 = vunpack.c.l.b16 %v4568
        %v4963 = vunpack.c.l.b16 %v4569
        %v4964 = vunpack.c.l.b16 %v4570
        %v4965 = vunpack.c.l.b16 %v4571
        %v4966 = vunpack.c.l.b16 %v4572
        %v4967 = vunpack.c.l.b16 %v4573
        %v4968 = vunpack.c.l.b16 %v4574
        %v4969 = vunpack.c.l.b16 %v4575
        %v4970 = vunpack.c.l.b16 %v4576
        %v4971 = vunpack.c.l.b16 %v4577
        %v4972 = vunpack.c.l.b16 %v4578
        %v4973 = vunpack.c.l.b16 %v4579
        %v4974 = vunpack.c.l.b16 %v4580
        %v4975 = vunpack.c.l.b16 %v4581
        %v4976 = vpack.c.b16 %v4961, %v4960
        %v4977 = vpack.c.b16 %v4963, %v4962
        %v4978 = vpack.c.b16 %v4965, %v4964
        %v4979 = vpack.c.b16 %v4967, %v4966
        %v4980 = vpack.c.b16 %v4969, %v4968
        %v4981 = vpack.c.b16 %v4971, %v4970
        %v4982 = vpack.c.b16 %v4973, %v4972
        %v4983 = vpack.c.b16 %v4975, %v4974
        %v5008 = vunpack.c.l.b16 %v4582
        %v5009 = vunpack.c.l.b16 %v4583
        %v5010 = vunpack.c.l.b16 %v4584
        %v5011 = vunpack.c.l.b16 %v4585
        %v5012 = vunpack.c.l.b16 %v4586
        %v5013 = vunpack.c.l.b16 %v4587
        %v5014 = vunpack.c.l.b16 %v4588
        %v5015 = vunpack.c.l.b16 %v4589
        %v5016 = vunpack.c.l.b16 %v4590
        %v5017 = vunpack.c.l.b16 %v4591
        %v5018 = vunpack.c.l.b16 %v4592
        %v5019 = vunpack.c.l.b16 %v4593
        %v5020 = vunpack.c.l.b16 %v4594
        %v5021 = vunpack.c.l.b16 %v4595
        %v5022 = vunpack.c.l.b16 %v4596
        %v5023 = vunpack.c.l.b16 %v4597
        %v5024 = vpack.c.b16 %v5009, %v5008
        %v5025 = vpack.c.b16 %v5011, %v5010
        %v5026 = vpack.c.b16 %v5013, %v5012
        %v5027 = vpack.c.b16 %v5015, %v5014
        %v5028 = vpack.c.b16 %v5017, %v5016
        %v5029 = vpack.c.b16 %v5019, %v5018
        %v5030 = vpack.c.b16 %v5021, %v5020
        %v5031 = vpack.c.b16 %v5023, %v5022
        %5040 = vmatpush.bf16.msra.mxu0 %v5031
        %5041 = vmatpush.bf16.msra.mxu0 %v5030
        %5042 = vmatpush.bf16.msra.mxu0 %v5029
        %5043 = vmatpush.bf16.msra.mxu0 %v5028
        %5044 = vmatpush.bf16.msra.mxu0 %v5027
        %5045 = vmatpush.bf16.msra.mxu0 %v5026
        %5046 = vmatpush.bf16.msra.mxu0 %v5025
        %5047 = vmatpush.bf16.msra.mxu0 %v5024
        %5048 = vmatmul.bf16.gmra.mxu0 %v4976
        %v5049 = vpop.f32.mrf.mxu0
        %v5050 = vadd.f32 %v4905, %v5049
        %v5051 = vpop.f32.mrf.mxu0
        %v5052 = vadd.f32 %v4907, %v5051
        %5053 = vmatmul.bf16.gmra.mxu0 %v4977
        %v5054 = vpop.f32.mrf.mxu0
        %v5055 = vadd.f32 %v4910, %v5054
        %v5056 = vpop.f32.mrf.mxu0
        %v5057 = vadd.f32 %v4912, %v5056
        %5058 = vmatmul.bf16.gmra.mxu0 %v4978
        %v5059 = vpop.f32.mrf.mxu0
        %v5060 = vadd.f32 %v4915, %v5059
        %v5061 = vpop.f32.mrf.mxu0
        %v5062 = vadd.f32 %v4917, %v5061
        %5063 = vmatmul.bf16.gmra.mxu0 %v4979
        %v5064 = vpop.f32.mrf.mxu0
        %v5065 = vadd.f32 %v4920, %v5064
        %v5066 = vpop.f32.mrf.mxu0
        %v5067 = vadd.f32 %v4922, %v5066
        %5068 = vmatmul.bf16.gmra.mxu0 %v4980
        %v5069 = vpop.f32.mrf.mxu0
        %v5070 = vadd.f32 %v4925, %v5069
        %v5071 = vpop.f32.mrf.mxu0
        %v5072 = vadd.f32 %v4927, %v5071
        %5073 = vmatmul.bf16.gmra.mxu0 %v4981
        %v5074 = vpop.f32.mrf.mxu0
        %v5075 = vadd.f32 %v4930, %v5074
        %v5076 = vpop.f32.mrf.mxu0
        %v5077 = vadd.f32 %v4932, %v5076
        %5078 = vmatmul.bf16.gmra.mxu0 %v4982
        %v5079 = vpop.f32.mrf.mxu0
        %v5080 = vadd.f32 %v4935, %v5079
        %v5081 = vpop.f32.mrf.mxu0
        %v5082 = vadd.f32 %v4937, %v5081
        %5083 = vmatmul.bf16.gmra.mxu0 %v4983
        %v5084 = vpop.f32.mrf.mxu0
        %v5085 = vadd.f32 %v4940, %v5084
        %v5086 = vpop.f32.mrf.mxu0
        %v5087 = vadd.f32 %v4942, %v5086
        %5088 = vdwg.mxu0
        %v5089 = vld [vmem:[#allocation2] sm:$0xe]
        %v5090 = vld [vmem:[#allocation2 + $0xc] sm:$0xe]
        %v5091 = vld [vmem:[#allocation2 + $0x18] sm:$0xe]
        %v5092 = vld [vmem:[#allocation2 + $0x24] sm:$0xe]
        %v5093 = vld [vmem:[#allocation2 + $0x30] sm:$0xe]
        %v5094 = vld [vmem:[#allocation2 + $0x3c] sm:$0xe]
        %v5095 = vld [vmem:[#allocation2 + $0x48] sm:$0xe]
        %v5096 = vld [vmem:[#allocation2 + $0x54] sm:$0xe]
        %v5113 = vrot.slane %v5089, 5
        %v5114 = vrot.slane %v5113, 4
        %v5115 = vrot.slane %v4567, 5
        %v5116 = vsel %vm1213, %v5114, %v5115
        %v5117 = vrot.slane %v5115, 4
        %v5118 = vrot.slane %v4598, 5
        %v5119 = vsel %vm1213, %v5117, %v5118
        %v5120 = vrot.slane %v5090, 5
        %v5121 = vrot.slane %v5120, 4
        %v5122 = vrot.slane %v4569, 5
        %v5123 = vsel %vm1213, %v5121, %v5122
        %v5124 = vrot.slane %v5122, 4
        %v5125 = vrot.slane %v4599, 5
        %v5126 = vsel %vm1213, %v5124, %v5125
        %v5127 = vrot.slane %v5091, 5
        %v5128 = vrot.slane %v5127, 4
        %v5129 = vrot.slane %v4571, 5
        %v5130 = vsel %vm1213, %v5128, %v5129
        %v5131 = vrot.slane %v5129, 4
        %v5132 = vrot.slane %v4600, 5
        %v5133 = vsel %vm1213, %v5131, %v5132
        %v5134 = vrot.slane %v5092, 5
        %v5135 = vrot.slane %v5134, 4
        %v5136 = vrot.slane %v4573, 5
        %v5137 = vsel %vm1213, %v5135, %v5136
        %v5138 = vrot.slane %v5136, 4
        %v5139 = vrot.slane %v4601, 5
        %v5140 = vsel %vm1213, %v5138, %v5139
        %v5141 = vrot.slane %v5093, 5
        %v5142 = vrot.slane %v5141, 4
        %v5143 = vrot.slane %v4575, 5
        %v5144 = vsel %vm1213, %v5142, %v5143
        %v5145 = vrot.slane %v5143, 4
        %v5146 = vrot.slane %v4602, 5
        %v5147 = vsel %vm1213, %v5145, %v5146
        %v5148 = vrot.slane %v5094, 5
        %v5149 = vrot.slane %v5148, 4
        %v5150 = vrot.slane %v4577, 5
        %v5151 = vsel %vm1213, %v5149, %v5150
        %v5152 = vrot.slane %v5150, 4
        %v5153 = vrot.slane %v4603, 5
        %v5154 = vsel %vm1213, %v5152, %v5153
        %v5155 = vrot.slane %v5095, 5
        %v5156 = vrot.slane %v5155, 4
        %v5157 = vrot.slane %v4579, 5
        %v5158 = vsel %vm1213, %v5156, %v5157
        %v5159 = vrot.slane %v5157, 4
        %v5160 = vrot.slane %v4604, 5
        %v5161 = vsel %vm1213, %v5159, %v5160
        %v5162 = vrot.slane %v5096, 5
        %v5163 = vrot.slane %v5162, 4
        %v5164 = vrot.slane %v4581, 5
        %v5165 = vsel %vm1213, %v5163, %v5164
        %v5166 = vrot.slane %v5164, 4
        %v5167 = vrot.slane %v4605, 5
        %v5168 = vsel %vm1213, %v5166, %v5167
        %s5169 = scalar_lea.vmem [#allocation8], 128
        %v5170 = vld [vmem:[%s5169] sm:$0xf]
        %v5171 = vld [vmem:[%s5169 + $0x4] sm:$0xf]
        %v5172 = vld [vmem:[%s5169 + $0x8] sm:$0xf]
        %v5173 = vld [vmem:[%s5169 + $0xc] sm:$0xf]
        %v5174 = vld [vmem:[%s5169 + $0x10] sm:$0xf]
        %v5175 = vld [vmem:[%s5169 + $0x14] sm:$0xf]
        %v5176 = vld [vmem:[%s5169 + $0x18] sm:$0xf]
        %v5177 = vld [vmem:[%s5169 + $0x1c] sm:$0xf]
        %v5178 = vld [vmem:[%s5169 + $0x20] sm:$0xf]
        %v5179 = vld [vmem:[%s5169 + $0x24] sm:$0xf]
        %v5180 = vld [vmem:[%s5169 + $0x28] sm:$0xf]
        %v5181 = vld [vmem:[%s5169 + $0x2c] sm:$0xf]
        %v5182 = vld [vmem:[%s5169 + $0x30] sm:$0xf]
        %v5183 = vld [vmem:[%s5169 + $0x34] sm:$0xf]
        %v5184 = vld [vmem:[%s5169 + $0x38] sm:$0xf]
        %v5185 = vld [vmem:[%s5169 + $0x3c] sm:$0xf]
        %v5186 = vunpack.c.l.b16 %v5116
        %v5187 = vunpack.c.l.b16 %v5119
        %v5188 = vunpack.c.l.b16 %v5123
        %v5189 = vunpack.c.l.b16 %v5126
        %v5190 = vunpack.c.l.b16 %v5130
        %v5191 = vunpack.c.l.b16 %v5133
        %v5192 = vunpack.c.l.b16 %v5137
        %v5193 = vunpack.c.l.b16 %v5140
        %v5194 = vunpack.c.l.b16 %v5144
        %v5195 = vunpack.c.l.b16 %v5147
        %v5196 = vunpack.c.l.b16 %v5151
        %v5197 = vunpack.c.l.b16 %v5154
        %v5198 = vunpack.c.l.b16 %v5158
        %v5199 = vunpack.c.l.b16 %v5161
        %v5200 = vunpack.c.l.b16 %v5165
        %v5201 = vunpack.c.l.b16 %v5168
        %v5202 = vpack.c.b16 %v5187, %v5186
        %v5203 = vpack.c.b16 %v5189, %v5188
        %v5204 = vpack.c.b16 %v5191, %v5190
        %v5205 = vpack.c.b16 %v5193, %v5192
        %v5206 = vpack.c.b16 %v5195, %v5194
        %v5207 = vpack.c.b16 %v5197, %v5196
        %v5208 = vpack.c.b16 %v5199, %v5198
        %v5209 = vpack.c.b16 %v5201, %v5200
        %v5234 = vunpack.c.l.b16 %v5170
        %v5235 = vunpack.c.l.b16 %v5171
        %v5236 = vunpack.c.l.b16 %v5172
        %v5237 = vunpack.c.l.b16 %v5173
        %v5238 = vunpack.c.l.b16 %v5174
        %v5239 = vunpack.c.l.b16 %v5175
        %v5240 = vunpack.c.l.b16 %v5176
        %v5241 = vunpack.c.l.b16 %v5177
        %v5242 = vunpack.c.l.b16 %v5178
        %v5243 = vunpack.c.l.b16 %v5179
        %v5244 = vunpack.c.l.b16 %v5180
        %v5245 = vunpack.c.l.b16 %v5181
        %v5246 = vunpack.c.l.b16 %v5182
        %v5247 = vunpack.c.l.b16 %v5183
        %v5248 = vunpack.c.l.b16 %v5184
        %v5249 = vunpack.c.l.b16 %v5185
        %v5250 = vpack.c.b16 %v5235, %v5234
        %v5251 = vpack.c.b16 %v5237, %v5236
        %v5252 = vpack.c.b16 %v5239, %v5238
        %v5253 = vpack.c.b16 %v5241, %v5240
        %v5254 = vpack.c.b16 %v5243, %v5242
        %v5255 = vpack.c.b16 %v5245, %v5244
        %v5256 = vpack.c.b16 %v5247, %v5246
        %v5257 = vpack.c.b16 %v5249, %v5248
        %5266 = vmatpush.bf16.msra.mxu0 %v5257
        %5267 = vmatpush.bf16.msra.mxu0 %v5256
        %5268 = vmatpush.bf16.msra.mxu0 %v5255
        %5269 = vmatpush.bf16.msra.mxu0 %v5254
        %5270 = vmatpush.bf16.msra.mxu0 %v5253
        %5271 = vmatpush.bf16.msra.mxu0 %v5252
        %5272 = vmatpush.bf16.msra.mxu0 %v5251
        %5273 = vmatpush.bf16.msra.mxu0 %v5250
        %5274 = vmatmul.bf16.gmra.mxu0 %v5202
        %v5275 = vpop.f32.mrf.mxu0
        %v5276 = vadd.f32 0.0, %v5275
        %v5277 = vpop.f32.mrf.mxu0
        %v5278 = vadd.f32 0.0, %v5277
        %5279 = vmatmul.bf16.gmra.mxu0 %v5203
        %v5280 = vpop.f32.mrf.mxu0
        %v5281 = vadd.f32 0.0, %v5280
        %v5282 = vpop.f32.mrf.mxu0
        %v5283 = vadd.f32 0.0, %v5282
        %5284 = vmatmul.bf16.gmra.mxu0 %v5204
        %v5285 = vpop.f32.mrf.mxu0
        %v5286 = vadd.f32 0.0, %v5285
        %v5287 = vpop.f32.mrf.mxu0
        %v5288 = vadd.f32 0.0, %v5287
        %5289 = vmatmul.bf16.gmra.mxu0 %v5205
        %v5290 = vpop.f32.mrf.mxu0
        %v5291 = vadd.f32 0.0, %v5290
        %v5292 = vpop.f32.mrf.mxu0
        %v5293 = vadd.f32 0.0, %v5292
        %5294 = vmatmul.bf16.gmra.mxu0 %v5206
        %v5295 = vpop.f32.mrf.mxu0
        %v5296 = vadd.f32 0.0, %v5295
        %v5297 = vpop.f32.mrf.mxu0
        %v5298 = vadd.f32 0.0, %v5297
        %5299 = vmatmul.bf16.gmra.mxu0 %v5207
        %v5300 = vpop.f32.mrf.mxu0
        %v5301 = vadd.f32 0.0, %v5300
        %v5302 = vpop.f32.mrf.mxu0
        %v5303 = vadd.f32 0.0, %v5302
        %5304 = vmatmul.bf16.gmra.mxu0 %v5208
        %v5305 = vpop.f32.mrf.mxu0
        %v5306 = vadd.f32 0.0, %v5305
        %v5307 = vpop.f32.mrf.mxu0
        %v5308 = vadd.f32 0.0, %v5307
        %5309 = vmatmul.bf16.gmra.mxu0 %v5209
        %v5310 = vpop.f32.mrf.mxu0
        %v5311 = vadd.f32 0.0, %v5310
        %v5312 = vpop.f32.mrf.mxu0
        %v5313 = vadd.f32 0.0, %v5312
        %5314 = vdwg.mxu0
        %v5315 = vadd.f32 %v5050, %v5276
        %v5316 = vadd.f32 %v5052, %v5278
        %v5317 = vadd.f32 %v5055, %v5281
        %v5318 = vadd.f32 %v5057, %v5283
        %v5319 = vadd.f32 %v5060, %v5286
        %v5320 = vadd.f32 %v5062, %v5288
        %v5321 = vadd.f32 %v5065, %v5291
        %v5322 = vadd.f32 %v5067, %v5293
        %v5323 = vadd.f32 %v5070, %v5296
        %v5324 = vadd.f32 %v5072, %v5298
        %v5325 = vadd.f32 %v5075, %v5301
        %v5326 = vadd.f32 %v5077, %v5303
        %v5327 = vadd.f32 %v5080, %v5306
        %v5328 = vadd.f32 %v5082, %v5308
        %v5329 = vadd.f32 %v5085, %v5311
        %v5330 = vadd.f32 %v5087, %v5313
        %s5331 = scalar_lea.vmem [#allocation2], 12
        %v5332 = vld [vmem:[%s5331] sm:$0xf]
        %v5333 = vld [vmem:[%s5331 + $0x4] sm:$0xf]
        %v5334 = vld [vmem:[%s5331 + $0xc] sm:$0xf]
        %v5335 = vld [vmem:[%s5331 + $0x10] sm:$0xf]
        %v5336 = vld [vmem:[%s5331 + $0x18] sm:$0xf]
        %v5337 = vld [vmem:[%s5331 + $0x1c] sm:$0xf]
        %v5338 = vld [vmem:[%s5331 + $0x24] sm:$0xf]
        %v5339 = vld [vmem:[%s5331 + $0x28] sm:$0xf]
        %v5340 = vld [vmem:[%s5331 + $0x30] sm:$0xf]
        %v5341 = vld [vmem:[%s5331 + $0x34] sm:$0xf]
        %v5342 = vld [vmem:[%s5331 + $0x3c] sm:$0xf]
        %v5343 = vld [vmem:[%s5331 + $0x40] sm:$0xf]
        %v5344 = vld [vmem:[%s5331 + $0x48] sm:$0xf]
        %v5345 = vld [vmem:[%s5331 + $0x4c] sm:$0xf]
        %v5346 = vld [vmem:[%s5331 + $0x54] sm:$0xf]
        %v5347 = vld [vmem:[%s5331 + $0x58] sm:$0xf]
        %s5348 = scalar_lea.vmem [#allocation8], 192
        %v5349 = vld [vmem:[%s5348] sm:$0xf]
        %v5350 = vld [vmem:[%s5348 + $0x4] sm:$0xf]
        %v5351 = vld [vmem:[%s5348 + $0x8] sm:$0xf]
        %v5352 = vld [vmem:[%s5348 + $0xc] sm:$0xf]
        %v5353 = vld [vmem:[%s5348 + $0x10] sm:$0xf]
        %v5354 = vld [vmem:[%s5348 + $0x14] sm:$0xf]
        %v5355 = vld [vmem:[%s5348 + $0x18] sm:$0xf]
        %v5356 = vld [vmem:[%s5348 + $0x1c] sm:$0xf]
        %v5357 = vld [vmem:[%s5348 + $0x20] sm:$0xf]
        %v5358 = vld [vmem:[%s5348 + $0x24] sm:$0xf]
        %v5359 = vld [vmem:[%s5348 + $0x28] sm:$0xf]
        %v5360 = vld [vmem:[%s5348 + $0x2c] sm:$0xf]
        %v5361 = vld [vmem:[%s5348 + $0x30] sm:$0xf]
        %v5362 = vld [vmem:[%s5348 + $0x34] sm:$0xf]
        %v5363 = vld [vmem:[%s5348 + $0x38] sm:$0xf]
        %v5364 = vld [vmem:[%s5348 + $0x3c] sm:$0xf]
        %v5381 = vunpack.c.l.b16 %v5332
        %v5382 = vunpack.c.l.b16 %v5333
        %v5383 = vunpack.c.l.b16 %v5334
        %v5384 = vunpack.c.l.b16 %v5335
        %v5385 = vunpack.c.l.b16 %v5336
        %v5386 = vunpack.c.l.b16 %v5337
        %v5387 = vunpack.c.l.b16 %v5338
        %v5388 = vunpack.c.l.b16 %v5339
        %v5389 = vunpack.c.l.b16 %v5340
        %v5390 = vunpack.c.l.b16 %v5341
        %v5391 = vunpack.c.l.b16 %v5342
        %v5392 = vunpack.c.l.b16 %v5343
        %v5393 = vunpack.c.l.b16 %v5344
        %v5394 = vunpack.c.l.b16 %v5345
        %v5395 = vunpack.c.l.b16 %v5346
        %v5396 = vunpack.c.l.b16 %v5347
        %v5397 = vpack.c.b16 %v5382, %v5381
        %v5398 = vpack.c.b16 %v5384, %v5383
        %v5399 = vpack.c.b16 %v5386, %v5385
        %v5400 = vpack.c.b16 %v5388, %v5387
        %v5401 = vpack.c.b16 %v5390, %v5389
        %v5402 = vpack.c.b16 %v5392, %v5391
        %v5403 = vpack.c.b16 %v5394, %v5393
        %v5404 = vpack.c.b16 %v5396, %v5395
        %v5429 = vunpack.c.l.b16 %v5349
        %v5430 = vunpack.c.l.b16 %v5350
        %v5431 = vunpack.c.l.b16 %v5351
        %v5432 = vunpack.c.l.b16 %v5352
        %v5433 = vunpack.c.l.b16 %v5353
        %v5434 = vunpack.c.l.b16 %v5354
        %v5435 = vunpack.c.l.b16 %v5355
        %v5436 = vunpack.c.l.b16 %v5356
        %v5437 = vunpack.c.l.b16 %v5357
        %v5438 = vunpack.c.l.b16 %v5358
        %v5439 = vunpack.c.l.b16 %v5359
        %v5440 = vunpack.c.l.b16 %v5360
        %v5441 = vunpack.c.l.b16 %v5361
        %v5442 = vunpack.c.l.b16 %v5362
        %v5443 = vunpack.c.l.b16 %v5363
        %v5444 = vunpack.c.l.b16 %v5364
        %v5445 = vpack.c.b16 %v5430, %v5429
        %v5446 = vpack.c.b16 %v5432, %v5431
        %v5447 = vpack.c.b16 %v5434, %v5433
        %v5448 = vpack.c.b16 %v5436, %v5435
        %v5449 = vpack.c.b16 %v5438, %v5437
        %v5450 = vpack.c.b16 %v5440, %v5439
        %v5451 = vpack.c.b16 %v5442, %v5441
        %v5452 = vpack.c.b16 %v5444, %v5443
        %5461 = vmatpush.bf16.msra.mxu0 %v5452
        %5462 = vmatpush.bf16.msra.mxu0 %v5451
        %5463 = vmatpush.bf16.msra.mxu0 %v5450
        %5464 = vmatpush.bf16.msra.mxu0 %v5449
        %5465 = vmatpush.bf16.msra.mxu0 %v5448
        %5466 = vmatpush.bf16.msra.mxu0 %v5447
        %5467 = vmatpush.bf16.msra.mxu0 %v5446
        %5468 = vmatpush.bf16.msra.mxu0 %v5445
        %5469 = vmatmul.bf16.gmra.mxu0 %v5397
        %v5470 = vpop.f32.mrf.mxu0
        %v5471 = vadd.f32 0.0, %v5470
        %v5472 = vpop.f32.mrf.mxu0
        %v5473 = vadd.f32 0.0, %v5472
        %5474 = vmatmul.bf16.gmra.mxu0 %v5398
        %v5475 = vpop.f32.mrf.mxu0
        %v5476 = vadd.f32 0.0, %v5475
        %v5477 = vpop.f32.mrf.mxu0
        %v5478 = vadd.f32 0.0, %v5477
        %5479 = vmatmul.bf16.gmra.mxu0 %v5399
        %v5480 = vpop.f32.mrf.mxu0
        %v5481 = vadd.f32 0.0, %v5480
        %v5482 = vpop.f32.mrf.mxu0
        %v5483 = vadd.f32 0.0, %v5482
        %5484 = vmatmul.bf16.gmra.mxu0 %v5400
        %v5485 = vpop.f32.mrf.mxu0
        %v5486 = vadd.f32 0.0, %v5485
        %v5487 = vpop.f32.mrf.mxu0
        %v5488 = vadd.f32 0.0, %v5487
        %5489 = vmatmul.bf16.gmra.mxu0 %v5401
        %v5490 = vpop.f32.mrf.mxu0
        %v5491 = vadd.f32 0.0, %v5490
        %v5492 = vpop.f32.mrf.mxu0
        %v5493 = vadd.f32 0.0, %v5492
        %5494 = vmatmul.bf16.gmra.mxu0 %v5402
        %v5495 = vpop.f32.mrf.mxu0
        %v5496 = vadd.f32 0.0, %v5495
        %v5497 = vpop.f32.mrf.mxu0
        %v5498 = vadd.f32 0.0, %v5497
        %5499 = vmatmul.bf16.gmra.mxu0 %v5403
        %v5500 = vpop.f32.mrf.mxu0
        %v5501 = vadd.f32 0.0, %v5500
        %v5502 = vpop.f32.mrf.mxu0
        %v5503 = vadd.f32 0.0, %v5502
        %5504 = vmatmul.bf16.gmra.mxu0 %v5404
        %v5505 = vpop.f32.mrf.mxu0
        %v5506 = vadd.f32 0.0, %v5505
        %v5507 = vpop.f32.mrf.mxu0
        %v5508 = vadd.f32 0.0, %v5507
        %5509 = vdwg.mxu0
        %v5510 = vadd.f32 %v5315, %v5471
        %v5511 = vadd.f32 %v5316, %v5473
        %v5512 = vadd.f32 %v5317, %v5476
        %v5513 = vadd.f32 %v5318, %v5478
        %v5514 = vadd.f32 %v5319, %v5481
        %v5515 = vadd.f32 %v5320, %v5483
        %v5516 = vadd.f32 %v5321, %v5486
        %v5517 = vadd.f32 %v5322, %v5488
        %v5518 = vadd.f32 %v5323, %v5491
        %v5519 = vadd.f32 %v5324, %v5493
        %v5520 = vadd.f32 %v5325, %v5496
        %v5521 = vadd.f32 %v5326, %v5498
        %v5522 = vadd.f32 %v5327, %v5501
        %v5523 = vadd.f32 %v5328, %v5503
        %v5524 = vadd.f32 %v5329, %v5506
        %v5525 = vadd.f32 %v5330, %v5508
        %v5526 = vld [vmem:[%s5331] sm:$0xf]
        %v5527 = vld [vmem:[%s5331 + $0x4] sm:$0xf]
        %v5528 = vld [vmem:[%s5331 + $0x8] sm:$0x1]
        %v5529 = vld [vmem:[%s5331 + $0xc] sm:$0xf]
        %v5530 = vld [vmem:[%s5331 + $0x10] sm:$0xf]
        %v5531 = vld [vmem:[%s5331 + $0x14] sm:$0x1]
        %v5532 = vld [vmem:[%s5331 + $0x18] sm:$0xf]
        %v5533 = vld [vmem:[%s5331 + $0x1c] sm:$0xf]
        %v5534 = vld [vmem:[%s5331 + $0x20] sm:$0x1]
        %v5535 = vld [vmem:[%s5331 + $0x24] sm:$0xf]
        %v5536 = vld [vmem:[%s5331 + $0x28] sm:$0xf]
        %v5537 = vld [vmem:[%s5331 + $0x2c] sm:$0x1]
        %v5538 = vld [vmem:[%s5331 + $0x30] sm:$0xf]
        %v5539 = vld [vmem:[%s5331 + $0x34] sm:$0xf]
        %v5540 = vld [vmem:[%s5331 + $0x38] sm:$0x1]
        %v5541 = vld [vmem:[%s5331 + $0x3c] sm:$0xf]
        %v5542 = vld [vmem:[%s5331 + $0x40] sm:$0xf]
        %v5543 = vld [vmem:[%s5331 + $0x44] sm:$0x1]
        %v5544 = vld [vmem:[%s5331 + $0x48] sm:$0xf]
        %v5545 = vld [vmem:[%s5331 + $0x4c] sm:$0xf]
        %v5546 = vld [vmem:[%s5331 + $0x50] sm:$0x1]
        %v5547 = vld [vmem:[%s5331 + $0x54] sm:$0xf]
        %v5548 = vld [vmem:[%s5331 + $0x58] sm:$0xf]
        %v5549 = vld [vmem:[%s5331 + $0x5c] sm:$0x1]
        %v5551 = vshrl.u32 %v5526, 16
        %v5553 = vrot.slane %v5551, 4
        %v5554 = vshll.u32 %v5526, 16
        %v5556 = vrot.slane %v5554, 5
        %v5557 = vor.u32 %v5553, %v5556
        %v5558 = vrot.slane %v5557, 4
        %v5560 = vshll.u32 %v5527, 16
        %v5562 = vrot.slane %v5560, 5
        %v5563 = vsel %vm409, %v5558, %v5562
        %v5564 = vshrl.u32 %v5527, 16
        %v5566 = vrot.slane %v5564, 4
        %v5567 = vor.u32 %v5566, %v5562
        %v5568 = vrot.slane %v5567, 4
        %v5570 = vshll.u32 %v5528, 16
        %v5572 = vrot.slane %v5570, 5
        %v5573 = vsel %vm409, %v5568, %v5572
        %v5575 = vshrl.u32 %v5529, 16
        %v5577 = vrot.slane %v5575, 4
        %v5578 = vshll.u32 %v5529, 16
        %v5580 = vrot.slane %v5578, 5
        %v5581 = vor.u32 %v5577, %v5580
        %v5582 = vrot.slane %v5581, 4
        %v5584 = vshll.u32 %v5530, 16
        %v5586 = vrot.slane %v5584, 5
        %v5587 = vsel %vm409, %v5582, %v5586
        %v5588 = vshrl.u32 %v5530, 16
        %v5590 = vrot.slane %v5588, 4
        %v5591 = vor.u32 %v5590, %v5586
        %v5592 = vrot.slane %v5591, 4
        %v5594 = vshll.u32 %v5531, 16
        %v5596 = vrot.slane %v5594, 5
        %v5597 = vsel %vm409, %v5592, %v5596
        %v5599 = vshrl.u32 %v5532, 16
        %v5601 = vrot.slane %v5599, 4
        %v5602 = vshll.u32 %v5532, 16
        %v5604 = vrot.slane %v5602, 5
        %v5605 = vor.u32 %v5601, %v5604
        %v5606 = vrot.slane %v5605, 4
        %v5608 = vshll.u32 %v5533, 16
        %v5610 = vrot.slane %v5608, 5
        %v5611 = vsel %vm409, %v5606, %v5610
        %v5612 = vshrl.u32 %v5533, 16
        %v5614 = vrot.slane %v5612, 4
        %v5615 = vor.u32 %v5614, %v5610
        %v5616 = vrot.slane %v5615, 4
        %v5618 = vshll.u32 %v5534, 16
        %v5620 = vrot.slane %v5618, 5
        %v5621 = vsel %vm409, %v5616, %v5620
        %v5623 = vshrl.u32 %v5535, 16
        %v5625 = vrot.slane %v5623, 4
        %v5626 = vshll.u32 %v5535, 16
        %v5628 = vrot.slane %v5626, 5
        %v5629 = vor.u32 %v5625, %v5628
        %v5630 = vrot.slane %v5629, 4
        %v5632 = vshll.u32 %v5536, 16
        %v5634 = vrot.slane %v5632, 5
        %v5635 = vsel %vm409, %v5630, %v5634
        %v5636 = vshrl.u32 %v5536, 16
        %v5638 = vrot.slane %v5636, 4
        %v5639 = vor.u32 %v5638, %v5634
        %v5640 = vrot.slane %v5639, 4
        %v5642 = vshll.u32 %v5537, 16
        %v5644 = vrot.slane %v5642, 5
        %v5645 = vsel %vm409, %v5640, %v5644
        %v5647 = vshrl.u32 %v5538, 16
        %v5649 = vrot.slane %v5647, 4
        %v5650 = vshll.u32 %v5538, 16
        %v5652 = vrot.slane %v5650, 5
        %v5653 = vor.u32 %v5649, %v5652
        %v5654 = vrot.slane %v5653, 4
        %v5656 = vshll.u32 %v5539, 16
        %v5658 = vrot.slane %v5656, 5
        %v5659 = vsel %vm409, %v5654, %v5658
        %v5660 = vshrl.u32 %v5539, 16
        %v5662 = vrot.slane %v5660, 4
        %v5663 = vor.u32 %v5662, %v5658
        %v5664 = vrot.slane %v5663, 4
        %v5666 = vshll.u32 %v5540, 16
        %v5668 = vrot.slane %v5666, 5
        %v5669 = vsel %vm409, %v5664, %v5668
        %v5671 = vshrl.u32 %v5541, 16
        %v5673 = vrot.slane %v5671, 4
        %v5674 = vshll.u32 %v5541, 16
        %v5676 = vrot.slane %v5674, 5
        %v5677 = vor.u32 %v5673, %v5676
        %v5678 = vrot.slane %v5677, 4
        %v5680 = vshll.u32 %v5542, 16
        %v5682 = vrot.slane %v5680, 5
        %v5683 = vsel %vm409, %v5678, %v5682
        %v5684 = vshrl.u32 %v5542, 16
        %v5686 = vrot.slane %v5684, 4
        %v5687 = vor.u32 %v5686, %v5682
        %v5688 = vrot.slane %v5687, 4
        %v5690 = vshll.u32 %v5543, 16
        %v5692 = vrot.slane %v5690, 5
        %v5693 = vsel %vm409, %v5688, %v5692
        %v5695 = vshrl.u32 %v5544, 16
        %v5697 = vrot.slane %v5695, 4
        %v5698 = vshll.u32 %v5544, 16
        %v5700 = vrot.slane %v5698, 5
        %v5701 = vor.u32 %v5697, %v5700
        %v5702 = vrot.slane %v5701, 4
        %v5704 = vshll.u32 %v5545, 16
        %v5706 = vrot.slane %v5704, 5
        %v5707 = vsel %vm409, %v5702, %v5706
        %v5708 = vshrl.u32 %v5545, 16
        %v5710 = vrot.slane %v5708, 4
        %v5711 = vor.u32 %v5710, %v5706
        %v5712 = vrot.slane %v5711, 4
        %v5714 = vshll.u32 %v5546, 16
        %v5716 = vrot.slane %v5714, 5
        %v5717 = vsel %vm409, %v5712, %v5716
        %v5719 = vshrl.u32 %v5547, 16
        %v5721 = vrot.slane %v5719, 4
        %v5722 = vshll.u32 %v5547, 16
        %v5724 = vrot.slane %v5722, 5
        %v5725 = vor.u32 %v5721, %v5724
        %v5726 = vrot.slane %v5725, 4
        %v5728 = vshll.u32 %v5548, 16
        %v5730 = vrot.slane %v5728, 5
        %v5731 = vsel %vm409, %v5726, %v5730
        %v5732 = vshrl.u32 %v5548, 16
        %v5734 = vrot.slane %v5732, 4
        %v5735 = vor.u32 %v5734, %v5730
        %v5736 = vrot.slane %v5735, 4
        %v5738 = vshll.u32 %v5549, 16
        %v5740 = vrot.slane %v5738, 5
        %v5741 = vsel %vm409, %v5736, %v5740
        %s5742 = scalar_lea.vmem [#allocation8], 256
        %v5743 = vld [vmem:[%s5742] sm:$0xf]
        %v5744 = vld [vmem:[%s5742 + $0x4] sm:$0xf]
        %v5745 = vld [vmem:[%s5742 + $0x8] sm:$0xf]
        %v5746 = vld [vmem:[%s5742 + $0xc] sm:$0xf]
        %v5747 = vld [vmem:[%s5742 + $0x10] sm:$0xf]
        %v5748 = vld [vmem:[%s5742 + $0x14] sm:$0xf]
        %v5749 = vld [vmem:[%s5742 + $0x18] sm:$0xf]
        %v5750 = vld [vmem:[%s5742 + $0x1c] sm:$0xf]
        %v5751 = vld [vmem:[%s5742 + $0x20] sm:$0xf]
        %v5752 = vld [vmem:[%s5742 + $0x24] sm:$0xf]
        %v5753 = vld [vmem:[%s5742 + $0x28] sm:$0xf]
        %v5754 = vld [vmem:[%s5742 + $0x2c] sm:$0xf]
        %v5755 = vld [vmem:[%s5742 + $0x30] sm:$0xf]
        %v5756 = vld [vmem:[%s5742 + $0x34] sm:$0xf]
        %v5757 = vld [vmem:[%s5742 + $0x38] sm:$0xf]
        %v5758 = vld [vmem:[%s5742 + $0x3c] sm:$0xf]
        %v5759 = vunpack.c.l.b16 %v5563
        %v5760 = vunpack.c.l.b16 %v5573
        %v5761 = vunpack.c.l.b16 %v5587
        %v5762 = vunpack.c.l.b16 %v5597
        %v5763 = vunpack.c.l.b16 %v5611
        %v5764 = vunpack.c.l.b16 %v5621
        %v5765 = vunpack.c.l.b16 %v5635
        %v5766 = vunpack.c.l.b16 %v5645
        %v5767 = vunpack.c.l.b16 %v5659
        %v5768 = vunpack.c.l.b16 %v5669
        %v5769 = vunpack.c.l.b16 %v5683
        %v5770 = vunpack.c.l.b16 %v5693
        %v5771 = vunpack.c.l.b16 %v5707
        %v5772 = vunpack.c.l.b16 %v5717
        %v5773 = vunpack.c.l.b16 %v5731
        %v5774 = vunpack.c.l.b16 %v5741
        %v5775 = vpack.c.b16 %v5760, %v5759
        %v5776 = vpack.c.b16 %v5762, %v5761
        %v5777 = vpack.c.b16 %v5764, %v5763
        %v5778 = vpack.c.b16 %v5766, %v5765
        %v5779 = vpack.c.b16 %v5768, %v5767
        %v5780 = vpack.c.b16 %v5770, %v5769
        %v5781 = vpack.c.b16 %v5772, %v5771
        %v5782 = vpack.c.b16 %v5774, %v5773
        %v5807 = vunpack.c.l.b16 %v5743
        %v5808 = vunpack.c.l.b16 %v5744
        %v5809 = vunpack.c.l.b16 %v5745
        %v5810 = vunpack.c.l.b16 %v5746
        %v5811 = vunpack.c.l.b16 %v5747
        %v5812 = vunpack.c.l.b16 %v5748
        %v5813 = vunpack.c.l.b16 %v5749
        %v5814 = vunpack.c.l.b16 %v5750
        %v5815 = vunpack.c.l.b16 %v5751
        %v5816 = vunpack.c.l.b16 %v5752
        %v5817 = vunpack.c.l.b16 %v5753
        %v5818 = vunpack.c.l.b16 %v5754
        %v5819 = vunpack.c.l.b16 %v5755
        %v5820 = vunpack.c.l.b16 %v5756
        %v5821 = vunpack.c.l.b16 %v5757
        %v5822 = vunpack.c.l.b16 %v5758
        %v5823 = vpack.c.b16 %v5808, %v5807
        %v5824 = vpack.c.b16 %v5810, %v5809
        %v5825 = vpack.c.b16 %v5812, %v5811
        %v5826 = vpack.c.b16 %v5814, %v5813
        %v5827 = vpack.c.b16 %v5816, %v5815
        %v5828 = vpack.c.b16 %v5818, %v5817
        %v5829 = vpack.c.b16 %v5820, %v5819
        %v5830 = vpack.c.b16 %v5822, %v5821
        %5839 = vmatpush.bf16.msra.mxu0 %v5830
        %5840 = vmatpush.bf16.msra.mxu0 %v5829
        %5841 = vmatpush.bf16.msra.mxu0 %v5828
        %5842 = vmatpush.bf16.msra.mxu0 %v5827
        %5843 = vmatpush.bf16.msra.mxu0 %v5826
        %5844 = vmatpush.bf16.msra.mxu0 %v5825
        %5845 = vmatpush.bf16.msra.mxu0 %v5824
        %5846 = vmatpush.bf16.msra.mxu0 %v5823
        %5847 = vmatmul.bf16.gmra.mxu0 %v5775
        %v5848 = vpop.f32.mrf.mxu0
        %v5849 = vadd.f32 0.0, %v5848
        %v5850 = vpop.f32.mrf.mxu0
        %v5851 = vadd.f32 0.0, %v5850
        %5852 = vmatmul.bf16.gmra.mxu0 %v5776
        %v5853 = vpop.f32.mrf.mxu0
        %v5854 = vadd.f32 0.0, %v5853
        %v5855 = vpop.f32.mrf.mxu0
        %v5856 = vadd.f32 0.0, %v5855
        %5857 = vmatmul.bf16.gmra.mxu0 %v5777
        %v5858 = vpop.f32.mrf.mxu0
        %v5859 = vadd.f32 0.0, %v5858
        %v5860 = vpop.f32.mrf.mxu0
        %v5861 = vadd.f32 0.0, %v5860
        %5862 = vmatmul.bf16.gmra.mxu0 %v5778
        %v5863 = vpop.f32.mrf.mxu0
        %v5864 = vadd.f32 0.0, %v5863
        %v5865 = vpop.f32.mrf.mxu0
        %v5866 = vadd.f32 0.0, %v5865
        %5867 = vmatmul.bf16.gmra.mxu0 %v5779
        %v5868 = vpop.f32.mrf.mxu0
        %v5869 = vadd.f32 0.0, %v5868
        %v5870 = vpop.f32.mrf.mxu0
        %v5871 = vadd.f32 0.0, %v5870
        %5872 = vmatmul.bf16.gmra.mxu0 %v5780
        %v5873 = vpop.f32.mrf.mxu0
        %v5874 = vadd.f32 0.0, %v5873
        %v5875 = vpop.f32.mrf.mxu0
        %v5876 = vadd.f32 0.0, %v5875
        %5877 = vmatmul.bf16.gmra.mxu0 %v5781
        %v5878 = vpop.f32.mrf.mxu0
        %v5879 = vadd.f32 0.0, %v5878
        %v5880 = vpop.f32.mrf.mxu0
        %v5881 = vadd.f32 0.0, %v5880
        %5882 = vmatmul.bf16.gmra.mxu0 %v5782
        %v5883 = vpop.f32.mrf.mxu0
        %v5884 = vadd.f32 0.0, %v5883
        %v5885 = vpop.f32.mrf.mxu0
        %v5886 = vadd.f32 0.0, %v5885
        %5887 = vdwg.mxu0
        %v5888 = vadd.f32 %v5510, %v5849
        %v5889 = vadd.f32 %v5511, %v5851
        %v5890 = vadd.f32 %v5512, %v5854
        %v5891 = vadd.f32 %v5513, %v5856
        %v5892 = vadd.f32 %v5514, %v5859
        %v5893 = vadd.f32 %v5515, %v5861
        %v5894 = vadd.f32 %v5516, %v5864
        %v5895 = vadd.f32 %v5517, %v5866
        %v5896 = vadd.f32 %v5518, %v5869
        %v5897 = vadd.f32 %v5519, %v5871
        %v5898 = vadd.f32 %v5520, %v5874
        %v5899 = vadd.f32 %v5521, %v5876
        %v5900 = vadd.f32 %v5522, %v5879
        %v5901 = vadd.f32 %v5523, %v5881
        %v5902 = vadd.f32 %v5524, %v5884
        %v5903 = vadd.f32 %v5525, %v5886
        %v5904 = vld [vmem:[%s5331] sm:$0xe]
        %v5905 = vld [vmem:[%s5331 + $0xc] sm:$0xe]
        %v5906 = vld [vmem:[%s5331 + $0x18] sm:$0xe]
        %v5907 = vld [vmem:[%s5331 + $0x24] sm:$0xe]
        %v5908 = vld [vmem:[%s5331 + $0x30] sm:$0xe]
        %v5909 = vld [vmem:[%s5331 + $0x3c] sm:$0xe]
        %v5910 = vld [vmem:[%s5331 + $0x48] sm:$0xe]
        %v5911 = vld [vmem:[%s5331 + $0x54] sm:$0xe]
        %v5936 = vrot.slane %v5904, 5
        %v5937 = vrot.slane %v5936, 4
        %v5938 = vrot.slane %v5527, 5
        %v5939 = vsel %vm1213, %v5937, %v5938
        %v5940 = vrot.slane %v5938, 4
        %v5941 = vrot.slane %v5528, 5
        %v5942 = vsel %vm1213, %v5940, %v5941
        %v5943 = vrot.slane %v5905, 5
        %v5944 = vrot.slane %v5943, 4
        %v5945 = vrot.slane %v5530, 5
        %v5946 = vsel %vm1213, %v5944, %v5945
        %v5947 = vrot.slane %v5945, 4
        %v5948 = vrot.slane %v5531, 5
        %v5949 = vsel %vm1213, %v5947, %v5948
        %v5950 = vrot.slane %v5906, 5
        %v5951 = vrot.slane %v5950, 4
        %v5952 = vrot.slane %v5533, 5
        %v5953 = vsel %vm1213, %v5951, %v5952
        %v5954 = vrot.slane %v5952, 4
        %v5955 = vrot.slane %v5534, 5
        %v5956 = vsel %vm1213, %v5954, %v5955
        %v5957 = vrot.slane %v5907, 5
        %v5958 = vrot.slane %v5957, 4
        %v5959 = vrot.slane %v5536, 5
        %v5960 = vsel %vm1213, %v5958, %v5959
        %v5961 = vrot.slane %v5959, 4
        %v5962 = vrot.slane %v5537, 5
        %v5963 = vsel %vm1213, %v5961, %v5962
        %v5964 = vrot.slane %v5908, 5
        %v5965 = vrot.slane %v5964, 4
        %v5966 = vrot.slane %v5539, 5
        %v5967 = vsel %vm1213, %v5965, %v5966
        %v5968 = vrot.slane %v5966, 4
        %v5969 = vrot.slane %v5540, 5
        %v5970 = vsel %vm1213, %v5968, %v5969
        %v5971 = vrot.slane %v5909, 5
        %v5972 = vrot.slane %v5971, 4
        %v5973 = vrot.slane %v5542, 5
        %v5974 = vsel %vm1213, %v5972, %v5973
        %v5975 = vrot.slane %v5973, 4
        %v5976 = vrot.slane %v5543, 5
        %v5977 = vsel %vm1213, %v5975, %v5976
        %v5978 = vrot.slane %v5910, 5
        %v5979 = vrot.slane %v5978, 4
        %v5980 = vrot.slane %v5545, 5
        %v5981 = vsel %vm1213, %v5979, %v5980
        %v5982 = vrot.slane %v5980, 4
        %v5983 = vrot.slane %v5546, 5
        %v5984 = vsel %vm1213, %v5982, %v5983
        %v5985 = vrot.slane %v5911, 5
        %v5986 = vrot.slane %v5985, 4
        %v5987 = vrot.slane %v5548, 5
        %v5988 = vsel %vm1213, %v5986, %v5987
        %v5989 = vrot.slane %v5987, 4
        %v5990 = vrot.slane %v5549, 5
        %v5991 = vsel %vm1213, %v5989, %v5990
        %s5992 = scalar_lea.vmem [#allocation8], 320
        %v5993 = vld [vmem:[%s5992] sm:$0xf]
        %v5994 = vld [vmem:[%s5992 + $0x4] sm:$0xf]
        %v5995 = vld [vmem:[%s5992 + $0x8] sm:$0xf]
        %v5996 = vld [vmem:[%s5992 + $0xc] sm:$0xf]
        %v5997 = vld [vmem:[%s5992 + $0x10] sm:$0xf]
        %v5998 = vld [vmem:[%s5992 + $0x14] sm:$0xf]
        %v5999 = vld [vmem:[%s5992 + $0x18] sm:$0xf]
        %v6000 = vld [vmem:[%s5992 + $0x1c] sm:$0xf]
        %v6001 = vld [vmem:[%s5992 + $0x20] sm:$0xf]
        %v6002 = vld [vmem:[%s5992 + $0x24] sm:$0xf]
        %v6003 = vld [vmem:[%s5992 + $0x28] sm:$0xf]
        %v6004 = vld [vmem:[%s5992 + $0x2c] sm:$0xf]
        %v6005 = vld [vmem:[%s5992 + $0x30] sm:$0xf]
        %v6006 = vld [vmem:[%s5992 + $0x34] sm:$0xf]
        %v6007 = vld [vmem:[%s5992 + $0x38] sm:$0xf]
        %v6008 = vld [vmem:[%s5992 + $0x3c] sm:$0xf]
        %v6009 = vunpack.c.l.b16 %v5939
        %v6010 = vunpack.c.l.b16 %v5942
        %v6011 = vunpack.c.l.b16 %v5946
        %v6012 = vunpack.c.l.b16 %v5949
        %v6013 = vunpack.c.l.b16 %v5953
        %v6014 = vunpack.c.l.b16 %v5956
        %v6015 = vunpack.c.l.b16 %v5960
        %v6016 = vunpack.c.l.b16 %v5963
        %v6017 = vunpack.c.l.b16 %v5967
        %v6018 = vunpack.c.l.b16 %v5970
        %v6019 = vunpack.c.l.b16 %v5974
        %v6020 = vunpack.c.l.b16 %v5977
        %v6021 = vunpack.c.l.b16 %v5981
        %v6022 = vunpack.c.l.b16 %v5984
        %v6023 = vunpack.c.l.b16 %v5988
        %v6024 = vunpack.c.l.b16 %v5991
        %v6025 = vpack.c.b16 %v6010, %v6009
        %v6026 = vpack.c.b16 %v6012, %v6011
        %v6027 = vpack.c.b16 %v6014, %v6013
        %v6028 = vpack.c.b16 %v6016, %v6015
        %v6029 = vpack.c.b16 %v6018, %v6017
        %v6030 = vpack.c.b16 %v6020, %v6019
        %v6031 = vpack.c.b16 %v6022, %v6021
        %v6032 = vpack.c.b16 %v6024, %v6023
        %v6057 = vunpack.c.l.b16 %v5993
        %v6058 = vunpack.c.l.b16 %v5994
        %v6059 = vunpack.c.l.b16 %v5995
        %v6060 = vunpack.c.l.b16 %v5996
        %v6061 = vunpack.c.l.b16 %v5997
        %v6062 = vunpack.c.l.b16 %v5998
        %v6063 = vunpack.c.l.b16 %v5999
        %v6064 = vunpack.c.l.b16 %v6000
        %v6065 = vunpack.c.l.b16 %v6001
        %v6066 = vunpack.c.l.b16 %v6002
        %v6067 = vunpack.c.l.b16 %v6003
        %v6068 = vunpack.c.l.b16 %v6004
        %v6069 = vunpack.c.l.b16 %v6005
        %v6070 = vunpack.c.l.b16 %v6006
        %v6071 = vunpack.c.l.b16 %v6007
        %v6072 = vunpack.c.l.b16 %v6008
        %v6073 = vpack.c.b16 %v6058, %v6057
        %v6074 = vpack.c.b16 %v6060, %v6059
        %v6075 = vpack.c.b16 %v6062, %v6061
        %v6076 = vpack.c.b16 %v6064, %v6063
        %v6077 = vpack.c.b16 %v6066, %v6065
        %v6078 = vpack.c.b16 %v6068, %v6067
        %v6079 = vpack.c.b16 %v6070, %v6069
        %v6080 = vpack.c.b16 %v6072, %v6071
        %6089 = vmatpush.bf16.msra.mxu0 %v6080
        %6090 = vmatpush.bf16.msra.mxu0 %v6079
        %6091 = vmatpush.bf16.msra.mxu0 %v6078
        %6092 = vmatpush.bf16.msra.mxu0 %v6077
        %6093 = vmatpush.bf16.msra.mxu0 %v6076
        %6094 = vmatpush.bf16.msra.mxu0 %v6075
        %6095 = vmatpush.bf16.msra.mxu0 %v6074
        %6096 = vmatpush.bf16.msra.mxu0 %v6073
        %6097 = vmatmul.bf16.gmra.mxu0 %v6025
        %v6098 = vpop.f32.mrf.mxu0
        %v6099 = vadd.f32 0.0, %v6098
        %v6100 = vpop.f32.mrf.mxu0
        %v6101 = vadd.f32 0.0, %v6100
        %6102 = vmatmul.bf16.gmra.mxu0 %v6026
        %v6103 = vpop.f32.mrf.mxu0
        %v6104 = vadd.f32 0.0, %v6103
        %v6105 = vpop.f32.mrf.mxu0
        %v6106 = vadd.f32 0.0, %v6105
        %6107 = vmatmul.bf16.gmra.mxu0 %v6027
        %v6108 = vpop.f32.mrf.mxu0
        %v6109 = vadd.f32 0.0, %v6108
        %v6110 = vpop.f32.mrf.mxu0
        %v6111 = vadd.f32 0.0, %v6110
        %6112 = vmatmul.bf16.gmra.mxu0 %v6028
        %v6113 = vpop.f32.mrf.mxu0
        %v6114 = vadd.f32 0.0, %v6113
        %v6115 = vpop.f32.mrf.mxu0
        %v6116 = vadd.f32 0.0, %v6115
        %6117 = vmatmul.bf16.gmra.mxu0 %v6029
        %v6118 = vpop.f32.mrf.mxu0
        %v6119 = vadd.f32 0.0, %v6118
        %v6120 = vpop.f32.mrf.mxu0
        %v6121 = vadd.f32 0.0, %v6120
        %6122 = vmatmul.bf16.gmra.mxu0 %v6030
        %v6123 = vpop.f32.mrf.mxu0
        %v6124 = vadd.f32 0.0, %v6123
        %v6125 = vpop.f32.mrf.mxu0
        %v6126 = vadd.f32 0.0, %v6125
        %6127 = vmatmul.bf16.gmra.mxu0 %v6031
        %v6128 = vpop.f32.mrf.mxu0
        %v6129 = vadd.f32 0.0, %v6128
        %v6130 = vpop.f32.mrf.mxu0
        %v6131 = vadd.f32 0.0, %v6130
        %6132 = vmatmul.bf16.gmra.mxu0 %v6032
        %v6133 = vpop.f32.mrf.mxu0
        %v6134 = vadd.f32 0.0, %v6133
        %v6135 = vpop.f32.mrf.mxu0
        %v6136 = vadd.f32 0.0, %v6135
        %6137 = vdwg.mxu0
        %v6138 = vadd.f32 %v5888, %v6099
        %v6139 = vadd.f32 %v5889, %v6101
        %v6140 = vadd.f32 %v5890, %v6104
        %v6141 = vadd.f32 %v5891, %v6106
        %v6142 = vadd.f32 %v5892, %v6109
        %v6143 = vadd.f32 %v5893, %v6111
        %v6144 = vadd.f32 %v5894, %v6114
        %v6145 = vadd.f32 %v5895, %v6116
        %v6146 = vadd.f32 %v5896, %v6119
        %v6147 = vadd.f32 %v5897, %v6121
        %v6148 = vadd.f32 %v5898, %v6124
        %v6149 = vadd.f32 %v5899, %v6126
        %v6150 = vadd.f32 %v5900, %v6129
        %v6151 = vadd.f32 %v5901, %v6131
        %v6152 = vadd.f32 %v5902, %v6134
        %v6153 = vadd.f32 %v5903, %v6136
        %s6154 = scalar_lea.vmem [#allocation2], 24
        %v6155 = vld [vmem:[%s6154] sm:$0xf]
        %v6156 = vld [vmem:[%s6154 + $0x4] sm:$0xf]
        %v6157 = vld [vmem:[%s6154 + $0xc] sm:$0xf]
        %v6158 = vld [vmem:[%s6154 + $0x10] sm:$0xf]
        %v6159 = vld [vmem:[%s6154 + $0x18] sm:$0xf]
        %v6160 = vld [vmem:[%s6154 + $0x1c] sm:$0xf]
        %v6161 = vld [vmem:[%s6154 + $0x24] sm:$0xf]
        %v6162 = vld [vmem:[%s6154 + $0x28] sm:$0xf]
        %v6163 = vld [vmem:[%s6154 + $0x30] sm:$0xf]
        %v6164 = vld [vmem:[%s6154 + $0x34] sm:$0xf]
        %v6165 = vld [vmem:[%s6154 + $0x3c] sm:$0xf]
        %v6166 = vld [vmem:[%s6154 + $0x40] sm:$0xf]
        %v6167 = vld [vmem:[%s6154 + $0x48] sm:$0xf]
        %v6168 = vld [vmem:[%s6154 + $0x4c] sm:$0xf]
        %v6169 = vld [vmem:[%s6154 + $0x54] sm:$0xf]
        %v6170 = vld [vmem:[%s6154 + $0x58] sm:$0xf]
        %s6171 = scalar_lea.vmem [#allocation8], 384
        %v6172 = vld [vmem:[%s6171] sm:$0xf]
        %v6173 = vld [vmem:[%s6171 + $0x4] sm:$0xf]
        %v6174 = vld [vmem:[%s6171 + $0x8] sm:$0xf]
        %v6175 = vld [vmem:[%s6171 + $0xc] sm:$0xf]
        %v6176 = vld [vmem:[%s6171 + $0x10] sm:$0xf]
        %v6177 = vld [vmem:[%s6171 + $0x14] sm:$0xf]
        %v6178 = vld [vmem:[%s6171 + $0x18] sm:$0xf]
        %v6179 = vld [vmem:[%s6171 + $0x1c] sm:$0xf]
        %v6180 = vld [vmem:[%s6171 + $0x20] sm:$0xf]
        %v6181 = vld [vmem:[%s6171 + $0x24] sm:$0xf]
        %v6182 = vld [vmem:[%s6171 + $0x28] sm:$0xf]
        %v6183 = vld [vmem:[%s6171 + $0x2c] sm:$0xf]
        %v6184 = vld [vmem:[%s6171 + $0x30] sm:$0xf]
        %v6185 = vld [vmem:[%s6171 + $0x34] sm:$0xf]
        %v6186 = vld [vmem:[%s6171 + $0x38] sm:$0xf]
        %v6187 = vld [vmem:[%s6171 + $0x3c] sm:$0xf]
        %v6204 = vunpack.c.l.b16 %v6155
        %v6205 = vunpack.c.l.b16 %v6156
        %v6206 = vunpack.c.l.b16 %v6157
        %v6207 = vunpack.c.l.b16 %v6158
        %v6208 = vunpack.c.l.b16 %v6159
        %v6209 = vunpack.c.l.b16 %v6160
        %v6210 = vunpack.c.l.b16 %v6161
        %v6211 = vunpack.c.l.b16 %v6162
        %v6212 = vunpack.c.l.b16 %v6163
        %v6213 = vunpack.c.l.b16 %v6164
        %v6214 = vunpack.c.l.b16 %v6165
        %v6215 = vunpack.c.l.b16 %v6166
        %v6216 = vunpack.c.l.b16 %v6167
        %v6217 = vunpack.c.l.b16 %v6168
        %v6218 = vunpack.c.l.b16 %v6169
        %v6219 = vunpack.c.l.b16 %v6170
        %v6220 = vpack.c.b16 %v6205, %v6204
        %v6221 = vpack.c.b16 %v6207, %v6206
        %v6222 = vpack.c.b16 %v6209, %v6208
        %v6223 = vpack.c.b16 %v6211, %v6210
        %v6224 = vpack.c.b16 %v6213, %v6212
        %v6225 = vpack.c.b16 %v6215, %v6214
        %v6226 = vpack.c.b16 %v6217, %v6216
        %v6227 = vpack.c.b16 %v6219, %v6218
        %v6252 = vunpack.c.l.b16 %v6172
        %v6253 = vunpack.c.l.b16 %v6173
        %v6254 = vunpack.c.l.b16 %v6174
        %v6255 = vunpack.c.l.b16 %v6175
        %v6256 = vunpack.c.l.b16 %v6176
        %v6257 = vunpack.c.l.b16 %v6177
        %v6258 = vunpack.c.l.b16 %v6178
        %v6259 = vunpack.c.l.b16 %v6179
        %v6260 = vunpack.c.l.b16 %v6180
        %v6261 = vunpack.c.l.b16 %v6181
        %v6262 = vunpack.c.l.b16 %v6182
        %v6263 = vunpack.c.l.b16 %v6183
        %v6264 = vunpack.c.l.b16 %v6184
        %v6265 = vunpack.c.l.b16 %v6185
        %v6266 = vunpack.c.l.b16 %v6186
        %v6267 = vunpack.c.l.b16 %v6187
        %v6268 = vpack.c.b16 %v6253, %v6252
        %v6269 = vpack.c.b16 %v6255, %v6254
        %v6270 = vpack.c.b16 %v6257, %v6256
        %v6271 = vpack.c.b16 %v6259, %v6258
        %v6272 = vpack.c.b16 %v6261, %v6260
        %v6273 = vpack.c.b16 %v6263, %v6262
        %v6274 = vpack.c.b16 %v6265, %v6264
        %v6275 = vpack.c.b16 %v6267, %v6266
        %6284 = vmatpush.bf16.msra.mxu0 %v6275
        %6285 = vmatpush.bf16.msra.mxu0 %v6274
        %6286 = vmatpush.bf16.msra.mxu0 %v6273
        %6287 = vmatpush.bf16.msra.mxu0 %v6272
        %6288 = vmatpush.bf16.msra.mxu0 %v6271
        %6289 = vmatpush.bf16.msra.mxu0 %v6270
        %6290 = vmatpush.bf16.msra.mxu0 %v6269
        %6291 = vmatpush.bf16.msra.mxu0 %v6268
        %6292 = vmatmul.bf16.gmra.mxu0 %v6220
        %v6293 = vpop.f32.mrf.mxu0
        %v6294 = vadd.f32 0.0, %v6293
        %v6295 = vpop.f32.mrf.mxu0
        %v6296 = vadd.f32 0.0, %v6295
        %6297 = vmatmul.bf16.gmra.mxu0 %v6221
        %v6298 = vpop.f32.mrf.mxu0
        %v6299 = vadd.f32 0.0, %v6298
        %v6300 = vpop.f32.mrf.mxu0
        %v6301 = vadd.f32 0.0, %v6300
        %6302 = vmatmul.bf16.gmra.mxu0 %v6222
        %v6303 = vpop.f32.mrf.mxu0
        %v6304 = vadd.f32 0.0, %v6303
        %v6305 = vpop.f32.mrf.mxu0
        %v6306 = vadd.f32 0.0, %v6305
        %6307 = vmatmul.bf16.gmra.mxu0 %v6223
        %v6308 = vpop.f32.mrf.mxu0
        %v6309 = vadd.f32 0.0, %v6308
        %v6310 = vpop.f32.mrf.mxu0
        %v6311 = vadd.f32 0.0, %v6310
        %6312 = vmatmul.bf16.gmra.mxu0 %v6224
        %v6313 = vpop.f32.mrf.mxu0
        %v6314 = vadd.f32 0.0, %v6313
        %v6315 = vpop.f32.mrf.mxu0
        %v6316 = vadd.f32 0.0, %v6315
        %6317 = vmatmul.bf16.gmra.mxu0 %v6225
        %v6318 = vpop.f32.mrf.mxu0
        %v6319 = vadd.f32 0.0, %v6318
        %v6320 = vpop.f32.mrf.mxu0
        %v6321 = vadd.f32 0.0, %v6320
        %6322 = vmatmul.bf16.gmra.mxu0 %v6226
        %v6323 = vpop.f32.mrf.mxu0
        %v6324 = vadd.f32 0.0, %v6323
        %v6325 = vpop.f32.mrf.mxu0
        %v6326 = vadd.f32 0.0, %v6325
        %6327 = vmatmul.bf16.gmra.mxu0 %v6227
        %v6328 = vpop.f32.mrf.mxu0
        %v6329 = vadd.f32 0.0, %v6328
        %v6330 = vpop.f32.mrf.mxu0
        %v6331 = vadd.f32 0.0, %v6330
        %6332 = vdwg.mxu0
        %v6333 = vadd.f32 %v6138, %v6294
        %v6334 = vadd.f32 %v6139, %v6296
        %v6335 = vadd.f32 %v6140, %v6299
        %v6336 = vadd.f32 %v6141, %v6301
        %v6337 = vadd.f32 %v6142, %v6304
        %v6338 = vadd.f32 %v6143, %v6306
        %v6339 = vadd.f32 %v6144, %v6309
        %v6340 = vadd.f32 %v6145, %v6311
        %v6341 = vadd.f32 %v6146, %v6314
        %v6342 = vadd.f32 %v6147, %v6316
        %v6343 = vadd.f32 %v6148, %v6319
        %v6344 = vadd.f32 %v6149, %v6321
        %v6345 = vadd.f32 %v6150, %v6324
        %v6346 = vadd.f32 %v6151, %v6326
        %v6347 = vadd.f32 %v6152, %v6329
        %v6348 = vadd.f32 %v6153, %v6331
        %v6349 = vld [vmem:[%s6154] sm:$0xf]
        %v6350 = vld [vmem:[%s6154 + $0x4] sm:$0xf]
        %v6351 = vld [vmem:[%s6154 + $0x8] sm:$0x1]
        %v6352 = vld [vmem:[%s6154 + $0xc] sm:$0xf]
        %v6353 = vld [vmem:[%s6154 + $0x10] sm:$0xf]
        %v6354 = vld [vmem:[%s6154 + $0x14] sm:$0x1]
        %v6355 = vld [vmem:[%s6154 + $0x18] sm:$0xf]
        %v6356 = vld [vmem:[%s6154 + $0x1c] sm:$0xf]
        %v6357 = vld [vmem:[%s6154 + $0x20] sm:$0x1]
        %v6358 = vld [vmem:[%s6154 + $0x24] sm:$0xf]
        %v6359 = vld [vmem:[%s6154 + $0x28] sm:$0xf]
        %v6360 = vld [vmem:[%s6154 + $0x2c] sm:$0x1]
        %v6361 = vld [vmem:[%s6154 + $0x30] sm:$0xf]
        %v6362 = vld [vmem:[%s6154 + $0x34] sm:$0xf]
        %v6363 = vld [vmem:[%s6154 + $0x38] sm:$0x1]
        %v6364 = vld [vmem:[%s6154 + $0x3c] sm:$0xf]
        %v6365 = vld [vmem:[%s6154 + $0x40] sm:$0xf]
        %v6366 = vld [vmem:[%s6154 + $0x44] sm:$0x1]
        %v6367 = vld [vmem:[%s6154 + $0x48] sm:$0xf]
        %v6368 = vld [vmem:[%s6154 + $0x4c] sm:$0xf]
        %v6369 = vld [vmem:[%s6154 + $0x50] sm:$0x1]
        %v6370 = vld [vmem:[%s6154 + $0x54] sm:$0xf]
        %v6371 = vld [vmem:[%s6154 + $0x58] sm:$0xf]
        %v6372 = vld [vmem:[%s6154 + $0x5c] sm:$0x1]
        %v6374 = vshrl.u32 %v6349, 16
        %v6376 = vrot.slane %v6374, 4
        %v6377 = vshll.u32 %v6349, 16
        %v6379 = vrot.slane %v6377, 5
        %v6380 = vor.u32 %v6376, %v6379
        %v6381 = vrot.slane %v6380, 4
        %v6383 = vshll.u32 %v6350, 16
        %v6385 = vrot.slane %v6383, 5
        %v6386 = vsel %vm409, %v6381, %v6385
        %v6387 = vshrl.u32 %v6350, 16
        %v6389 = vrot.slane %v6387, 4
        %v6390 = vor.u32 %v6389, %v6385
        %v6391 = vrot.slane %v6390, 4
        %v6393 = vshll.u32 %v6351, 16
        %v6395 = vrot.slane %v6393, 5
        %v6396 = vsel %vm409, %v6391, %v6395
        %v6398 = vshrl.u32 %v6352, 16
        %v6400 = vrot.slane %v6398, 4
        %v6401 = vshll.u32 %v6352, 16
        %v6403 = vrot.slane %v6401, 5
        %v6404 = vor.u32 %v6400, %v6403
        %v6405 = vrot.slane %v6404, 4
        %v6407 = vshll.u32 %v6353, 16
        %v6409 = vrot.slane %v6407, 5
        %v6410 = vsel %vm409, %v6405, %v6409
        %v6411 = vshrl.u32 %v6353, 16
        %v6413 = vrot.slane %v6411, 4
        %v6414 = vor.u32 %v6413, %v6409
        %v6415 = vrot.slane %v6414, 4
        %v6417 = vshll.u32 %v6354, 16
        %v6419 = vrot.slane %v6417, 5
        %v6420 = vsel %vm409, %v6415, %v6419
        %v6422 = vshrl.u32 %v6355, 16
        %v6424 = vrot.slane %v6422, 4
        %v6425 = vshll.u32 %v6355, 16
        %v6427 = vrot.slane %v6425, 5
        %v6428 = vor.u32 %v6424, %v6427
        %v6429 = vrot.slane %v6428, 4
        %v6431 = vshll.u32 %v6356, 16
        %v6433 = vrot.slane %v6431, 5
        %v6434 = vsel %vm409, %v6429, %v6433
        %v6435 = vshrl.u32 %v6356, 16
        %v6437 = vrot.slane %v6435, 4
        %v6438 = vor.u32 %v6437, %v6433
        %v6439 = vrot.slane %v6438, 4
        %v6441 = vshll.u32 %v6357, 16
        %v6443 = vrot.slane %v6441, 5
        %v6444 = vsel %vm409, %v6439, %v6443
        %v6446 = vshrl.u32 %v6358, 16
        %v6448 = vrot.slane %v6446, 4
        %v6449 = vshll.u32 %v6358, 16
        %v6451 = vrot.slane %v6449, 5
        %v6452 = vor.u32 %v6448, %v6451
        %v6453 = vrot.slane %v6452, 4
        %v6455 = vshll.u32 %v6359, 16
        %v6457 = vrot.slane %v6455, 5
        %v6458 = vsel %vm409, %v6453, %v6457
        %v6459 = vshrl.u32 %v6359, 16
        %v6461 = vrot.slane %v6459, 4
        %v6462 = vor.u32 %v6461, %v6457
        %v6463 = vrot.slane %v6462, 4
        %v6465 = vshll.u32 %v6360, 16
        %v6467 = vrot.slane %v6465, 5
        %v6468 = vsel %vm409, %v6463, %v6467
        %v6470 = vshrl.u32 %v6361, 16
        %v6472 = vrot.slane %v6470, 4
        %v6473 = vshll.u32 %v6361, 16
        %v6475 = vrot.slane %v6473, 5
        %v6476 = vor.u32 %v6472, %v6475
        %v6477 = vrot.slane %v6476, 4
        %v6479 = vshll.u32 %v6362, 16
        %v6481 = vrot.slane %v6479, 5
        %v6482 = vsel %vm409, %v6477, %v6481
        %v6483 = vshrl.u32 %v6362, 16
        %v6485 = vrot.slane %v6483, 4
        %v6486 = vor.u32 %v6485, %v6481
        %v6487 = vrot.slane %v6486, 4
        %v6489 = vshll.u32 %v6363, 16
        %v6491 = vrot.slane %v6489, 5
        %v6492 = vsel %vm409, %v6487, %v6491
        %v6494 = vshrl.u32 %v6364, 16
        %v6496 = vrot.slane %v6494, 4
        %v6497 = vshll.u32 %v6364, 16
        %v6499 = vrot.slane %v6497, 5
        %v6500 = vor.u32 %v6496, %v6499
        %v6501 = vrot.slane %v6500, 4
        %v6503 = vshll.u32 %v6365, 16
        %v6505 = vrot.slane %v6503, 5
        %v6506 = vsel %vm409, %v6501, %v6505
        %v6507 = vshrl.u32 %v6365, 16
        %v6509 = vrot.slane %v6507, 4
        %v6510 = vor.u32 %v6509, %v6505
        %v6511 = vrot.slane %v6510, 4
        %v6513 = vshll.u32 %v6366, 16
        %v6515 = vrot.slane %v6513, 5
        %v6516 = vsel %vm409, %v6511, %v6515
        %v6518 = vshrl.u32 %v6367, 16
        %v6520 = vrot.slane %v6518, 4
        %v6521 = vshll.u32 %v6367, 16
        %v6523 = vrot.slane %v6521, 5
        %v6524 = vor.u32 %v6520, %v6523
        %v6525 = vrot.slane %v6524, 4
        %v6527 = vshll.u32 %v6368, 16
        %v6529 = vrot.slane %v6527, 5
        %v6530 = vsel %vm409, %v6525, %v6529
        %v6531 = vshrl.u32 %v6368, 16
        %v6533 = vrot.slane %v6531, 4
        %v6534 = vor.u32 %v6533, %v6529
        %v6535 = vrot.slane %v6534, 4
        %v6537 = vshll.u32 %v6369, 16
        %v6539 = vrot.slane %v6537, 5
        %v6540 = vsel %vm409, %v6535, %v6539
        %v6542 = vshrl.u32 %v6370, 16
        %v6544 = vrot.slane %v6542, 4
        %v6545 = vshll.u32 %v6370, 16
        %v6547 = vrot.slane %v6545, 5
        %v6548 = vor.u32 %v6544, %v6547
        %v6549 = vrot.slane %v6548, 4
        %v6551 = vshll.u32 %v6371, 16
        %v6553 = vrot.slane %v6551, 5
        %v6554 = vsel %vm409, %v6549, %v6553
        %v6555 = vshrl.u32 %v6371, 16
        %v6557 = vrot.slane %v6555, 4
        %v6558 = vor.u32 %v6557, %v6553
        %v6559 = vrot.slane %v6558, 4
        %v6561 = vshll.u32 %v6372, 16
        %v6563 = vrot.slane %v6561, 5
        %v6564 = vsel %vm409, %v6559, %v6563
        %s6565 = scalar_lea.vmem [#allocation8], 448
        %v6566 = vld [vmem:[%s6565] sm:$0xf]
        %v6567 = vld [vmem:[%s6565 + $0x4] sm:$0xf]
        %v6568 = vld [vmem:[%s6565 + $0x8] sm:$0xf]
        %v6569 = vld [vmem:[%s6565 + $0xc] sm:$0xf]
        %v6570 = vld [vmem:[%s6565 + $0x10] sm:$0xf]
        %v6571 = vld [vmem:[%s6565 + $0x14] sm:$0xf]
        %v6572 = vld [vmem:[%s6565 + $0x18] sm:$0xf]
        %v6573 = vld [vmem:[%s6565 + $0x1c] sm:$0xf]
        %v6574 = vld [vmem:[%s6565 + $0x20] sm:$0xf]
        %v6575 = vld [vmem:[%s6565 + $0x24] sm:$0xf]
        %v6576 = vld [vmem:[%s6565 + $0x28] sm:$0xf]
        %v6577 = vld [vmem:[%s6565 + $0x2c] sm:$0xf]
        %v6578 = vld [vmem:[%s6565 + $0x30] sm:$0xf]
        %v6579 = vld [vmem:[%s6565 + $0x34] sm:$0xf]
        %v6580 = vld [vmem:[%s6565 + $0x38] sm:$0xf]
        %v6581 = vld [vmem:[%s6565 + $0x3c] sm:$0xf]
        %v6582 = vunpack.c.l.b16 %v6386
        %v6583 = vunpack.c.l.b16 %v6396
        %v6584 = vunpack.c.l.b16 %v6410
        %v6585 = vunpack.c.l.b16 %v6420
        %v6586 = vunpack.c.l.b16 %v6434
        %v6587 = vunpack.c.l.b16 %v6444
        %v6588 = vunpack.c.l.b16 %v6458
        %v6589 = vunpack.c.l.b16 %v6468
        %v6590 = vunpack.c.l.b16 %v6482
        %v6591 = vunpack.c.l.b16 %v6492
        %v6592 = vunpack.c.l.b16 %v6506
        %v6593 = vunpack.c.l.b16 %v6516
        %v6594 = vunpack.c.l.b16 %v6530
        %v6595 = vunpack.c.l.b16 %v6540
        %v6596 = vunpack.c.l.b16 %v6554
        %v6597 = vunpack.c.l.b16 %v6564
        %v6598 = vpack.c.b16 %v6583, %v6582
        %v6599 = vpack.c.b16 %v6585, %v6584
        %v6600 = vpack.c.b16 %v6587, %v6586
        %v6601 = vpack.c.b16 %v6589, %v6588
        %v6602 = vpack.c.b16 %v6591, %v6590
        %v6603 = vpack.c.b16 %v6593, %v6592
        %v6604 = vpack.c.b16 %v6595, %v6594
        %v6605 = vpack.c.b16 %v6597, %v6596
        %v6630 = vunpack.c.l.b16 %v6566
        %v6631 = vunpack.c.l.b16 %v6567
        %v6632 = vunpack.c.l.b16 %v6568
        %v6633 = vunpack.c.l.b16 %v6569
        %v6634 = vunpack.c.l.b16 %v6570
        %v6635 = vunpack.c.l.b16 %v6571
        %v6636 = vunpack.c.l.b16 %v6572
        %v6637 = vunpack.c.l.b16 %v6573
        %v6638 = vunpack.c.l.b16 %v6574
        %v6639 = vunpack.c.l.b16 %v6575
        %v6640 = vunpack.c.l.b16 %v6576
        %v6641 = vunpack.c.l.b16 %v6577
        %v6642 = vunpack.c.l.b16 %v6578
        %v6643 = vunpack.c.l.b16 %v6579
        %v6644 = vunpack.c.l.b16 %v6580
        %v6645 = vunpack.c.l.b16 %v6581
        %v6646 = vpack.c.b16 %v6631, %v6630
        %v6647 = vpack.c.b16 %v6633, %v6632
        %v6648 = vpack.c.b16 %v6635, %v6634
        %v6649 = vpack.c.b16 %v6637, %v6636
        %v6650 = vpack.c.b16 %v6639, %v6638
        %v6651 = vpack.c.b16 %v6641, %v6640
        %v6652 = vpack.c.b16 %v6643, %v6642
        %v6653 = vpack.c.b16 %v6645, %v6644
        %6662 = vmatpush.bf16.msra.mxu0 %v6653
        %6663 = vmatpush.bf16.msra.mxu0 %v6652
        %6664 = vmatpush.bf16.msra.mxu0 %v6651
        %6665 = vmatpush.bf16.msra.mxu0 %v6650
        %6666 = vmatpush.bf16.msra.mxu0 %v6649
        %6667 = vmatpush.bf16.msra.mxu0 %v6648
        %6668 = vmatpush.bf16.msra.mxu0 %v6647
        %6669 = vmatpush.bf16.msra.mxu0 %v6646
        %6670 = vmatmul.bf16.gmra.mxu0 %v6598
        %v6671 = vpop.f32.mrf.mxu0
        %v6672 = vadd.f32 0.0, %v6671
        %v6673 = vpop.f32.mrf.mxu0
        %v6674 = vadd.f32 0.0, %v6673
        %6675 = vmatmul.bf16.gmra.mxu0 %v6599
        %v6676 = vpop.f32.mrf.mxu0
        %v6677 = vadd.f32 0.0, %v6676
        %v6678 = vpop.f32.mrf.mxu0
        %v6679 = vadd.f32 0.0, %v6678
        %6680 = vmatmul.bf16.gmra.mxu0 %v6600
        %v6681 = vpop.f32.mrf.mxu0
        %v6682 = vadd.f32 0.0, %v6681
        %v6683 = vpop.f32.mrf.mxu0
        %v6684 = vadd.f32 0.0, %v6683
        %6685 = vmatmul.bf16.gmra.mxu0 %v6601
        %v6686 = vpop.f32.mrf.mxu0
        %v6687 = vadd.f32 0.0, %v6686
        %v6688 = vpop.f32.mrf.mxu0
        %v6689 = vadd.f32 0.0, %v6688
        %6690 = vmatmul.bf16.gmra.mxu0 %v6602
        %v6691 = vpop.f32.mrf.mxu0
        %v6692 = vadd.f32 0.0, %v6691
        %v6693 = vpop.f32.mrf.mxu0
        %v6694 = vadd.f32 0.0, %v6693
        %6695 = vmatmul.bf16.gmra.mxu0 %v6603
        %v6696 = vpop.f32.mrf.mxu0
        %v6697 = vadd.f32 0.0, %v6696
        %v6698 = vpop.f32.mrf.mxu0
        %v6699 = vadd.f32 0.0, %v6698
        %6700 = vmatmul.bf16.gmra.mxu0 %v6604
        %v6701 = vpop.f32.mrf.mxu0
        %v6702 = vadd.f32 0.0, %v6701
        %v6703 = vpop.f32.mrf.mxu0
        %v6704 = vadd.f32 0.0, %v6703
        %6705 = vmatmul.bf16.gmra.mxu0 %v6605
        %v6706 = vpop.f32.mrf.mxu0
        %v6707 = vadd.f32 0.0, %v6706
        %v6708 = vpop.f32.mrf.mxu0
        %v6709 = vadd.f32 0.0, %v6708
        %6710 = vdwg.mxu0
        %v6711 = vadd.f32 %v6333, %v6672
        %v6712 = vadd.f32 %v6334, %v6674
        %v6713 = vadd.f32 %v6335, %v6677
        %v6714 = vadd.f32 %v6336, %v6679
        %v6715 = vadd.f32 %v6337, %v6682
        %v6716 = vadd.f32 %v6338, %v6684
        %v6717 = vadd.f32 %v6339, %v6687
        %v6718 = vadd.f32 %v6340, %v6689
        %v6719 = vadd.f32 %v6341, %v6692
        %v6720 = vadd.f32 %v6342, %v6694
        %v6721 = vadd.f32 %v6343, %v6697
        %v6722 = vadd.f32 %v6344, %v6699
        %v6723 = vadd.f32 %v6345, %v6702
        %v6724 = vadd.f32 %v6346, %v6704
        %v6725 = vadd.f32 %v6347, %v6707
        %v6726 = vadd.f32 %v6348, %v6709
        %v6727 = vld [vmem:[%s6154] sm:$0xe]
        %v6728 = vld [vmem:[%s6154 + $0xc] sm:$0xe]
        %v6729 = vld [vmem:[%s6154 + $0x18] sm:$0xe]
        %v6730 = vld [vmem:[%s6154 + $0x24] sm:$0xe]
        %v6731 = vld [vmem:[%s6154 + $0x30] sm:$0xe]
        %v6732 = vld [vmem:[%s6154 + $0x3c] sm:$0xe]
        %v6733 = vld [vmem:[%s6154 + $0x48] sm:$0xe]
        %v6734 = vld [vmem:[%s6154 + $0x54] sm:$0xe]
        %v6759 = vrot.slane %v6727, 5
        %v6760 = vrot.slane %v6759, 4
        %v6761 = vrot.slane %v6350, 5
        %v6762 = vsel %vm1213, %v6760, %v6761
        %v6763 = vrot.slane %v6761, 4
        %v6764 = vrot.slane %v6351, 5
        %v6765 = vsel %vm1213, %v6763, %v6764
        %v6766 = vrot.slane %v6728, 5
        %v6767 = vrot.slane %v6766, 4
        %v6768 = vrot.slane %v6353, 5
        %v6769 = vsel %vm1213, %v6767, %v6768
        %v6770 = vrot.slane %v6768, 4
        %v6771 = vrot.slane %v6354, 5
        %v6772 = vsel %vm1213, %v6770, %v6771
        %v6773 = vrot.slane %v6729, 5
        %v6774 = vrot.slane %v6773, 4
        %v6775 = vrot.slane %v6356, 5
        %v6776 = vsel %vm1213, %v6774, %v6775
        %v6777 = vrot.slane %v6775, 4
        %v6778 = vrot.slane %v6357, 5
        %v6779 = vsel %vm1213, %v6777, %v6778
        %v6780 = vrot.slane %v6730, 5
        %v6781 = vrot.slane %v6780, 4
        %v6782 = vrot.slane %v6359, 5
        %v6783 = vsel %vm1213, %v6781, %v6782
        %v6784 = vrot.slane %v6782, 4
        %v6785 = vrot.slane %v6360, 5
        %v6786 = vsel %vm1213, %v6784, %v6785
        %v6787 = vrot.slane %v6731, 5
        %v6788 = vrot.slane %v6787, 4
        %v6789 = vrot.slane %v6362, 5
        %v6790 = vsel %vm1213, %v6788, %v6789
        %v6791 = vrot.slane %v6789, 4
        %v6792 = vrot.slane %v6363, 5
        %v6793 = vsel %vm1213, %v6791, %v6792
        %v6794 = vrot.slane %v6732, 5
        %v6795 = vrot.slane %v6794, 4
        %v6796 = vrot.slane %v6365, 5
        %v6797 = vsel %vm1213, %v6795, %v6796
        %v6798 = vrot.slane %v6796, 4
        %v6799 = vrot.slane %v6366, 5
        %v6800 = vsel %vm1213, %v6798, %v6799
        %v6801 = vrot.slane %v6733, 5
        %v6802 = vrot.slane %v6801, 4
        %v6803 = vrot.slane %v6368, 5
        %v6804 = vsel %vm1213, %v6802, %v6803
        %v6805 = vrot.slane %v6803, 4
        %v6806 = vrot.slane %v6369, 5
        %v6807 = vsel %vm1213, %v6805, %v6806
        %v6808 = vrot.slane %v6734, 5
        %v6809 = vrot.slane %v6808, 4
        %v6810 = vrot.slane %v6371, 5
        %v6811 = vsel %vm1213, %v6809, %v6810
        %v6812 = vrot.slane %v6810, 4
        %v6813 = vrot.slane %v6372, 5
        %v6814 = vsel %vm1213, %v6812, %v6813
        %s6815 = scalar_lea.vmem [#allocation8], 512
        %v6816 = vld [vmem:[%s6815] sm:$0xf]
        %v6817 = vld [vmem:[%s6815 + $0x4] sm:$0xf]
        %v6818 = vld [vmem:[%s6815 + $0x8] sm:$0xf]
        %v6819 = vld [vmem:[%s6815 + $0xc] sm:$0xf]
        %v6820 = vld [vmem:[%s6815 + $0x10] sm:$0xf]
        %v6821 = vld [vmem:[%s6815 + $0x14] sm:$0xf]
        %v6822 = vld [vmem:[%s6815 + $0x18] sm:$0xf]
        %v6823 = vld [vmem:[%s6815 + $0x1c] sm:$0xf]
        %v6824 = vld [vmem:[%s6815 + $0x20] sm:$0xf]
        %v6825 = vld [vmem:[%s6815 + $0x24] sm:$0xf]
        %v6826 = vld [vmem:[%s6815 + $0x28] sm:$0xf]
        %v6827 = vld [vmem:[%s6815 + $0x2c] sm:$0xf]
        %v6828 = vld [vmem:[%s6815 + $0x30] sm:$0xf]
        %v6829 = vld [vmem:[%s6815 + $0x34] sm:$0xf]
        %v6830 = vld [vmem:[%s6815 + $0x38] sm:$0xf]
        %v6831 = vld [vmem:[%s6815 + $0x3c] sm:$0xf]
        %v6832 = vunpack.c.l.b16 %v6762
        %v6833 = vunpack.c.l.b16 %v6765
        %v6834 = vunpack.c.l.b16 %v6769
        %v6835 = vunpack.c.l.b16 %v6772
        %v6836 = vunpack.c.l.b16 %v6776
        %v6837 = vunpack.c.l.b16 %v6779
        %v6838 = vunpack.c.l.b16 %v6783
        %v6839 = vunpack.c.l.b16 %v6786
        %v6840 = vunpack.c.l.b16 %v6790
        %v6841 = vunpack.c.l.b16 %v6793
        %v6842 = vunpack.c.l.b16 %v6797
        %v6843 = vunpack.c.l.b16 %v6800
        %v6844 = vunpack.c.l.b16 %v6804
        %v6845 = vunpack.c.l.b16 %v6807
        %v6846 = vunpack.c.l.b16 %v6811
        %v6847 = vunpack.c.l.b16 %v6814
        %v6848 = vpack.c.b16 %v6833, %v6832
        %v6849 = vpack.c.b16 %v6835, %v6834
        %v6850 = vpack.c.b16 %v6837, %v6836
        %v6851 = vpack.c.b16 %v6839, %v6838
        %v6852 = vpack.c.b16 %v6841, %v6840
        %v6853 = vpack.c.b16 %v6843, %v6842
        %v6854 = vpack.c.b16 %v6845, %v6844
        %v6855 = vpack.c.b16 %v6847, %v6846
        %v6880 = vunpack.c.l.b16 %v6816
        %v6881 = vunpack.c.l.b16 %v6817
        %v6882 = vunpack.c.l.b16 %v6818
        %v6883 = vunpack.c.l.b16 %v6819
        %v6884 = vunpack.c.l.b16 %v6820
        %v6885 = vunpack.c.l.b16 %v6821
        %v6886 = vunpack.c.l.b16 %v6822
        %v6887 = vunpack.c.l.b16 %v6823
        %v6888 = vunpack.c.l.b16 %v6824
        %v6889 = vunpack.c.l.b16 %v6825
        %v6890 = vunpack.c.l.b16 %v6826
        %v6891 = vunpack.c.l.b16 %v6827
        %v6892 = vunpack.c.l.b16 %v6828
        %v6893 = vunpack.c.l.b16 %v6829
        %v6894 = vunpack.c.l.b16 %v6830
        %v6895 = vunpack.c.l.b16 %v6831
        %v6896 = vpack.c.b16 %v6881, %v6880
        %v6897 = vpack.c.b16 %v6883, %v6882
        %v6898 = vpack.c.b16 %v6885, %v6884
        %v6899 = vpack.c.b16 %v6887, %v6886
        %v6900 = vpack.c.b16 %v6889, %v6888
        %v6901 = vpack.c.b16 %v6891, %v6890
        %v6902 = vpack.c.b16 %v6893, %v6892
        %v6903 = vpack.c.b16 %v6895, %v6894
        %6912 = vmatpush.bf16.msra.mxu0 %v6903
        %6913 = vmatpush.bf16.msra.mxu0 %v6902
        %6914 = vmatpush.bf16.msra.mxu0 %v6901
        %6915 = vmatpush.bf16.msra.mxu0 %v6900
        %6916 = vmatpush.bf16.msra.mxu0 %v6899
        %6917 = vmatpush.bf16.msra.mxu0 %v6898
        %6918 = vmatpush.bf16.msra.mxu0 %v6897
        %6919 = vmatpush.bf16.msra.mxu0 %v6896
        %6920 = vmatmul.bf16.gmra.mxu0 %v6848
        %v6921 = vpop.f32.mrf.mxu0
        %v6922 = vadd.f32 0.0, %v6921
        %v6923 = vpop.f32.mrf.mxu0
        %v6924 = vadd.f32 0.0, %v6923
        %6925 = vmatmul.bf16.gmra.mxu0 %v6849
        %v6926 = vpop.f32.mrf.mxu0
        %v6927 = vadd.f32 0.0, %v6926
        %v6928 = vpop.f32.mrf.mxu0
        %v6929 = vadd.f32 0.0, %v6928
        %6930 = vmatmul.bf16.gmra.mxu0 %v6850
        %v6931 = vpop.f32.mrf.mxu0
        %v6932 = vadd.f32 0.0, %v6931
        %v6933 = vpop.f32.mrf.mxu0
        %v6934 = vadd.f32 0.0, %v6933
        %6935 = vmatmul.bf16.gmra.mxu0 %v6851
        %v6936 = vpop.f32.mrf.mxu0
        %v6937 = vadd.f32 0.0, %v6936
        %v6938 = vpop.f32.mrf.mxu0
        %v6939 = vadd.f32 0.0, %v6938
        %6940 = vmatmul.bf16.gmra.mxu0 %v6852
        %v6941 = vpop.f32.mrf.mxu0
        %v6942 = vadd.f32 0.0, %v6941
        %v6943 = vpop.f32.mrf.mxu0
        %v6944 = vadd.f32 0.0, %v6943
        %6945 = vmatmul.bf16.gmra.mxu0 %v6853
        %v6946 = vpop.f32.mrf.mxu0
        %v6947 = vadd.f32 0.0, %v6946
        %v6948 = vpop.f32.mrf.mxu0
        %v6949 = vadd.f32 0.0, %v6948
        %6950 = vmatmul.bf16.gmra.mxu0 %v6854
        %v6951 = vpop.f32.mrf.mxu0
        %v6952 = vadd.f32 0.0, %v6951
        %v6953 = vpop.f32.mrf.mxu0
        %v6954 = vadd.f32 0.0, %v6953
        %6955 = vmatmul.bf16.gmra.mxu0 %v6855
        %v6956 = vpop.f32.mrf.mxu0
        %v6957 = vadd.f32 0.0, %v6956
        %v6958 = vpop.f32.mrf.mxu0
        %v6959 = vadd.f32 0.0, %v6958
        %6960 = vdwg.mxu0
        %v6961 = vadd.f32 %v6711, %v6922
        %v6962 = vadd.f32 %v6712, %v6924
        %v6963 = vadd.f32 %v6713, %v6927
        %v6964 = vadd.f32 %v6714, %v6929
        %v6965 = vadd.f32 %v6715, %v6932
        %v6966 = vadd.f32 %v6716, %v6934
        %v6967 = vadd.f32 %v6717, %v6937
        %v6968 = vadd.f32 %v6718, %v6939
        %v6969 = vadd.f32 %v6719, %v6942
        %v6970 = vadd.f32 %v6720, %v6944
        %v6971 = vadd.f32 %v6721, %v6947
        %v6972 = vadd.f32 %v6722, %v6949
        %v6973 = vadd.f32 %v6723, %v6952
        %v6974 = vadd.f32 %v6724, %v6954
        %v6975 = vadd.f32 %v6725, %v6957
        %v6976 = vadd.f32 %v6726, %v6959
        %v6977 = vld [vmem:[%s5] sm:$0x1]
        %v6979 = vperm.slane %v6977, 0
        %v6981 = vmul.f32 %v6961, %v6979
        %v6982 = vmul.f32 %v6962, %v6979
        %v6983 = vmul.f32 %v6963, %v6979
        %v6984 = vmul.f32 %v6964, %v6979
        %v6985 = vmul.f32 %v6965, %v6979
        %v6986 = vmul.f32 %v6966, %v6979
        %v6987 = vmul.f32 %v6967, %v6979
        %v6988 = vmul.f32 %v6968, %v6979
        %v6989 = vmul.f32 %v6969, %v6979
        %v6990 = vmul.f32 %v6970, %v6979
        %v6991 = vmul.f32 %v6971, %v6979
        %v6992 = vmul.f32 %v6972, %v6979
        %v6993 = vmul.f32 %v6973, %v6979
        %v6994 = vmul.f32 %v6974, %v6979
        %v6995 = vmul.f32 %v6975, %v6979
        %v6996 = vmul.f32 %v6976, %v6979
        %v6997 = vld [vmem:[%s6] sm:$0x1]
        %v6999 = vperm.slane %v6997, 0
        %v7001 = vadd.f32 %v6981, %v6999
        %v7002 = vadd.f32 %v6982, %v6999
        %v7003 = vadd.f32 %v6983, %v6999
        %v7004 = vadd.f32 %v6984, %v6999
        %v7005 = vadd.f32 %v6985, %v6999
        %v7006 = vadd.f32 %v6986, %v6999
        %v7007 = vadd.f32 %v6987, %v6999
        %v7008 = vadd.f32 %v6988, %v6999
        %v7009 = vadd.f32 %v6989, %v6999
        %v7010 = vadd.f32 %v6990, %v6999
        %v7011 = vadd.f32 %v6991, %v6999
        %v7012 = vadd.f32 %v6992, %v6999
        %v7013 = vadd.f32 %v6993, %v6999
        %v7014 = vadd.f32 %v6994, %v6999
        %v7015 = vadd.f32 %v6995, %v6999
        %v7016 = vadd.f32 %v6996, %v6999
        %v7017 = vld [vmem:[%s2867] sm:$0xe]
        %v7018 = vld [vmem:[%s2867 + $0x4] sm:$0xf]
        %v7019 = vld [vmem:[%s2867 + $0x8] sm:$0x1]
        %v7020 = vld [vmem:[%s2867 + $0x10] sm:$0xe]
        %v7021 = vld [vmem:[%s2867 + $0x14] sm:$0xf]
        %v7022 = vld [vmem:[%s2867 + $0x18] sm:$0x1]
        %v7023 = vld [vmem:[%s2867 + $0x20] sm:$0xe]
        %v7024 = vld [vmem:[%s2867 + $0x24] sm:$0xf]
        %v7025 = vld [vmem:[%s2867 + $0x28] sm:$0x1]
        %v7026 = vld [vmem:[%s2867 + $0x30] sm:$0xe]
        %v7027 = vld [vmem:[%s2867 + $0x34] sm:$0xf]
        %v7028 = vld [vmem:[%s2867 + $0x38] sm:$0x1]
        %v7029 = vld [vmem:[%s2867 + $0x40] sm:$0xe]
        %v7030 = vld [vmem:[%s2867 + $0x44] sm:$0xf]
        %v7031 = vld [vmem:[%s2867 + $0x48] sm:$0x1]
        %v7032 = vld [vmem:[%s2867 + $0x50] sm:$0xe]
        %v7033 = vld [vmem:[%s2867 + $0x54] sm:$0xf]
        %v7034 = vld [vmem:[%s2867 + $0x58] sm:$0x1]
        %v7035 = vld [vmem:[%s2867 + $0x60] sm:$0xe]
        %v7036 = vld [vmem:[%s2867 + $0x64] sm:$0xf]
        %v7037 = vld [vmem:[%s2867 + $0x68] sm:$0x1]
        %v7038 = vld [vmem:[%s2867 + $0x70] sm:$0xe]
        %v7039 = vld [vmem:[%s2867 + $0x74] sm:$0xf]
        %v7040 = vld [vmem:[%s2867 + $0x78] sm:$0x1]
        %v7041 = vunpack.c.l.bf16 %v7017
        %v7042 = vunpack.c.l.bf16 %v7018
        %v7043 = vunpack.c.l.bf16 %v7019
        %v7044 = vunpack.c.l.bf16 %v7020
        %v7045 = vunpack.c.l.bf16 %v7021
        %v7046 = vunpack.c.l.bf16 %v7022
        %v7047 = vunpack.c.l.bf16 %v7023
        %v7048 = vunpack.c.l.bf16 %v7024
        %v7049 = vunpack.c.l.bf16 %v7025
        %v7050 = vunpack.c.l.bf16 %v7026
        %v7051 = vunpack.c.l.bf16 %v7027
        %v7052 = vunpack.c.l.bf16 %v7028
        %v7053 = vunpack.c.l.bf16 %v7029
        %v7054 = vunpack.c.l.bf16 %v7030
        %v7055 = vunpack.c.l.bf16 %v7031
        %v7056 = vunpack.c.l.bf16 %v7032
        %v7057 = vunpack.c.l.bf16 %v7033
        %v7058 = vunpack.c.l.bf16 %v7034
        %v7059 = vunpack.c.l.bf16 %v7035
        %v7060 = vunpack.c.l.bf16 %v7036
        %v7061 = vunpack.c.l.bf16 %v7037
        %v7062 = vunpack.c.l.bf16 %v7038
        %v7063 = vunpack.c.l.bf16 %v7039
        %v7064 = vunpack.c.l.bf16 %v7040
        %vm7089 = vcmask 1045504
        %v7090 = vrot.slane %v7041, 2
        %v7091 = vrot.slane %v7042, 2
        %v7092 = vsel %vm7089, %v7090, %v7091
        %v7093 = vrot.slane %v7043, 2
        %v7094 = vsel %vm7089, %v7091, %v7093
        %v7095 = vrot.slane %v7044, 2
        %v7096 = vrot.slane %v7045, 2
        %v7097 = vsel %vm7089, %v7095, %v7096
        %v7098 = vrot.slane %v7046, 2
        %v7099 = vsel %vm7089, %v7096, %v7098
        %v7100 = vrot.slane %v7047, 2
        %v7101 = vrot.slane %v7048, 2
        %v7102 = vsel %vm7089, %v7100, %v7101
        %v7103 = vrot.slane %v7049, 2
        %v7104 = vsel %vm7089, %v7101, %v7103
        %v7105 = vrot.slane %v7050, 2
        %v7106 = vrot.slane %v7051, 2
        %v7107 = vsel %vm7089, %v7105, %v7106
        %v7108 = vrot.slane %v7052, 2
        %v7109 = vsel %vm7089, %v7106, %v7108
        %v7110 = vrot.slane %v7053, 2
        %v7111 = vrot.slane %v7054, 2
        %v7112 = vsel %vm7089, %v7110, %v7111
        %v7113 = vrot.slane %v7055, 2
        %v7114 = vsel %vm7089, %v7111, %v7113
        %v7115 = vrot.slane %v7056, 2
        %v7116 = vrot.slane %v7057, 2
        %v7117 = vsel %vm7089, %v7115, %v7116
        %v7118 = vrot.slane %v7058, 2
        %v7119 = vsel %vm7089, %v7116, %v7118
        %v7120 = vrot.slane %v7059, 2
        %v7121 = vrot.slane %v7060, 2
        %v7122 = vsel %vm7089, %v7120, %v7121
        %v7123 = vrot.slane %v7061, 2
        %v7124 = vsel %vm7089, %v7121, %v7123
        %v7125 = vrot.slane %v7062, 2
        %v7126 = vrot.slane %v7063, 2
        %v7127 = vsel %vm7089, %v7125, %v7126
        %v7128 = vrot.slane %v7064, 2
        %v7129 = vsel %vm7089, %v7126, %v7128
        %v7146 = vadd.f32 %v7001, %v7092
        %v7147 = vadd.f32 %v7002, %v7094
        %v7148 = vadd.f32 %v7003, %v7097
        %v7149 = vadd.f32 %v7004, %v7099
        %v7150 = vadd.f32 %v7005, %v7102
        %v7151 = vadd.f32 %v7006, %v7104
        %v7152 = vadd.f32 %v7007, %v7107
        %v7153 = vadd.f32 %v7008, %v7109
        %v7154 = vadd.f32 %v7009, %v7112
        %v7155 = vadd.f32 %v7010, %v7114
        %v7156 = vadd.f32 %v7011, %v7117
        %v7157 = vadd.f32 %v7012, %v7119
        %v7158 = vadd.f32 %v7013, %v7122
        %v7159 = vadd.f32 %v7014, %v7124
        %v7160 = vadd.f32 %v7015, %v7127
        %v7161 = vadd.f32 %v7016, %v7129
        %v7162 = vmax.f32 %v7146, 0.0
        %v7163 = vmax.f32 %v7147, 0.0
        %v7164 = vmax.f32 %v7148, 0.0
        %v7165 = vmax.f32 %v7149, 0.0
        %v7166 = vmax.f32 %v7150, 0.0
        %v7167 = vmax.f32 %v7151, 0.0
        %v7168 = vmax.f32 %v7152, 0.0
        %v7169 = vmax.f32 %v7153, 0.0
        %v7170 = vmax.f32 %v7154, 0.0
        %v7171 = vmax.f32 %v7155, 0.0
        %v7172 = vmax.f32 %v7156, 0.0
        %v7173 = vmax.f32 %v7157, 0.0
        %v7174 = vmax.f32 %v7158, 0.0
        %v7175 = vmax.f32 %v7159, 0.0
        %v7176 = vmax.f32 %v7160, 0.0
        %v7177 = vmax.f32 %v7161, 0.0
        %7178 = vst [vmem:[%s345] sm:$0xff] %v7162
        %7179 = vst [vmem:[%s345 + $0x8] sm:$0xff] %v7163
        %7180 = vst [vmem:[%s345 + $0x10] sm:$0xff] %v7164
        %7181 = vst [vmem:[%s345 + $0x18] sm:$0xff] %v7165
        %7182 = vst [vmem:[%s345 + $0x20] sm:$0xff] %v7166
        %7183 = vst [vmem:[%s345 + $0x28] sm:$0xff] %v7167
        %7184 = vst [vmem:[%s345 + $0x30] sm:$0xff] %v7168
        %7185 = vst [vmem:[%s345 + $0x38] sm:$0xff] %v7169
        %7186 = vst [vmem:[%s345 + $0x40] sm:$0xff] %v7170
        %7187 = vst [vmem:[%s345 + $0x48] sm:$0xff] %v7171
        %7188 = vst [vmem:[%s345 + $0x50] sm:$0xff] %v7172
        %7189 = vst [vmem:[%s345 + $0x58] sm:$0xff] %v7173
        %7190 = vst [vmem:[%s345 + $0x60] sm:$0xff] %v7174
        %7191 = vst [vmem:[%s345 + $0x68] sm:$0xff] %v7175
        %7192 = vst [vmem:[%s345 + $0x70] sm:$0xff] %v7176
        %7193 = vst [vmem:[%s345 + $0x78] sm:$0xff] %v7177
        %s7194 = sand.u32 %s199, 1
        %s7195 = scalar_lea.sflag [#allocation5], %s7194
        %s7196 = sand.u32 %s199, 1
        %s7197 = smul.addr %s7196, 128
        %s7198 = scalar_lea.vmem [#allocation9], %s7197
        // Predicated region
        $region61: #{tpu_custom_call.1} parent=47 // pred_check
          %p7199 = pneg %p209
        $region62: #{tpu_custom_call.1} parent=47 // pred_check_branch
          %7201 = sbr.rel (%p7199) target = $region64
        $region63: #{tpu_custom_call.1} parent=47 // pred_region
          %s7202 = smul.u32 8, %s30
          %7204 = vsyncadd %s7195, 0
          %s7205 = smul.addr %s7202, 2
          %s7206 = smul.addr %s29, 32
          %s7207 = sadd.s32 %s7205, %s7206
          %s7208 = smul.addr %s7207, 8
          %s7209 = scalar_lea.hbm %s7, %s7208
          %s7210 = sshll.u32 %s7198, 4
          %s7211 = int_to_ptr.vmem [resolvable:$true] %s7210
          %s7212 = sshll.u32 %s7209, 4
          %s7213 = int_to_ptr.hbm [resolvable:$true] %s7212
          %7218 = dma.vmem_to_hbm [thread:$0]  %s7211, 2048, %s7213, %s7195, 128, 128, 8
        $region64: #{tpu_custom_call.1} parent=47 // pred_fallthru
          _
      $region48: #{tpu_custom_call.1} parent=5 // pred_fallthru
        _
      %p7219 = scmp.le.s32.totalorder 2, %s20
      // Predicated region
      $region65: #{tpu_custom_call.1} parent=5 // pred_check
        %p7220 = pneg %p7219
      $region66: #{tpu_custom_call.1} parent=5 // pred_check_branch
        %7222 = sbr.rel (%p7220) target = $region68
      $region67: #{tpu_custom_call.1} parent=5 // pred_region
        %s7223 = ssub.s32 %s20, 2
        // Predicated region
        $region69: #{tpu_custom_call.1} parent=67 // pred_check
          %p7224 = pneg %p215
        $region70: #{tpu_custom_call.1} parent=67 // pred_check_branch
          %7226 = sbr.rel (%p7224) target = $region72
        $region71: #{tpu_custom_call.1} parent=67 // pred_region
          %s7227 = sand.u32 %s200, 1
          %s7228 = scalar_lea.sflag [#allocation5], %s7227
          %s7229 = sand.u32 %s200, 1
          %s7230 = smul.addr %s7229, 128
          %s7231 = scalar_lea.vmem [#allocation9], %s7230
          %7233 = dma.done %s7228, 2048
        $region72: #{tpu_custom_call.1} parent=67 // pred_fallthru
          _
      $region68: #{tpu_custom_call.1} parent=5 // pred_fallthru
        _
    $region6: #{tpu_custom_call.1} parent=1 // loop_footer
      %s24 = sadd.s32 1, %s20
    $region7: #{tpu_custom_call.1} parent=1 // loop_footer_branch
      %19 = sbr.rel target = $region3
    $region8: #{tpu_custom_call.1} parent=1 // loop_exit
      _
    %7234 = vsyncpa [#allocation4], 1
    %s7235 = scalar_lea.sflag [#allocation4], 1
    %7236 = vsyncpa %s7235, 1
    %7237 = vsyncpa [#allocation7], 1
    %7238 = vsyncpa [#allocation5], 1
    %s7239 = scalar_lea.sflag [#allocation5], 1
    %7240 = vsyncpa %s7239, 1

</llo_original>
